<compile_context>
chip_gen: v6e
topology: v6e:2x2x1
jax: 0.10.0
libtpu: 0.0.40
codegen_flags: <defaults>
</compile_context>

<pallas_src>
import functools
import math

import jax
import jax.numpy as jnp
import numpy as np
from jax.experimental import pallas as pl
from jax.experimental.pallas import tpu as pltpu

_LN_EPS = 1e-5
_MAX_TILE_ROWS = 512                      # row tile; sized to fit v7x's 64 MiB VMEM comfortably
_VMEM_LIMIT_BYTES = 32 * 1024 * 1024      # explicit scoped-VMEM budget (safe on v5e/v6e/v7x)

_COMPILER_PARAMS = pltpu.CompilerParams(
    dimension_semantics=("parallel",),    # megacore: v7x shards the row grid across its 2 TCs
    vmem_limit_bytes=_VMEM_LIMIT_BYTES,
)


def _gelu(x):
    # TODO(synk): nn.GELU() default is erf-based; tanh approximation kept for robust Mosaic
    # lowering (used consistently in both the kernels and the pure-JAX reference).
    c = math.sqrt(2.0 / math.pi)
    return 0.5 * x * (1.0 + jnp.tanh(c * (x + 0.044715 * x * x * x)))


def _layernorm(x, g, b):
    mu = jnp.mean(x, axis=-1, keepdims=True)
    var = jnp.mean(jnp.square(x - mu), axis=-1, keepdims=True)
    return (x - mu) * jax.lax.rsqrt(var + _LN_EPS) * g + b


# ---------------------------------------------------------------------------
# BlockSpec helpers
# ---------------------------------------------------------------------------
def _pick_tile(n):
    # Full-array block for small row counts (always layout-legal); otherwise a fixed
    # multiple-of-8 row tile; partial trailing tiles are fine (all kernels are row-wise).
    return n if n <= _MAX_TILE_ROWS else _MAX_TILE_ROWS


def _row_spec(tile, d):
    return pl.BlockSpec((tile, d), lambda i: (i, 0))


def _rep_spec(arr):
    # Full array, constant block index -> fetched once, resident across grid steps.
    return pl.BlockSpec(arr.shape, lambda i: (0, 0))


# ---------------------------------------------------------------------------
# Pallas kernels
# ---------------------------------------------------------------------------
def _conn_u1_kernel(fsrc_ref, fe_ref, fdst_ref,
                    wsrc_ref, we_ref, wdst_ref, cb_ref, ng_ref, nb_ref,
                    cuw_ref, cub_ref, cug_ref, cube_ref,
                    fec_ref, u1_ref):
    """connection Linear(3D->D) via 3 accumulated matmuls + LN, fused with LinearUpdate u1."""
    mx = wsrc_ref.dtype
    y = (jnp.dot(fsrc_ref[...].astype(mx), wsrc_ref[...], preferred_element_type=jnp.float32)
         + jnp.dot(fe_ref[...].astype(mx), we_ref[...], preferred_element_type=jnp.float32)
         + jnp.dot(fdst_ref[...].astype(mx), wdst_ref[...], preferred_element_type=jnp.float32)
         + cb_ref[...])
    fec = _layernorm(y, ng_ref[...], nb_ref[...])
    fec_ref[...] = fec
    u1 = _gelu(jnp.dot(fec.astype(mx), cuw_ref[...], preferred_element_type=jnp.float32)
               + cub_ref[...])
    u1_ref[...] = _layernorm(u1, cug_ref[...], cube_ref[...])


def _sym_kernel(fa_ref, fb_ref, wa_ref, wb_ref, b_ref, g_ref, beta_ref, o_ref):
    """SymmetricUpdate: Linear(2D->D) as 2 accumulated matmuls + GELU + LN."""
    mx = wa_ref.dtype
    y = (jnp.dot(fa_ref[...].astype(mx), wa_ref[...], preferred_element_type=jnp.float32)
         + jnp.dot(fb_ref[...].astype(mx), wb_ref[...], preferred_element_type=jnp.float32)
         + b_ref[...])
    o_ref[...] = _layernorm(_gelu(y), g_ref[...], beta_ref[...])


def _tri_kernel(f0_ref, f1_ref, f2_ref, w0_ref, w1_ref, w2_ref, b_ref, o_ref):
    """TriangleUpdate pre-scatter: Linear(3D->D) as 3 accumulated matmuls + GELU."""
    mx = w0_ref.dtype
    y = (jnp.dot(f0_ref[...].astype(mx), w0_ref[...], preferred_element_type=jnp.float32)
         + jnp.dot(f1_ref[...].astype(mx), w1_ref[...], preferred_element_type=jnp.float32)
         + jnp.dot(f2_ref[...].astype(mx), w2_ref[...], preferred_element_type=jnp.float32)
         + b_ref[...])
    o_ref[...] = _gelu(y)


def _mean_ln_kernel(sum_ref, cnt_ref, g_ref, b_ref, o_ref):
    """segment-mean finalize (sums / max(cnt,1)) fused with the TriangleUpdate LayerNorm."""
    # Exact division (approx reciprocal here caused >5e-3 end-to-end drift after LN/FF).
    mean = sum_ref[...] / jnp.maximum(cnt_ref[...], 1.0)
    o_ref[...] = _layernorm(mean, g_ref[...], b_ref[...])


def _sk_ff_kernel(f_ref, u1_ref, u2_ref, u3_ref,
                  feag_ref, feab_ref, sqw_ref, sqb_ref,
                  exw1_ref, exw2_ref, exw3_ref, exb1_ref, exb2_ref, exb3_ref,
                  upg_ref, upb_ref,
                  wv_ref, wg_ref, w2_ref, ffg_ref, ffb_ref, o_ref):
    """KernelSelection (squeeze/excite softmax mix) fused with PositionwiseFeedForward."""
    mx = sqw_ref.dtype
    u1, u2, u3 = u1_ref[...], u2_ref[...], u3_ref[...]
    t = _layernorm(u1 + u2 + u3, feag_ref[...], feab_ref[...])
    q = _gelu(jnp.dot(t.astype(mx), sqw_ref[...], preferred_element_type=jnp.float32)
              + sqb_ref[...])
    qm = q.astype(mx)
    a1 = jnp.dot(qm, exw1_ref[...], preferred_element_type=jnp.float32) + exb1_ref[...]
    a2 = jnp.dot(qm, exw2_ref[...], preferred_element_type=jnp.float32) + exb2_ref[...]
    a3 = jnp.dot(qm, exw3_ref[...], preferred_element_type=jnp.float32) + exb3_ref[...]
    m = jnp.maximum(jnp.maximum(a1, a2), a3)
    e1, e2, e3 = jnp.exp(a1 - m), jnp.exp(a2 - m), jnp.exp(a3 - m)
    # Exact softmax denominator (matches jax.nn.softmax reference).
    mix = (u1 * e1 + u2 * e2 + u3 * e3) / (e1 + e2 + e3)
    sel = _layernorm(f_ref[...] + mix, upg_ref[...], upb_ref[...])
    selm = sel.astype(mx)
    value = jnp.dot(selm, wv_ref[...], preferred_element_type=jnp.float32)
    gate = jnp.dot(selm, wg_ref[...], preferred_element_type=jnp.float32)
    h = _gelu(gate) * value
    f_upd = jnp.dot(h.astype(mx), w2_ref[...], preferred_element_type=jnp.float32)
    o_ref[...] = _layernorm(sel + f_upd, ffg_ref[...], ffb_ref[...])


# ---------------------------------------------------------------------------
# pallas_call wrappers (row-tiled grids)
# ---------------------------------------------------------------------------
def conn_u1_block(f_src, f_e, f_dst, q):
    E, D = f_e.shape
    tile = _pick_tile(E)
    row = _row_spec(tile, D)
    weights = [q['conn_w_src'], q['conn_w_edge'], q['conn_w_dst'],
               q['conn_b'], q['norm_g'], q['norm_b'],
               q['cu_w'], q['cu_b'], q['cu_g'], q['cu_beta']]
    fec, u1 = pl.pallas_call(
        _conn_u1_kernel,
        grid=(pl.cdiv(E, tile),),
        in_specs=[row, row, row] + [_rep_spec(w) for w in weights],
        out_specs=[row, row],
        out_shape=[jax.ShapeDtypeStruct((E, D), jnp.float32),
                   jax.ShapeDtypeStruct((E, D), jnp.float32)],
        compiler_params=_COMPILER_PARAMS,
    )(f_src, f_e, f_dst, *weights)
    return fec, u1


def sym_block(fec, fec_roll, q):
    E, D = fec.shape
    tile = _pick_tile(E)
    row = _row_spec(tile, D)
    weights = [q['sym_w_a'], q['sym_w_b'], q['sym_b'], q['sym_g'], q['sym_beta']]
    return pl.pallas_call(
        _sym_kernel,
        grid=(pl.cdiv(E, tile),),
        in_specs=[row, row] + [_rep_spec(w) for w in weights],
        out_specs=row,
        out_shape=jax.ShapeDtypeStruct((E, D), jnp.float32),
        compiler_params=_COMPILER_PARAMS,
    )(fec, fec_roll, *weights)


def tri_block(f0, f1, f2, q):
    T, D = f0.shape
    tile = _pick_tile(T)
    row = _row_spec(tile, D)
    weights = [q['tri_w0'], q['tri_w1'], q['tri_w2'], q['tri_b']]
    return pl.pallas_call(
        _tri_kernel,
        grid=(pl.cdiv(T, tile),),
        in_specs=[row, row, row] + [_rep_spec(w) for w in weights],
        out_specs=row,
        out_shape=jax.ShapeDtypeStruct((T, D), jnp.float32),
        compiler_params=_COMPILER_PARAMS,
    )(f0, f1, f2, *weights)


def mean_ln_block(sums, cnt, q):
    E, D = sums.shape
    tile = _pick_tile(E)
    weights = [q['tri_g'], q['tri_beta']]
    return pl.pallas_call(
        _mean_ln_kernel,
        grid=(pl.cdiv(E, tile),),
        in_specs=[_row_spec(tile, D), _row_spec(tile, 1)] + [_rep_spec(w) for w in weights],
        out_specs=_row_spec(tile, D),
        out_shape=jax.ShapeDtypeStruct((E, D), jnp.float32),
        compiler_params=_COMPILER_PARAMS,
    )(sums, cnt, *weights)


def sk_ff_block(f, u1, u2, u3, q):
    E, D = f.shape
    tile = _pick_tile(E)
    row = _row_spec(tile, D)
    weights = [q['sk_fea_g'], q['sk_fea_b'], q['sk_sq_w'], q['sk_sq_b'],
               q['sk_ex_w1'], q['sk_ex_w2'], q['sk_ex_w3'],
               q['sk_ex_b1'], q['sk_ex_b2'], q['sk_ex_b3'],
               q['sk_up_g'], q['sk_up_b'],
               q['ff_wv'], q['ff_wg'], q['ff2_w'], q['ff_g'], q['ff_b']]
    return pl.pallas_call(
        _sk_ff_kernel,
        grid=(pl.cdiv(E, tile),),
        in_specs=[row, row, row, row] + [_rep_spec(w) for w in weights],
        out_specs=row,
        out_shape=jax.ShapeDtypeStruct((E, D), jnp.float32),
        compiler_params=_COMPILER_PARAMS,
    )(f, u1, u2, u3, *weights)


# ---------------------------------------------------------------------------
# Parameter preparation: split concat-weights, pad squeeze dim, cast MXU operands
# ---------------------------------------------------------------------------
def prepare_params(p, matmul_dtype):
    D = p['cu_w'].shape[0]
    md = matmul_dtype

    def row(v):
        return v.reshape(1, -1).astype(jnp.float32)

    # Pad squeeze dim to a multiple of 128 lanes (zero pad -> identical math, lane-dense q).
    P = p['sk_sq_w'].shape[1]
    P_pad = ((P + 127) // 128) * 128
    sq_w = jnp.zeros((D, P_pad), jnp.float32).at[:, :P].set(p['sk_sq_w'])
    sq_b = jnp.zeros((P_pad,), jnp.float32).at[:P].set(p['sk_sq_b'])
    ex_w = jnp.zeros((P_pad, 3 * D), jnp.float32).at[:P, :].set(p['sk_ex_w'])

    d_ff = p['ff2_w'].shape[0]
    return dict(
        conn_w_src=p['conn_w'][:D].astype(md),
        conn_w_edge=p['conn_w'][D:2 * D].astype(md),
        conn_w_dst=p['conn_w'][2 * D:].astype(md),
        conn_b=row(p['conn_b']), norm_g=row(p['norm_g']), norm_b=row(p['norm_b']),
        cu_w=p['cu_w'].astype(md), cu_b=row(p['cu_b']),
        cu_g=row(p['cu_g']), cu_beta=row(p['cu_beta']),
        sym_w_a=p['sym_w'][:D].astype(md), sym_w_b=p['sym_w'][D:].astype(md),
        sym_b=row(p['sym_b']), sym_g=row(p['sym_g']), sym_beta=row(p['sym_beta']),
        tri_w0=p['tri_w'][:D].astype(md), tri_w1=p['tri_w'][D:2 * D].astype(md),
        tri_w2=p['tri_w'][2 * D:].astype(md), tri_b=row(p['tri_b']),
        tri_g=row(p['tri_g']), tri_beta=row(p['tri_beta']),
        sk_fea_g=row(p['sk_fea_g']), sk_fea_b=row(p['sk_fea_b']),
        sk_sq_w=sq_w.astype(md), sk_sq_b=sq_b.reshape(1, -1),
        sk_ex_w1=ex_w[:, :D].astype(md), sk_ex_w2=ex_w[:, D:2 * D].astype(md),
        sk_ex_w3=ex_w[:, 2 * D:].astype(md),
        sk_ex_b1=row(p['sk_ex_b'][:D]), sk_ex_b2=row(p['sk_ex_b'][D:2 * D]),
        sk_ex_b3=row(p['sk_ex_b'][2 * D:]),
        sk_up_g=row(p['sk_up_g']), sk_up_b=row(p['sk_up_b']),
        ff_wv=p['ff1_w'][:, :d_ff].astype(md), ff_wg=p['ff1_w'][:, d_ff:].astype(md),
        ff2_w=p['ff2_w'].astype(md),
        ff_g=row(p['ff_g']), ff_b=row(p['ff_b']),
    )


# ---------------------------------------------------------------------------
# EdgeUpdate forward (Pallas kernels + minimal JAX indexing glue)
# ---------------------------------------------------------------------------
def edge_update(p, f_node, f_edge, edges, soe, matmul_dtype=jnp.float32):
    E, D = f_edge.shape
    q = prepare_params(p, matmul_dtype)

    # Gathers kept as XLA glue for now.
    # TODO(synk): replace XLA gathers + scatter_mean with prefetch-driven DMA gather and a
    # sorted segment-sum Pallas kernel for large E/T.
    f_src = jnp.take(f_node, edges[0], axis=0)
    f_dst = jnp.take(f_node, edges[1], axis=0)

    # connection Linear(3D->D)+LN fused with LinearUpdate u1 (two outputs, one pass over rows)
    fec, u1 = conn_u1_block(f_src, f_edge, f_dst, q)

    # SymmetricUpdate: half-roll pairing as a rolled second input (one (E,D) copy instead
    # of an (E,2D) concat); the two partial matmuls are accumulated inside the kernel.
    # jnp.roll(fec, -(E//2)) == cat([fec[E//2:], fec[:E//2]]) for any E.
    fec_roll = jnp.roll(fec, shift=-(E // 2), axis=0)
    u2 = sym_block(fec, fec_roll, q)

    # TriangleUpdate: per-corner gathers, fused 3-way matmul + GELU, XLA scatter-add,
    # fused mean+LayerNorm.
    tri = tri_block(jnp.take(fec, soe[:, 0], axis=0),
                    jnp.take(fec, soe[:, 1], axis=0),
                    jnp.take(fec, soe[:, 2], axis=0), q)
    seg = soe[:, 2]
    sums = jnp.zeros((E, D), jnp.float32).at[seg].add(tri)
    cnt = jnp.zeros((E, 1), jnp.float32).at[seg].add(1.0)
    u3 = mean_ln_block(sums, cnt, q)

    # KernelSelection + PositionwiseFeedForward fused into one kernel.
    return sk_ff_block(f_edge, u1, u2, u3, q)


# ---------------------------------------------------------------------------
# Pure-JAX reference (same math, no Pallas) for correctness checking
# ---------------------------------------------------------------------------
def edge_update_ref(p, f_node, f_edge, edges, soe):
    E, D = f_edge.shape
    fec = _layernorm(jnp.concatenate([f_node[edges[0]], f_edge, f_node[edges[1]]], -1)
                     @ p['conn_w'] + p['conn_b'], p['norm_g'], p['norm_b'])
    u1 = _layernorm(_gelu(fec @ p['cu_w'] + p['cu_b']), p['cu_g'], p['cu_beta'])
    n_e = E // 2
    sym_in = jnp.concatenate([fec, jnp.concatenate([fec[n_e:], fec[:n_e]], 0)], -1)
    u2 = _layernorm(_gelu(sym_in @ p['sym_w'] + p['sym_b']), p['sym_g'], p['sym_beta'])
    tri = _gelu(fec[soe].reshape(soe.shape[0], 3 * D) @ p['tri_w'] + p['tri_b'])
    seg = soe[:, 2]
    sums = jnp.zeros((E, D), jnp.float32).at[seg].add(tri)
    cnt = jnp.zeros((E,), jnp.float32).at[seg].add(1.0)
    u3 = _layernorm(sums / jnp.maximum(cnt, 1.0)[:, None], p['tri_g'], p['tri_beta'])
    t = _layernorm(u1 + u2 + u3, p['sk_fea_g'], p['sk_fea_b'])
    a = _gelu(t @ p['sk_sq_w'] + p['sk_sq_b']) @ p['sk_ex_w'] + p['sk_ex_b']
    attn = jax.nn.softmax(a.reshape(E, 3, D), axis=1)
    f_upd = (jnp.stack([u1, u2, u3], 1) * attn).sum(1)
    sel = _layernorm(f_edge + f_upd, p['sk_up_g'], p['sk_up_b'])
    v = sel @ p['ff1_w']
    d_ff = 2 * D
    h = _gelu(v[:, d_ff:]) * v[:, :d_ff]
    return _layernorm(sel + h @ p['ff2_w'], p['ff_g'], p['ff_b'])


# ---------------------------------------------------------------------------
# Deterministic parameter init (synthetic, PyTorch-shaped, stored [in, out])
# ---------------------------------------------------------------------------
def init_params(key, D):
    ks = jax.random.split(key, 16)

    def w(k, i, o):
        return jax.random.normal(k, (i, o), jnp.float32) / math.sqrt(i)

    def b(k, o):
        return jax.random.normal(k, (o,), jnp.float32) * 0.02

    ones, zeros = jnp.ones((D,), jnp.float32), jnp.zeros((D,), jnp.float32)
    return dict(
        conn_w=w(ks[0], 3 * D, D), conn_b=b(ks[1], D), norm_g=ones, norm_b=zeros,
        cu_w=w(ks[2], D, D), cu_b=b(ks[3], D), cu_g=ones, cu_beta=zeros,
        sym_w=w(ks[4], 2 * D, D), sym_b=b(ks[5], D), sym_g=ones, sym_beta=zeros,
        tri_w=w(ks[6], 3 * D, D), tri_b=b(ks[7], D), tri_g=ones, tri_beta=zeros,
        sk_fea_g=ones, sk_fea_b=zeros,
        sk_sq_w=w(ks[8], D, D // 4), sk_sq_b=b(ks[9], D // 4),
        sk_ex_w=w(ks[10], D // 4, 3 * D), sk_ex_b=b(ks[11], 3 * D),
        sk_up_g=ones, sk_up_b=zeros,
        ff1_w=w(ks[12], D, 4 * D), ff2_w=w(ks[13], 2 * D, D),
        ff_g=ones, ff_b=zeros,
    )


if __name__ == "__main__":
    def run_case(key, D, L, E, T, matmul_dtype, rtol=None, atol=None, mean_abs_tol=None):
        k_node, k_edge, k_e, k_soe, k_par = jax.random.split(key, 5)
        f_node = jax.random.normal(k_node, (L, D), jnp.float32)
        f_edge = jax.random.normal(k_edge, (E, D), jnp.float32)
        edges = jax.random.randint(k_e, (2, E), 0, L)
        soe = jax.random.randint(k_soe, (T, 3), 0, E)
        params = init_params(k_par, D)
        fwd = jax.jit(functools.partial(edge_update, matmul_dtype=matmul_dtype))
        out = jax.block_until_ready(fwd(params, f_node, f_edge, edges, soe))
        ref = edge_update_ref(params, f_node, f_edge, edges, soe)
        assert out.shape == (E, D)
        assert bool(jnp.isfinite(out).all())
        if mean_abs_tol is not None:
            mae = float(jnp.mean(jnp.abs(out - ref)))
            assert mae < mean_abs_tol, f"bf16 mean-abs-error {mae} >= {mean_abs_tol}"
        else:
            np.testing.assert_allclose(np.asarray(out), np.asarray(ref), rtol=rtol, atol=atol)

    key = jax.random.PRNGKey(0)
    k1, k2, k3 = jax.random.split(key, 3)
    # Small module-consistent shapes, f32 MXU operands (tight check).
    run_case(k1, D=32, L=6, E=8, T=10, matmul_dtype=jnp.float32, rtol=5e-3, atol=5e-3)
    # Multi-tile row grid (E=1024 -> 2 tiles; T=777 -> partial tile), f32.
    run_case(k2, D=32, L=64, E=1024, T=777, matmul_dtype=jnp.float32, rtol=5e-3, atol=5e-3)
    # Same shapes with bf16 MXU operands (f32 accumulation / LN / softmax); robust check.
    run_case(k3, D=32, L=64, E=1024, T=777, matmul_dtype=jnp.bfloat16, mean_abs_tol=5e-2)
    print("KERNEL_OK")
</pallas_src>

<mosaic_0001>
module attributes {stable_mosaic.version = 11 : i64} {
  func.func @_conn_u1_kernel(%arg0: i32, %arg1: memref<8x32xf32, #tpu.memory_space<vmem>>, %arg2: memref<8x32xf32, #tpu.memory_space<vmem>>, %arg3: memref<8x32xf32, #tpu.memory_space<vmem>>, %arg4: memref<32x32xf32, #tpu.memory_space<vmem>>, %arg5: memref<32x32xf32, #tpu.memory_space<vmem>>, %arg6: memref<32x32xf32, #tpu.memory_space<vmem>>, %arg7: memref<1x32xf32, #tpu.memory_space<vmem>>, %arg8: memref<1x32xf32, #tpu.memory_space<vmem>>, %arg9: memref<1x32xf32, #tpu.memory_space<vmem>>, %arg10: memref<32x32xf32, #tpu.memory_space<vmem>>, %arg11: memref<1x32xf32, #tpu.memory_space<vmem>>, %arg12: memref<1x32xf32, #tpu.memory_space<vmem>>, %arg13: memref<1x32xf32, #tpu.memory_space<vmem>>, %arg14: memref<8x32xf32, #tpu.memory_space<vmem>>, %arg15: memref<8x32xf32, #tpu.memory_space<vmem>>) attributes {dimension_semantics = [#tpu.dimension_semantics<parallel>], iteration_bounds = array<i64: 1>, scalar_prefetch = 0 : i64, scratch_operands = 0 : i64, tpu.core_type = #tpu.core_type<tc>, window_params = [{transform_indices = @transform_0, window_bounds = array<i64: 8, 32>}, {transform_indices = @transform_1, window_bounds = array<i64: 8, 32>}, {transform_indices = @transform_2, window_bounds = array<i64: 8, 32>}, {pipeline_mode = #tpu.pipeline_mode<synchronous>, transform_indices = @transform_3, window_bounds = array<i64: 32, 32>}, {pipeline_mode = #tpu.pipeline_mode<synchronous>, transform_indices = @transform_4, window_bounds = array<i64: 32, 32>}, {pipeline_mode = #tpu.pipeline_mode<synchronous>, transform_indices = @transform_5, window_bounds = array<i64: 32, 32>}, {pipeline_mode = #tpu.pipeline_mode<synchronous>, transform_indices = @transform_6, window_bounds = array<i64: 1, 32>}, {pipeline_mode = #tpu.pipeline_mode<synchronous>, transform_indices = @transform_7, window_bounds = array<i64: 1, 32>}, {pipeline_mode = #tpu.pipeline_mode<synchronous>, transform_indices = @transform_8, window_bounds = array<i64: 1, 32>}, {pipeline_mode = #tpu.pipeline_mode<synchronous>, transform_indices = @transform_9, window_bounds = array<i64: 32, 32>}, {pipeline_mode = #tpu.pipeline_mode<synchronous>, transform_indices = @transform_10, window_bounds = array<i64: 1, 32>}, {pipeline_mode = #tpu.pipeline_mode<synchronous>, transform_indices = @transform_11, window_bounds = array<i64: 1, 32>}, {pipeline_mode = #tpu.pipeline_mode<synchronous>, transform_indices = @transform_12, window_bounds = array<i64: 1, 32>}, {transform_indices = @transform_13, window_bounds = array<i64: 8, 32>}, {transform_indices = @transform_14, window_bounds = array<i64: 8, 32>}]} {
    %c0 = arith.constant 0 : index
    %c0_0 = arith.constant 0 : index
    %0 = vector.load %arg1[%c0, %c0_0] : memref<8x32xf32, #tpu.memory_space<vmem>>, vector<8x32xf32>
    %c0_1 = arith.constant 0 : index
    %c0_2 = arith.constant 0 : index
    %1 = vector.load %arg4[%c0_1, %c0_2] : memref<32x32xf32, #tpu.memory_space<vmem>>, vector<32x32xf32>
    %cst = arith.constant dense<0.000000e+00> : vector<8x32xf32>
    %2 = tpu.matmul %0, %1, %cst {dimension_numbers = #tpu.dot_dimension_numbers<[1], [0], [0], [1], [0, 0, 1, 1], [], []>} : vector<8x32xf32>, vector<32x32xf32>, vector<8x32xf32> -> vector<8x32xf32>
    %c0_3 = arith.constant 0 : index
    %c0_4 = arith.constant 0 : index
    %3 = vector.load %arg2[%c0_3, %c0_4] : memref<8x32xf32, #tpu.memory_space<vmem>>, vector<8x32xf32>
    %c0_5 = arith.constant 0 : index
    %c0_6 = arith.constant 0 : index
    %4 = vector.load %arg5[%c0_5, %c0_6] : memref<32x32xf32, #tpu.memory_space<vmem>>, vector<32x32xf32>
    %cst_7 = arith.constant dense<0.000000e+00> : vector<8x32xf32>
    %5 = tpu.matmul %3, %4, %cst_7 {dimension_numbers = #tpu.dot_dimension_numbers<[1], [0], [0], [1], [0, 0, 1, 1], [], []>} : vector<8x32xf32>, vector<32x32xf32>, vector<8x32xf32> -> vector<8x32xf32>
    %6 = arith.addf %2, %5 : vector<8x32xf32>
    %c0_8 = arith.constant 0 : index
    %c0_9 = arith.constant 0 : index
    %7 = vector.load %arg3[%c0_8, %c0_9] : memref<8x32xf32, #tpu.memory_space<vmem>>, vector<8x32xf32>
    %c0_10 = arith.constant 0 : index
    %c0_11 = arith.constant 0 : index
    %8 = vector.load %arg6[%c0_10, %c0_11] : memref<32x32xf32, #tpu.memory_space<vmem>>, vector<32x32xf32>
    %cst_12 = arith.constant dense<0.000000e+00> : vector<8x32xf32>
    %9 = tpu.matmul %7, %8, %cst_12 {dimension_numbers = #tpu.dot_dimension_numbers<[1], [0], [0], [1], [0, 0, 1, 1], [], []>} : vector<8x32xf32>, vector<32x32xf32>, vector<8x32xf32> -> vector<8x32xf32>
    %10 = arith.addf %6, %9 : vector<8x32xf32>
    %c0_13 = arith.constant 0 : index
    %c0_14 = arith.constant 0 : index
    %11 = vector.load %arg7[%c0_13, %c0_14] : memref<1x32xf32, #tpu.memory_space<vmem>>, vector<1x32xf32>
    %12 = vector.broadcast %11 : vector<1x32xf32> to vector<8x32xf32>
    %13 = arith.addf %10, %12 : vector<8x32xf32>
    %c0_15 = arith.constant 0 : index
    %c0_16 = arith.constant 0 : index
    %14 = vector.load %arg8[%c0_15, %c0_16] : memref<1x32xf32, #tpu.memory_space<vmem>>, vector<1x32xf32>
    %c0_17 = arith.constant 0 : index
    %c0_18 = arith.constant 0 : index
    %15 = vector.load %arg9[%c0_17, %c0_18] : memref<1x32xf32, #tpu.memory_space<vmem>>, vector<1x32xf32>
    %cst_19 = arith.constant dense<0.000000e+00> : vector<8xf32>
    %16 = vector.multi_reduction <add>, %13, %cst_19 [1] : vector<8x32xf32> to vector<8xf32>
    %17 = vector.shape_cast %16 : vector<8xf32> to vector<8x1xf32>
    %cst_20 = arith.constant 3.200000e+01 : f32
    %18 = vector.broadcast %cst_20 : f32 to vector<8x1xf32>
    %19 = arith.divf %17, %18 : vector<8x1xf32>
    %20 = vector.broadcast %19 : vector<8x1xf32> to vector<8x32xf32>
    %21 = arith.subf %13, %20 : vector<8x32xf32>
    %22 = arith.mulf %21, %21 : vector<8x32xf32>
    %cst_21 = arith.constant dense<0.000000e+00> : vector<8xf32>
    %23 = vector.multi_reduction <add>, %22, %cst_21 [1] : vector<8x32xf32> to vector<8xf32>
    %24 = vector.shape_cast %23 : vector<8xf32> to vector<8x1xf32>
    %cst_22 = arith.constant 3.200000e+01 : f32
    %25 = vector.broadcast %cst_22 : f32 to vector<8x1xf32>
    %26 = arith.divf %24, %25 : vector<8x1xf32>
    %27 = vector.broadcast %19 : vector<8x1xf32> to vector<8x32xf32>
    %28 = arith.subf %13, %27 : vector<8x32xf32>
    %cst_23 = arith.constant 9.99999974E-6 : f32
    %29 = vector.broadcast %cst_23 : f32 to vector<8x1xf32>
    %30 = arith.addf %26, %29 : vector<8x1xf32>
    %31 = math.rsqrt %30 : vector<8x1xf32>
    %32 = vector.broadcast %31 : vector<8x1xf32> to vector<8x32xf32>
    %33 = arith.mulf %28, %32 : vector<8x32xf32>
    %34 = vector.broadcast %14 : vector<1x32xf32> to vector<8x32xf32>
    %35 = arith.mulf %33, %34 : vector<8x32xf32>
    %36 = vector.broadcast %15 : vector<1x32xf32> to vector<8x32xf32>
    %37 = arith.addf %35, %36 : vector<8x32xf32>
    %c0_24 = arith.constant 0 : index
    %c0_25 = arith.constant 0 : index
    %38 = vector.load %arg14[%c0_24, %c0_25] : memref<8x32xf32, #tpu.memory_space<vmem>>, vector<8x32xf32>
    tpu.vector_store %arg14[%c0_24, %c0_25], %37 {strides = array<i32>} : memref<8x32xf32, #tpu.memory_space<vmem>>, vector<8x32xf32>,
    %c0_26 = arith.constant 0 : index
    %c0_27 = arith.constant 0 : index
    %39 = vector.load %arg10[%c0_26, %c0_27] : memref<32x32xf32, #tpu.memory_space<vmem>>, vector<32x32xf32>
    %cst_28 = arith.constant dense<0.000000e+00> : vector<8x32xf32>
    %40 = tpu.matmul %37, %39, %cst_28 {dimension_numbers = #tpu.dot_dimension_numbers<[1], [0], [0], [1], [0, 0, 1, 1], [], []>} : vector<8x32xf32>, vector<32x32xf32>, vector<8x32xf32> -> vector<8x32xf32>
    %c0_29 = arith.constant 0 : index
    %c0_30 = arith.constant 0 : index
    %41 = vector.load %arg11[%c0_29, %c0_30] : memref<1x32xf32, #tpu.memory_space<vmem>>, vector<1x32xf32>
    %42 = vector.broadcast %41 : vector<1x32xf32> to vector<8x32xf32>
    %43 = arith.addf %40, %42 : vector<8x32xf32>
    %cst_31 = arith.constant 5.000000e-01 : f32
    %44 = vector.broadcast %cst_31 : f32 to vector<8x32xf32>
    %45 = arith.mulf %44, %43 : vector<8x32xf32>
    %cst_32 = arith.constant 4.471500e-02 : f32
    %46 = vector.broadcast %cst_32 : f32 to vector<8x32xf32>
    %47 = arith.mulf %46, %43 : vector<8x32xf32>
    %48 = arith.mulf %47, %43 : vector<8x32xf32>
    %49 = arith.mulf %48, %43 : vector<8x32xf32>
    %50 = arith.addf %43, %49 : vector<8x32xf32>
    %cst_33 = arith.constant 0.797884583 : f32
    %51 = vector.broadcast %cst_33 : f32 to vector<8x32xf32>
    %52 = arith.mulf %51, %50 : vector<8x32xf32>
    %53 = math.tanh %52 : vector<8x32xf32>
    %cst_34 = arith.constant 1.000000e+00 : f32
    %54 = vector.broadcast %cst_34 : f32 to vector<8x32xf32>
    %55 = arith.addf %54, %53 : vector<8x32xf32>
    %56 = arith.mulf %45, %55 : vector<8x32xf32>
    %c0_35 = arith.constant 0 : index
    %c0_36 = arith.constant 0 : index
    %57 = vector.load %arg12[%c0_35, %c0_36] : memref<1x32xf32, #tpu.memory_space<vmem>>, vector<1x32xf32>
    %c0_37 = arith.constant 0 : index
    %c0_38 = arith.constant 0 : index
    %58 = vector.load %arg13[%c0_37, %c0_38] : memref<1x32xf32, #tpu.memory_space<vmem>>, vector<1x32xf32>
    %cst_39 = arith.constant dense<0.000000e+00> : vector<8xf32>
    %59 = vector.multi_reduction <add>, %56, %cst_39 [1] : vector<8x32xf32> to vector<8xf32>
    %60 = vector.shape_cast %59 : vector<8xf32> to vector<8x1xf32>
    %cst_40 = arith.constant 3.200000e+01 : f32
    %61 = vector.broadcast %cst_40 : f32 to vector<8x1xf32>
    %62 = arith.divf %60, %61 : vector<8x1xf32>
    %63 = vector.broadcast %62 : vector<8x1xf32> to vector<8x32xf32>
    %64 = arith.subf %56, %63 : vector<8x32xf32>
    %65 = arith.mulf %64, %64 : vector<8x32xf32>
    %cst_41 = arith.constant dense<0.000000e+00> : vector<8xf32>
    %66 = vector.multi_reduction <add>, %65, %cst_41 [1] : vector<8x32xf32> to vector<8xf32>
    %67 = vector.shape_cast %66 : vector<8xf32> to vector<8x1xf32>
    %cst_42 = arith.constant 3.200000e+01 : f32
    %68 = vector.broadcast %cst_42 : f32 to vector<8x1xf32>
    %69 = arith.divf %67, %68 : vector<8x1xf32>
    %70 = vector.broadcast %62 : vector<8x1xf32> to vector<8x32xf32>
    %71 = arith.subf %56, %70 : vector<8x32xf32>
    %cst_43 = arith.constant 9.99999974E-6 : f32
    %72 = vector.broadcast %cst_43 : f32 to vector<8x1xf32>
    %73 = arith.addf %69, %72 : vector<8x1xf32>
    %74 = math.rsqrt %73 : vector<8x1xf32>
    %75 = vector.broadcast %74 : vector<8x1xf32> to vector<8x32xf32>
    %76 = arith.mulf %71, %75 : vector<8x32xf32>
    %77 = vector.broadcast %57 : vector<1x32xf32> to vector<8x32xf32>
    %78 = arith.mulf %76, %77 : vector<8x32xf32>
    %79 = vector.broadcast %58 : vector<1x32xf32> to vector<8x32xf32>
    %80 = arith.addf %78, %79 : vector<8x32xf32>
    %c0_44 = arith.constant 0 : index
    %c0_45 = arith.constant 0 : index
    %81 = vector.load %arg15[%c0_44, %c0_45] : memref<8x32xf32, #tpu.memory_space<vmem>>, vector<8x32xf32>
    tpu.vector_store %arg15[%c0_44, %c0_45], %80 {strides = array<i32>} : memref<8x32xf32, #tpu.memory_space<vmem>>, vector<8x32xf32>,
    return
  }
  func.func @transform_0(%arg0: i32) -> (i32, i32) {
    %c0_i32 = arith.constant 0 : i32
    %c0_i32_0 = arith.constant 0 : i32
    return %arg0, %c0_i32 : i32, i32
  }
  func.func @transform_1(%arg0: i32) -> (i32, i32) {
    %c0_i32 = arith.constant 0 : i32
    %c0_i32_0 = arith.constant 0 : i32
    return %arg0, %c0_i32 : i32, i32
  }
  func.func @transform_2(%arg0: i32) -> (i32, i32) {
    %c0_i32 = arith.constant 0 : i32
    %c0_i32_0 = arith.constant 0 : i32
    return %arg0, %c0_i32 : i32, i32
  }
  func.func @transform_3(%arg0: i32) -> (i32, i32) {
    %c0_i32 = arith.constant 0 : i32
    %c0_i32_0 = arith.constant 0 : i32
    %c0_i32_1 = arith.constant 0 : i32
    return %c0_i32, %c0_i32_0 : i32, i32
  }
  func.func @transform_4(%arg0: i32) -> (i32, i32) {
    %c0_i32 = arith.constant 0 : i32
    %c0_i32_0 = arith.constant 0 : i32
    %c0_i32_1 = arith.constant 0 : i32
    return %c0_i32, %c0_i32_0 : i32, i32
  }
  func.func @transform_5(%arg0: i32) -> (i32, i32) {
    %c0_i32 = arith.constant 0 : i32
    %c0_i32_0 = arith.constant 0 : i32
    %c0_i32_1 = arith.constant 0 : i32
    return %c0_i32, %c0_i32_0 : i32, i32
  }
  func.func @transform_6(%arg0: i32) -> (i32, i32) {
    %c0_i32 = arith.constant 0 : i32
    %c0_i32_0 = arith.constant 0 : i32
    %c0_i32_1 = arith.constant 0 : i32
    return %c0_i32, %c0_i32_0 : i32, i32
  }
  func.func @transform_7(%arg0: i32) -> (i32, i32) {
    %c0_i32 = arith.constant 0 : i32
    %c0_i32_0 = arith.constant 0 : i32
    %c0_i32_1 = arith.constant 0 : i32
    return %c0_i32, %c0_i32_0 : i32, i32
  }
  func.func @transform_8(%arg0: i32) -> (i32, i32) {
    %c0_i32 = arith.constant 0 : i32
    %c0_i32_0 = arith.constant 0 : i32
    %c0_i32_1 = arith.constant 0 : i32
    return %c0_i32, %c0_i32_0 : i32, i32
  }
  func.func @transform_9(%arg0: i32) -> (i32, i32) {
    %c0_i32 = arith.constant 0 : i32
    %c0_i32_0 = arith.constant 0 : i32
    %c0_i32_1 = arith.constant 0 : i32
    return %c0_i32, %c0_i32_0 : i32, i32
  }
  func.func @transform_10(%arg0: i32) -> (i32, i32) {
    %c0_i32 = arith.constant 0 : i32
    %c0_i32_0 = arith.constant 0 : i32
    %c0_i32_1 = arith.constant 0 : i32
    return %c0_i32, %c0_i32_0 : i32, i32
  }
  func.func @transform_11(%arg0: i32) -> (i32, i32) {
    %c0_i32 = arith.constant 0 : i32
    %c0_i32_0 = arith.constant 0 : i32
    %c0_i32_1 = arith.constant 0 : i32
    return %c0_i32, %c0_i32_0 : i32, i32
  }
  func.func @transform_12(%arg0: i32) -> (i32, i32) {
    %c0_i32 = arith.constant 0 : i32
    %c0_i32_0 = arith.constant 0 : i32
    %c0_i32_1 = arith.constant 0 : i32
    return %c0_i32, %c0_i32_0 : i32, i32
  }
  func.func @transform_13(%arg0: i32) -> (i32, i32) {
    %c0_i32 = arith.constant 0 : i32
    %c0_i32_0 = arith.constant 0 : i32
    return %arg0, %c0_i32 : i32, i32
  }
  func.func @transform_14(%arg0: i32) -> (i32, i32) {
    %c0_i32 = arith.constant 0 : i32
    %c0_i32_0 = arith.constant 0 : i32
    return %arg0, %c0_i32 : i32, i32
  }
}

module attributes {stable_mosaic.version = 11 : i64} {
  func.func @_tri_kernel(%arg0: i32, %arg1: memref<10x32xf32, #tpu.memory_space<vmem>>, %arg2: memref<10x32xf32, #tpu.memory_space<vmem>>, %arg3: memref<10x32xf32, #tpu.memory_space<vmem>>, %arg4: memref<32x32xf32, #tpu.memory_space<vmem>>, %arg5: memref<32x32xf32, #tpu.memory_space<vmem>>, %arg6: memref<32x32xf32, #tpu.memory_space<vmem>>, %arg7: memref<1x32xf32, #tpu.memory_space<vmem>>, %arg8: memref<10x32xf32, #tpu.memory_space<vmem>>) attributes {dimension_semantics = [#tpu.dimension_semantics<parallel>], iteration_bounds = array<i64: 1>, scalar_prefetch = 0 : i64, scratch_operands = 0 : i64, tpu.core_type = #tpu.core_type<tc>, window_params = [{transform_indices = @transform_0, window_bounds = array<i64: 10, 32>}, {transform_indices = @transform_1, window_bounds = array<i64: 10, 32>}, {transform_indices = @transform_2, window_bounds = array<i64: 10, 32>}, {pipeline_mode = #tpu.pipeline_mode<synchronous>, transform_indices = @transform_3, window_bounds = array<i64: 32, 32>}, {pipeline_mode = #tpu.pipeline_mode<synchronous>, transform_indices = @transform_4, window_bounds = array<i64: 32, 32>}, {pipeline_mode = #tpu.pipeline_mode<synchronous>, transform_indices = @transform_5, window_bounds = array<i64: 32, 32>}, {pipeline_mode = #tpu.pipeline_mode<synchronous>, transform_indices = @transform_6, window_bounds = array<i64: 1, 32>}, {transform_indices = @transform_7, window_bounds = array<i64: 10, 32>}]} {
    %c0 = arith.constant 0 : index
    %c0_0 = arith.constant 0 : index
    %0 = vector.load %arg1[%c0, %c0_0] : memref<10x32xf32, #tpu.memory_space<vmem>>, vector<10x32xf32>
    %c0_1 = arith.constant 0 : index
    %c0_2 = arith.constant 0 : index
    %1 = vector.load %arg4[%c0_1, %c0_2] : memref<32x32xf32, #tpu.memory_space<vmem>>, vector<32x32xf32>
    %cst = arith.constant dense<0.000000e+00> : vector<10x32xf32>
    %2 = tpu.matmul %0, %1, %cst {dimension_numbers = #tpu.dot_dimension_numbers<[1], [0], [0], [1], [0, 0, 1, 1], [], []>} : vector<10x32xf32>, vector<32x32xf32>, vector<10x32xf32> -> vector<10x32xf32>
    %c0_3 = arith.constant 0 : index
    %c0_4 = arith.constant 0 : index
    %3 = vector.load %arg2[%c0_3, %c0_4] : memref<10x32xf32, #tpu.memory_space<vmem>>, vector<10x32xf32>
    %c0_5 = arith.constant 0 : index
    %c0_6 = arith.constant 0 : index
    %4 = vector.load %arg5[%c0_5, %c0_6] : memref<32x32xf32, #tpu.memory_space<vmem>>, vector<32x32xf32>
    %cst_7 = arith.constant dense<0.000000e+00> : vector<10x32xf32>
    %5 = tpu.matmul %3, %4, %cst_7 {dimension_numbers = #tpu.dot_dimension_numbers<[1], [0], [0], [1], [0, 0, 1, 1], [], []>} : vector<10x32xf32>, vector<32x32xf32>, vector<10x32xf32> -> vector<10x32xf32>
    %6 = arith.addf %2, %5 : vector<10x32xf32>
    %c0_8 = arith.constant 0 : index
    %c0_9 = arith.constant 0 : index
    %7 = vector.load %arg3[%c0_8, %c0_9] : memref<10x32xf32, #tpu.memory_space<vmem>>, vector<10x32xf32>
    %c0_10 = arith.constant 0 : index
    %c0_11 = arith.constant 0 : index
    %8 = vector.load %arg6[%c0_10, %c0_11] : memref<32x32xf32, #tpu.memory_space<vmem>>, vector<32x32xf32>
    %cst_12 = arith.constant dense<0.000000e+00> : vector<10x32xf32>
    %9 = tpu.matmul %7, %8, %cst_12 {dimension_numbers = #tpu.dot_dimension_numbers<[1], [0], [0], [1], [0, 0, 1, 1], [], []>} : vector<10x32xf32>, vector<32x32xf32>, vector<10x32xf32> -> vector<10x32xf32>
    %10 = arith.addf %6, %9 : vector<10x32xf32>
    %c0_13 = arith.constant 0 : index
    %c0_14 = arith.constant 0 : index
    %11 = vector.load %arg7[%c0_13, %c0_14] : memref<1x32xf32, #tpu.memory_space<vmem>>, vector<1x32xf32>
    %12 = vector.broadcast %11 : vector<1x32xf32> to vector<10x32xf32>
    %13 = arith.addf %10, %12 : vector<10x32xf32>
    %cst_15 = arith.constant 5.000000e-01 : f32
    %14 = vector.broadcast %cst_15 : f32 to vector<10x32xf32>
    %15 = arith.mulf %14, %13 : vector<10x32xf32>
    %cst_16 = arith.constant 4.471500e-02 : f32
    %16 = vector.broadcast %cst_16 : f32 to vector<10x32xf32>
    %17 = arith.mulf %16, %13 : vector<10x32xf32>
    %18 = arith.mulf %17, %13 : vector<10x32xf32>
    %19 = arith.mulf %18, %13 : vector<10x32xf32>
    %20 = arith.addf %13, %19 : vector<10x32xf32>
    %cst_17 = arith.constant 0.797884583 : f32
    %21 = vector.broadcast %cst_17 : f32 to vector<10x32xf32>
    %22 = arith.mulf %21, %20 : vector<10x32xf32>
    %23 = math.tanh %22 : vector<10x32xf32>
    %cst_18 = arith.constant 1.000000e+00 : f32
    %24 = vector.broadcast %cst_18 : f32 to vector<10x32xf32>
    %25 = arith.addf %24, %23 : vector<10x32xf32>
    %26 = arith.mulf %15, %25 : vector<10x32xf32>
    %c0_19 = arith.constant 0 : index
    %c0_20 = arith.constant 0 : index
    %27 = vector.load %arg8[%c0_19, %c0_20] : memref<10x32xf32, #tpu.memory_space<vmem>>, vector<10x32xf32>
    tpu.vector_store %arg8[%c0_19, %c0_20], %26 {strides = array<i32>} : memref<10x32xf32, #tpu.memory_space<vmem>>, vector<10x32xf32>,
    return
  }
  func.func @transform_0(%arg0: i32) -> (i32, i32) {
    %c0_i32 = arith.constant 0 : i32
    %c0_i32_0 = arith.constant 0 : i32
    return %arg0, %c0_i32 : i32, i32
  }
  func.func @transform_1(%arg0: i32) -> (i32, i32) {
    %c0_i32 = arith.constant 0 : i32
    %c0_i32_0 = arith.constant 0 : i32
    return %arg0, %c0_i32 : i32, i32
  }
  func.func @transform_2(%arg0: i32) -> (i32, i32) {
    %c0_i32 = arith.constant 0 : i32
    %c0_i32_0 = arith.constant 0 : i32
    return %arg0, %c0_i32 : i32, i32
  }
  func.func @transform_3(%arg0: i32) -> (i32, i32) {
    %c0_i32 = arith.constant 0 : i32
    %c0_i32_0 = arith.constant 0 : i32
    %c0_i32_1 = arith.constant 0 : i32
    return %c0_i32, %c0_i32_0 : i32, i32
  }
  func.func @transform_4(%arg0: i32) -> (i32, i32) {
    %c0_i32 = arith.constant 0 : i32
    %c0_i32_0 = arith.constant 0 : i32
    %c0_i32_1 = arith.constant 0 : i32
    return %c0_i32, %c0_i32_0 : i32, i32
  }
  func.func @transform_5(%arg0: i32) -> (i32, i32) {
    %c0_i32 = arith.constant 0 : i32
    %c0_i32_0 = arith.constant 0 : i32
    %c0_i32_1 = arith.constant 0 : i32
    return %c0_i32, %c0_i32_0 : i32, i32
  }
  func.func @transform_6(%arg0: i32) -> (i32, i32) {
    %c0_i32 = arith.constant 0 : i32
    %c0_i32_0 = arith.constant 0 : i32
    %c0_i32_1 = arith.constant 0 : i32
    return %c0_i32, %c0_i32_0 : i32, i32
  }
  func.func @transform_7(%arg0: i32) -> (i32, i32) {
    %c0_i32 = arith.constant 0 : i32
    %c0_i32_0 = arith.constant 0 : i32
    return %arg0, %c0_i32 : i32, i32
  }
}

module attributes {stable_mosaic.version = 11 : i64} {
  func.func @_sym_kernel(%arg0: i32, %arg1: memref<8x32xf32, #tpu.memory_space<vmem>>, %arg2: memref<8x32xf32, #tpu.memory_space<vmem>>, %arg3: memref<32x32xf32, #tpu.memory_space<vmem>>, %arg4: memref<32x32xf32, #tpu.memory_space<vmem>>, %arg5: memref<1x32xf32, #tpu.memory_space<vmem>>, %arg6: memref<1x32xf32, #tpu.memory_space<vmem>>, %arg7: memref<1x32xf32, #tpu.memory_space<vmem>>, %arg8: memref<8x32xf32, #tpu.memory_space<vmem>>) attributes {dimension_semantics = [#tpu.dimension_semantics<parallel>], iteration_bounds = array<i64: 1>, scalar_prefetch = 0 : i64, scratch_operands = 0 : i64, tpu.core_type = #tpu.core_type<tc>, window_params = [{transform_indices = @transform_0, window_bounds = array<i64: 8, 32>}, {transform_indices = @transform_1, window_bounds = array<i64: 8, 32>}, {pipeline_mode = #tpu.pipeline_mode<synchronous>, transform_indices = @transform_2, window_bounds = array<i64: 32, 32>}, {pipeline_mode = #tpu.pipeline_mode<synchronous>, transform_indices = @transform_3, window_bounds = array<i64: 32, 32>}, {pipeline_mode = #tpu.pipeline_mode<synchronous>, transform_indices = @transform_4, window_bounds = array<i64: 1, 32>}, {pipeline_mode = #tpu.pipeline_mode<synchronous>, transform_indices = @transform_5, window_bounds = array<i64: 1, 32>}, {pipeline_mode = #tpu.pipeline_mode<synchronous>, transform_indices = @transform_6, window_bounds = array<i64: 1, 32>}, {transform_indices = @transform_7, window_bounds = array<i64: 8, 32>}]} {
    %c0 = arith.constant 0 : index
    %c0_0 = arith.constant 0 : index
    %0 = vector.load %arg1[%c0, %c0_0] : memref<8x32xf32, #tpu.memory_space<vmem>>, vector<8x32xf32>
    %c0_1 = arith.constant 0 : index
    %c0_2 = arith.constant 0 : index
    %1 = vector.load %arg3[%c0_1, %c0_2] : memref<32x32xf32, #tpu.memory_space<vmem>>, vector<32x32xf32>
    %cst = arith.constant dense<0.000000e+00> : vector<8x32xf32>
    %2 = tpu.matmul %0, %1, %cst {dimension_numbers = #tpu.dot_dimension_numbers<[1], [0], [0], [1], [0, 0, 1, 1], [], []>} : vector<8x32xf32>, vector<32x32xf32>, vector<8x32xf32> -> vector<8x32xf32>
    %c0_3 = arith.constant 0 : index
    %c0_4 = arith.constant 0 : index
    %3 = vector.load %arg2[%c0_3, %c0_4] : memref<8x32xf32, #tpu.memory_space<vmem>>, vector<8x32xf32>
    %c0_5 = arith.constant 0 : index
    %c0_6 = arith.constant 0 : index
    %4 = vector.load %arg4[%c0_5, %c0_6] : memref<32x32xf32, #tpu.memory_space<vmem>>, vector<32x32xf32>
    %cst_7 = arith.constant dense<0.000000e+00> : vector<8x32xf32>
    %5 = tpu.matmul %3, %4, %cst_7 {dimension_numbers = #tpu.dot_dimension_numbers<[1], [0], [0], [1], [0, 0, 1, 1], [], []>} : vector<8x32xf32>, vector<32x32xf32>, vector<8x32xf32> -> vector<8x32xf32>
    %6 = arith.addf %2, %5 : vector<8x32xf32>
    %c0_8 = arith.constant 0 : index
    %c0_9 = arith.constant 0 : index
    %7 = vector.load %arg5[%c0_8, %c0_9] : memref<1x32xf32, #tpu.memory_space<vmem>>, vector<1x32xf32>
    %8 = vector.broadcast %7 : vector<1x32xf32> to vector<8x32xf32>
    %9 = arith.addf %6, %8 : vector<8x32xf32>
    %cst_10 = arith.constant 5.000000e-01 : f32
    %10 = vector.broadcast %cst_10 : f32 to vector<8x32xf32>
    %11 = arith.mulf %10, %9 : vector<8x32xf32>
    %cst_11 = arith.constant 4.471500e-02 : f32
    %12 = vector.broadcast %cst_11 : f32 to vector<8x32xf32>
    %13 = arith.mulf %12, %9 : vector<8x32xf32>
    %14 = arith.mulf %13, %9 : vector<8x32xf32>
    %15 = arith.mulf %14, %9 : vector<8x32xf32>
    %16 = arith.addf %9, %15 : vector<8x32xf32>
    %cst_12 = arith.constant 0.797884583 : f32
    %17 = vector.broadcast %cst_12 : f32 to vector<8x32xf32>
    %18 = arith.mulf %17, %16 : vector<8x32xf32>
    %19 = math.tanh %18 : vector<8x32xf32>
    %cst_13 = arith.constant 1.000000e+00 : f32
    %20 = vector.broadcast %cst_13 : f32 to vector<8x32xf32>
    %21 = arith.addf %20, %19 : vector<8x32xf32>
    %22 = arith.mulf %11, %21 : vector<8x32xf32>
    %c0_14 = arith.constant 0 : index
    %c0_15 = arith.constant 0 : index
    %23 = vector.load %arg6[%c0_14, %c0_15] : memref<1x32xf32, #tpu.memory_space<vmem>>, vector<1x32xf32>
    %c0_16 = arith.constant 0 : index
    %c0_17 = arith.constant 0 : index
    %24 = vector.load %arg7[%c0_16, %c0_17] : memref<1x32xf32, #tpu.memory_space<vmem>>, vector<1x32xf32>
    %cst_18 = arith.constant dense<0.000000e+00> : vector<8xf32>
    %25 = vector.multi_reduction <add>, %22, %cst_18 [1] : vector<8x32xf32> to vector<8xf32>
    %26 = vector.shape_cast %25 : vector<8xf32> to vector<8x1xf32>
    %cst_19 = arith.constant 3.200000e+01 : f32
    %27 = vector.broadcast %cst_19 : f32 to vector<8x1xf32>
    %28 = arith.divf %26, %27 : vector<8x1xf32>
    %29 = vector.broadcast %28 : vector<8x1xf32> to vector<8x32xf32>
    %30 = arith.subf %22, %29 : vector<8x32xf32>
    %31 = arith.mulf %30, %30 : vector<8x32xf32>
    %cst_20 = arith.constant dense<0.000000e+00> : vector<8xf32>
    %32 = vector.multi_reduction <add>, %31, %cst_20 [1] : vector<8x32xf32> to vector<8xf32>
    %33 = vector.shape_cast %32 : vector<8xf32> to vector<8x1xf32>
    %cst_21 = arith.constant 3.200000e+01 : f32
    %34 = vector.broadcast %cst_21 : f32 to vector<8x1xf32>
    %35 = arith.divf %33, %34 : vector<8x1xf32>
    %36 = vector.broadcast %28 : vector<8x1xf32> to vector<8x32xf32>
    %37 = arith.subf %22, %36 : vector<8x32xf32>
    %cst_22 = arith.constant 9.99999974E-6 : f32
    %38 = vector.broadcast %cst_22 : f32 to vector<8x1xf32>
    %39 = arith.addf %35, %38 : vector<8x1xf32>
    %40 = math.rsqrt %39 : vector<8x1xf32>
    %41 = vector.broadcast %40 : vector<8x1xf32> to vector<8x32xf32>
    %42 = arith.mulf %37, %41 : vector<8x32xf32>
    %43 = vector.broadcast %23 : vector<1x32xf32> to vector<8x32xf32>
    %44 = arith.mulf %42, %43 : vector<8x32xf32>
    %45 = vector.broadcast %24 : vector<1x32xf32> to vector<8x32xf32>
    %46 = arith.addf %44, %45 : vector<8x32xf32>
    %c0_23 = arith.constant 0 : index
    %c0_24 = arith.constant 0 : index
    %47 = vector.load %arg8[%c0_23, %c0_24] : memref<8x32xf32, #tpu.memory_space<vmem>>, vector<8x32xf32>
    tpu.vector_store %arg8[%c0_23, %c0_24], %46 {strides = array<i32>} : memref<8x32xf32, #tpu.memory_space<vmem>>, vector<8x32xf32>,
    return
  }
  func.func @transform_0(%arg0: i32) -> (i32, i32) {
    %c0_i32 = arith.constant 0 : i32
    %c0_i32_0 = arith.constant 0 : i32
    return %arg0, %c0_i32 : i32, i32
  }
  func.func @transform_1(%arg0: i32) -> (i32, i32) {
    %c0_i32 = arith.constant 0 : i32
    %c0_i32_0 = arith.constant 0 : i32
    return %arg0, %c0_i32 : i32, i32
  }
  func.func @transform_2(%arg0: i32) -> (i32, i32) {
    %c0_i32 = arith.constant 0 : i32
    %c0_i32_0 = arith.constant 0 : i32
    %c0_i32_1 = arith.constant 0 : i32
    return %c0_i32, %c0_i32_0 : i32, i32
  }
  func.func @transform_3(%arg0: i32) -> (i32, i32) {
    %c0_i32 = arith.constant 0 : i32
    %c0_i32_0 = arith.constant 0 : i32
    %c0_i32_1 = arith.constant 0 : i32
    return %c0_i32, %c0_i32_0 : i32, i32
  }
  func.func @transform_4(%arg0: i32) -> (i32, i32) {
    %c0_i32 = arith.constant 0 : i32
    %c0_i32_0 = arith.constant 0 : i32
    %c0_i32_1 = arith.constant 0 : i32
    return %c0_i32, %c0_i32_0 : i32, i32
  }
  func.func @transform_5(%arg0: i32) -> (i32, i32) {
    %c0_i32 = arith.constant 0 : i32
    %c0_i32_0 = arith.constant 0 : i32
    %c0_i32_1 = arith.constant 0 : i32
    return %c0_i32, %c0_i32_0 : i32, i32
  }
  func.func @transform_6(%arg0: i32) -> (i32, i32) {
    %c0_i32 = arith.constant 0 : i32
    %c0_i32_0 = arith.constant 0 : i32
    %c0_i32_1 = arith.constant 0 : i32
    return %c0_i32, %c0_i32_0 : i32, i32
  }
  func.func @transform_7(%arg0: i32) -> (i32, i32) {
    %c0_i32 = arith.constant 0 : i32
    %c0_i32_0 = arith.constant 0 : i32
    return %arg0, %c0_i32 : i32, i32
  }
}

module attributes {stable_mosaic.version = 11 : i64} {
  func.func @_mean_ln_kernel(%arg0: i32, %arg1: memref<8x32xf32, #tpu.memory_space<vmem>>, %arg2: memref<8x1xf32, #tpu.memory_space<vmem>>, %arg3: memref<1x32xf32, #tpu.memory_space<vmem>>, %arg4: memref<1x32xf32, #tpu.memory_space<vmem>>, %arg5: memref<8x32xf32, #tpu.memory_space<vmem>>) attributes {dimension_semantics = [#tpu.dimension_semantics<parallel>], iteration_bounds = array<i64: 1>, scalar_prefetch = 0 : i64, scratch_operands = 0 : i64, tpu.core_type = #tpu.core_type<tc>, window_params = [{transform_indices = @transform_0, window_bounds = array<i64: 8, 32>}, {transform_indices = @transform_1, window_bounds = array<i64: 8, 1>}, {pipeline_mode = #tpu.pipeline_mode<synchronous>, transform_indices = @transform_2, window_bounds = array<i64: 1, 32>}, {pipeline_mode = #tpu.pipeline_mode<synchronous>, transform_indices = @transform_3, window_bounds = array<i64: 1, 32>}, {transform_indices = @transform_4, window_bounds = array<i64: 8, 32>}]} {
    %c0 = arith.constant 0 : index
    %c0_0 = arith.constant 0 : index
    %0 = vector.load %arg1[%c0, %c0_0] : memref<8x32xf32, #tpu.memory_space<vmem>>, vector<8x32xf32>
    %c0_1 = arith.constant 0 : index
    %c0_2 = arith.constant 0 : index
    %1 = vector.load %arg2[%c0_1, %c0_2] : memref<8x1xf32, #tpu.memory_space<vmem>>, vector<8x1xf32>
    %cst = arith.constant 1.000000e+00 : f32
    %2 = vector.broadcast %cst : f32 to vector<8x1xf32>
    %3 = arith.maximumf %1, %2 : vector<8x1xf32>
    %4 = vector.broadcast %3 : vector<8x1xf32> to vector<8x32xf32>
    %5 = arith.divf %0, %4 : vector<8x32xf32>
    %c0_3 = arith.constant 0 : index
    %c0_4 = arith.constant 0 : index
    %6 = vector.load %arg3[%c0_3, %c0_4] : memref<1x32xf32, #tpu.memory_space<vmem>>, vector<1x32xf32>
    %c0_5 = arith.constant 0 : index
    %c0_6 = arith.constant 0 : index
    %7 = vector.load %arg4[%c0_5, %c0_6] : memref<1x32xf32, #tpu.memory_space<vmem>>, vector<1x32xf32>
    %cst_7 = arith.constant dense<0.000000e+00> : vector<8xf32>
    %8 = vector.multi_reduction <add>, %5, %cst_7 [1] : vector<8x32xf32> to vector<8xf32>
    %9 = vector.shape_cast %8 : vector<8xf32> to vector<8x1xf32>
    %cst_8 = arith.constant 3.200000e+01 : f32
    %10 = vector.broadcast %cst_8 : f32 to vector<8x1xf32>
    %11 = arith.divf %9, %10 : vector<8x1xf32>
    %12 = vector.broadcast %11 : vector<8x1xf32> to vector<8x32xf32>
    %13 = arith.subf %5, %12 : vector<8x32xf32>
    %14 = arith.mulf %13, %13 : vector<8x32xf32>
    %cst_9 = arith.constant dense<0.000000e+00> : vector<8xf32>
    %15 = vector.multi_reduction <add>, %14, %cst_9 [1] : vector<8x32xf32> to vector<8xf32>
    %16 = vector.shape_cast %15 : vector<8xf32> to vector<8x1xf32>
    %cst_10 = arith.constant 3.200000e+01 : f32
    %17 = vector.broadcast %cst_10 : f32 to vector<8x1xf32>
    %18 = arith.divf %16, %17 : vector<8x1xf32>
    %19 = vector.broadcast %11 : vector<8x1xf32> to vector<8x32xf32>
    %20 = arith.subf %5, %19 : vector<8x32xf32>
    %cst_11 = arith.constant 9.99999974E-6 : f32
    %21 = vector.broadcast %cst_11 : f32 to vector<8x1xf32>
    %22 = arith.addf %18, %21 : vector<8x1xf32>
    %23 = math.rsqrt %22 : vector<8x1xf32>
    %24 = vector.broadcast %23 : vector<8x1xf32> to vector<8x32xf32>
    %25 = arith.mulf %20, %24 : vector<8x32xf32>
    %26 = vector.broadcast %6 : vector<1x32xf32> to vector<8x32xf32>
    %27 = arith.mulf %25, %26 : vector<8x32xf32>
    %28 = vector.broadcast %7 : vector<1x32xf32> to vector<8x32xf32>
    %29 = arith.addf %27, %28 : vector<8x32xf32>
    %c0_12 = arith.constant 0 : index
    %c0_13 = arith.constant 0 : index
    %30 = vector.load %arg5[%c0_12, %c0_13] : memref<8x32xf32, #tpu.memory_space<vmem>>, vector<8x32xf32>
    tpu.vector_store %arg5[%c0_12, %c0_13], %29 {strides = array<i32>} : memref<8x32xf32, #tpu.memory_space<vmem>>, vector<8x32xf32>,
    return
  }
  func.func @transform_0(%arg0: i32) -> (i32, i32) {
    %c0_i32 = arith.constant 0 : i32
    %c0_i32_0 = arith.constant 0 : i32
    return %arg0, %c0_i32 : i32, i32
  }
  func.func @transform_1(%arg0: i32) -> (i32, i32) {
    %c0_i32 = arith.constant 0 : i32
    %c0_i32_0 = arith.constant 0 : i32
    return %arg0, %c0_i32 : i32, i32
  }
  func.func @transform_2(%arg0: i32) -> (i32, i32) {
    %c0_i32 = arith.constant 0 : i32
    %c0_i32_0 = arith.constant 0 : i32
    %c0_i32_1 = arith.constant 0 : i32
    return %c0_i32, %c0_i32_0 : i32, i32
  }
  func.func @transform_3(%arg0: i32) -> (i32, i32) {
    %c0_i32 = arith.constant 0 : i32
    %c0_i32_0 = arith.constant 0 : i32
    %c0_i32_1 = arith.constant 0 : i32
    return %c0_i32, %c0_i32_0 : i32, i32
  }
  func.func @transform_4(%arg0: i32) -> (i32, i32) {
    %c0_i32 = arith.constant 0 : i32
    %c0_i32_0 = arith.constant 0 : i32
    return %arg0, %c0_i32 : i32, i32
  }
}

module attributes {stable_mosaic.version = 11 : i64} {
  func.func @_sk_ff_kernel(%arg0: i32, %arg1: memref<8x32xf32, #tpu.memory_space<vmem>>, %arg2: memref<8x32xf32, #tpu.memory_space<vmem>>, %arg3: memref<8x32xf32, #tpu.memory_space<vmem>>, %arg4: memref<8x32xf32, #tpu.memory_space<vmem>>, %arg5: memref<1x32xf32, #tpu.memory_space<vmem>>, %arg6: memref<1x32xf32, #tpu.memory_space<vmem>>, %arg7: memref<32x128xf32, #tpu.memory_space<vmem>>, %arg8: memref<1x128xf32, #tpu.memory_space<vmem>>, %arg9: memref<128x32xf32, #tpu.memory_space<vmem>>, %arg10: memref<128x32xf32, #tpu.memory_space<vmem>>, %arg11: memref<128x32xf32, #tpu.memory_space<vmem>>, %arg12: memref<1x32xf32, #tpu.memory_space<vmem>>, %arg13: memref<1x32xf32, #tpu.memory_space<vmem>>, %arg14: memref<1x32xf32, #tpu.memory_space<vmem>>, %arg15: memref<1x32xf32, #tpu.memory_space<vmem>>, %arg16: memref<1x32xf32, #tpu.memory_space<vmem>>, %arg17: memref<32x64xf32, #tpu.memory_space<vmem>>, %arg18: memref<32x64xf32, #tpu.memory_space<vmem>>, %arg19: memref<64x32xf32, #tpu.memory_space<vmem>>, %arg20: memref<1x32xf32, #tpu.memory_space<vmem>>, %arg21: memref<1x32xf32, #tpu.memory_space<vmem>>, %arg22: memref<8x32xf32, #tpu.memory_space<vmem>>) attributes {dimension_semantics = [#tpu.dimension_semantics<parallel>], iteration_bounds = array<i64: 1>, scalar_prefetch = 0 : i64, scratch_operands = 0 : i64, tpu.core_type = #tpu.core_type<tc>, window_params = [{transform_indices = @transform_0, window_bounds = array<i64: 8, 32>}, {transform_indices = @transform_1, window_bounds = array<i64: 8, 32>}, {transform_indices = @transform_2, window_bounds = array<i64: 8, 32>}, {transform_indices = @transform_3, window_bounds = array<i64: 8, 32>}, {pipeline_mode = #tpu.pipeline_mode<synchronous>, transform_indices = @transform_4, window_bounds = array<i64: 1, 32>}, {pipeline_mode = #tpu.pipeline_mode<synchronous>, transform_indices = @transform_5, window_bounds = array<i64: 1, 32>}, {pipeline_mode = #tpu.pipeline_mode<synchronous>, transform_indices = @transform_6, window_bounds = array<i64: 32, 128>}, {pipeline_mode = #tpu.pipeline_mode<synchronous>, transform_indices = @transform_7, window_bounds = array<i64: 1, 128>}, {pipeline_mode = #tpu.pipeline_mode<synchronous>, transform_indices = @transform_8, window_bounds = array<i64: 128, 32>}, {pipeline_mode = #tpu.pipeline_mode<synchronous>, transform_indices = @transform_9, window_bounds = array<i64: 128, 32>}, {pipeline_mode = #tpu.pipeline_mode<synchronous>, transform_indices = @transform_10, window_bounds = array<i64: 128, 32>}, {pipeline_mode = #tpu.pipeline_mode<synchronous>, transform_indices = @transform_11, window_bounds = array<i64: 1, 32>}, {pipeline_mode = #tpu.pipeline_mode<synchronous>, transform_indices = @transform_12, window_bounds = array<i64: 1, 32>}, {pipeline_mode = #tpu.pipeline_mode<synchronous>, transform_indices = @transform_13, window_bounds = array<i64: 1, 32>}, {pipeline_mode = #tpu.pipeline_mode<synchronous>, transform_indices = @transform_14, window_bounds = array<i64: 1, 32>}, {pipeline_mode = #tpu.pipeline_mode<synchronous>, transform_indices = @transform_15, window_bounds = array<i64: 1, 32>}, {pipeline_mode = #tpu.pipeline_mode<synchronous>, transform_indices = @transform_16, window_bounds = array<i64: 32, 64>}, {pipeline_mode = #tpu.pipeline_mode<synchronous>, transform_indices = @transform_17, window_bounds = array<i64: 32, 64>}, {pipeline_mode = #tpu.pipeline_mode<synchronous>, transform_indices = @transform_18, window_bounds = array<i64: 64, 32>}, {pipeline_mode = #tpu.pipeline_mode<synchronous>, transform_indices = @transform_19, window_bounds = array<i64: 1, 32>}, {pipeline_mode = #tpu.pipeline_mode<synchronous>, transform_indices = @transform_20, window_bounds = array<i64: 1, 32>}, {transform_indices = @transform_21, window_bounds = array<i64: 8, 32>}]} {
    %c0 = arith.constant 0 : index
    %c0_0 = arith.constant 0 : index
    %0 = vector.load %arg2[%c0, %c0_0] : memref<8x32xf32, #tpu.memory_space<vmem>>, vector<8x32xf32>
    %c0_1 = arith.constant 0 : index
    %c0_2 = arith.constant 0 : index
    %1 = vector.load %arg3[%c0_1, %c0_2] : memref<8x32xf32, #tpu.memory_space<vmem>>, vector<8x32xf32>
    %c0_3 = arith.constant 0 : index
    %c0_4 = arith.constant 0 : index
    %2 = vector.load %arg4[%c0_3, %c0_4] : memref<8x32xf32, #tpu.memory_space<vmem>>, vector<8x32xf32>
    %3 = arith.addf %0, %1 : vector<8x32xf32>
    %4 = arith.addf %3, %2 : vector<8x32xf32>
    %c0_5 = arith.constant 0 : index
    %c0_6 = arith.constant 0 : index
    %5 = vector.load %arg5[%c0_5, %c0_6] : memref<1x32xf32, #tpu.memory_space<vmem>>, vector<1x32xf32>
    %c0_7 = arith.constant 0 : index
    %c0_8 = arith.constant 0 : index
    %6 = vector.load %arg6[%c0_7, %c0_8] : memref<1x32xf32, #tpu.memory_space<vmem>>, vector<1x32xf32>
    %cst = arith.constant dense<0.000000e+00> : vector<8xf32>
    %7 = vector.multi_reduction <add>, %4, %cst [1] : vector<8x32xf32> to vector<8xf32>
    %8 = vector.shape_cast %7 : vector<8xf32> to vector<8x1xf32>
    %cst_9 = arith.constant 3.200000e+01 : f32
    %9 = vector.broadcast %cst_9 : f32 to vector<8x1xf32>
    %10 = arith.divf %8, %9 : vector<8x1xf32>
    %11 = vector.broadcast %10 : vector<8x1xf32> to vector<8x32xf32>
    %12 = arith.subf %4, %11 : vector<8x32xf32>
    %13 = arith.mulf %12, %12 : vector<8x32xf32>
    %cst_10 = arith.constant dense<0.000000e+00> : vector<8xf32>
    %14 = vector.multi_reduction <add>, %13, %cst_10 [1] : vector<8x32xf32> to vector<8xf32>
    %15 = vector.shape_cast %14 : vector<8xf32> to vector<8x1xf32>
    %cst_11 = arith.constant 3.200000e+01 : f32
    %16 = vector.broadcast %cst_11 : f32 to vector<8x1xf32>
    %17 = arith.divf %15, %16 : vector<8x1xf32>
    %18 = vector.broadcast %10 : vector<8x1xf32> to vector<8x32xf32>
    %19 = arith.subf %4, %18 : vector<8x32xf32>
    %cst_12 = arith.constant 9.99999974E-6 : f32
    %20 = vector.broadcast %cst_12 : f32 to vector<8x1xf32>
    %21 = arith.addf %17, %20 : vector<8x1xf32>
    %22 = math.rsqrt %21 : vector<8x1xf32>
    %23 = vector.broadcast %22 : vector<8x1xf32> to vector<8x32xf32>
    %24 = arith.mulf %19, %23 : vector<8x32xf32>
    %25 = vector.broadcast %5 : vector<1x32xf32> to vector<8x32xf32>
    %26 = arith.mulf %24, %25 : vector<8x32xf32>
    %27 = vector.broadcast %6 : vector<1x32xf32> to vector<8x32xf32>
    %28 = arith.addf %26, %27 : vector<8x32xf32>
    %c0_13 = arith.constant 0 : index
    %c0_14 = arith.constant 0 : index
    %29 = vector.load %arg7[%c0_13, %c0_14] : memref<32x128xf32, #tpu.memory_space<vmem>>, vector<32x128xf32>
    %cst_15 = arith.constant dense<0.000000e+00> : vector<8x128xf32>
    %30 = tpu.matmul %28, %29, %cst_15 {dimension_numbers = #tpu.dot_dimension_numbers<[1], [0], [0], [1], [0, 0, 1, 1], [], []>} : vector<8x32xf32>, vector<32x128xf32>, vector<8x128xf32> -> vector<8x128xf32>
    %c0_16 = arith.constant 0 : index
    %c0_17 = arith.constant 0 : index
    %31 = vector.load %arg8[%c0_16, %c0_17] : memref<1x128xf32, #tpu.memory_space<vmem>>, vector<1x128xf32>
    %32 = vector.broadcast %31 : vector<1x128xf32> to vector<8x128xf32>
    %33 = arith.addf %30, %32 : vector<8x128xf32>
    %cst_18 = arith.constant 5.000000e-01 : f32
    %34 = vector.broadcast %cst_18 : f32 to vector<8x128xf32>
    %35 = arith.mulf %34, %33 : vector<8x128xf32>
    %cst_19 = arith.constant 4.471500e-02 : f32
    %36 = vector.broadcast %cst_19 : f32 to vector<8x128xf32>
    %37 = arith.mulf %36, %33 : vector<8x128xf32>
    %38 = arith.mulf %37, %33 : vector<8x128xf32>
    %39 = arith.mulf %38, %33 : vector<8x128xf32>
    %40 = arith.addf %33, %39 : vector<8x128xf32>
    %cst_20 = arith.constant 0.797884583 : f32
    %41 = vector.broadcast %cst_20 : f32 to vector<8x128xf32>
    %42 = arith.mulf %41, %40 : vector<8x128xf32>
    %43 = math.tanh %42 : vector<8x128xf32>
    %cst_21 = arith.constant 1.000000e+00 : f32
    %44 = vector.broadcast %cst_21 : f32 to vector<8x128xf32>
    %45 = arith.addf %44, %43 : vector<8x128xf32>
    %46 = arith.mulf %35, %45 : vector<8x128xf32>
    %c0_22 = arith.constant 0 : index
    %c0_23 = arith.constant 0 : index
    %47 = vector.load %arg9[%c0_22, %c0_23] : memref<128x32xf32, #tpu.memory_space<vmem>>, vector<128x32xf32>
    %cst_24 = arith.constant dense<0.000000e+00> : vector<8x32xf32>
    %48 = tpu.matmul %46, %47, %cst_24 {dimension_numbers = #tpu.dot_dimension_numbers<[1], [0], [0], [1], [0, 0, 1, 1], [], []>} : vector<8x128xf32>, vector<128x32xf32>, vector<8x32xf32> -> vector<8x32xf32>
    %c0_25 = arith.constant 0 : index
    %c0_26 = arith.constant 0 : index
    %49 = vector.load %arg12[%c0_25, %c0_26] : memref<1x32xf32, #tpu.memory_space<vmem>>, vector<1x32xf32>
    %50 = vector.broadcast %49 : vector<1x32xf32> to vector<8x32xf32>
    %51 = arith.addf %48, %50 : vector<8x32xf32>
    %c0_27 = arith.constant 0 : index
    %c0_28 = arith.constant 0 : index
    %52 = vector.load %arg10[%c0_27, %c0_28] : memref<128x32xf32, #tpu.memory_space<vmem>>, vector<128x32xf32>
    %cst_29 = arith.constant dense<0.000000e+00> : vector<8x32xf32>
    %53 = tpu.matmul %46, %52, %cst_29 {dimension_numbers = #tpu.dot_dimension_numbers<[1], [0], [0], [1], [0, 0, 1, 1], [], []>} : vector<8x128xf32>, vector<128x32xf32>, vector<8x32xf32> -> vector<8x32xf32>
    %c0_30 = arith.constant 0 : index
    %c0_31 = arith.constant 0 : index
    %54 = vector.load %arg13[%c0_30, %c0_31] : memref<1x32xf32, #tpu.memory_space<vmem>>, vector<1x32xf32>
    %55 = vector.broadcast %54 : vector<1x32xf32> to vector<8x32xf32>
    %56 = arith.addf %53, %55 : vector<8x32xf32>
    %c0_32 = arith.constant 0 : index
    %c0_33 = arith.constant 0 : index
    %57 = vector.load %arg11[%c0_32, %c0_33] : memref<128x32xf32, #tpu.memory_space<vmem>>, vector<128x32xf32>
    %cst_34 = arith.constant dense<0.000000e+00> : vector<8x32xf32>
    %58 = tpu.matmul %46, %57, %cst_34 {dimension_numbers = #tpu.dot_dimension_numbers<[1], [0], [0], [1], [0, 0, 1, 1], [], []>} : vector<8x128xf32>, vector<128x32xf32>, vector<8x32xf32> -> vector<8x32xf32>
    %c0_35 = arith.constant 0 : index
    %c0_36 = arith.constant 0 : index
    %59 = vector.load %arg14[%c0_35, %c0_36] : memref<1x32xf32, #tpu.memory_space<vmem>>, vector<1x32xf32>
    %60 = vector.broadcast %59 : vector<1x32xf32> to vector<8x32xf32>
    %61 = arith.addf %58, %60 : vector<8x32xf32>
    %62 = arith.maximumf %51, %56 : vector<8x32xf32>
    %63 = arith.maximumf %62, %61 : vector<8x32xf32>
    %64 = arith.subf %51, %63 : vector<8x32xf32>
    %65 = math.exp %64 : vector<8x32xf32>
    %66 = arith.subf %56, %63 : vector<8x32xf32>
    %67 = math.exp %66 : vector<8x32xf32>
    %68 = arith.subf %61, %63 : vector<8x32xf32>
    %69 = math.exp %68 : vector<8x32xf32>
    %70 = arith.mulf %0, %65 : vector<8x32xf32>
    %71 = arith.mulf %1, %67 : vector<8x32xf32>
    %72 = arith.addf %70, %71 : vector<8x32xf32>
    %73 = arith.mulf %2, %69 : vector<8x32xf32>
    %74 = arith.addf %72, %73 : vector<8x32xf32>
    %75 = arith.addf %65, %67 : vector<8x32xf32>
    %76 = arith.addf %75, %69 : vector<8x32xf32>
    %77 = arith.divf %74, %76 : vector<8x32xf32>
    %c0_37 = arith.constant 0 : index
    %c0_38 = arith.constant 0 : index
    %78 = vector.load %arg1[%c0_37, %c0_38] : memref<8x32xf32, #tpu.memory_space<vmem>>, vector<8x32xf32>
    %79 = arith.addf %78, %77 : vector<8x32xf32>
    %c0_39 = arith.constant 0 : index
    %c0_40 = arith.constant 0 : index
    %80 = vector.load %arg15[%c0_39, %c0_40] : memref<1x32xf32, #tpu.memory_space<vmem>>, vector<1x32xf32>
    %c0_41 = arith.constant 0 : index
    %c0_42 = arith.constant 0 : index
    %81 = vector.load %arg16[%c0_41, %c0_42] : memref<1x32xf32, #tpu.memory_space<vmem>>, vector<1x32xf32>
    %cst_43 = arith.constant dense<0.000000e+00> : vector<8xf32>
    %82 = vector.multi_reduction <add>, %79, %cst_43 [1] : vector<8x32xf32> to vector<8xf32>
    %83 = vector.shape_cast %82 : vector<8xf32> to vector<8x1xf32>
    %cst_44 = arith.constant 3.200000e+01 : f32
    %84 = vector.broadcast %cst_44 : f32 to vector<8x1xf32>
    %85 = arith.divf %83, %84 : vector<8x1xf32>
    %86 = vector.broadcast %85 : vector<8x1xf32> to vector<8x32xf32>
    %87 = arith.subf %79, %86 : vector<8x32xf32>
    %88 = arith.mulf %87, %87 : vector<8x32xf32>
    %cst_45 = arith.constant dense<0.000000e+00> : vector<8xf32>
    %89 = vector.multi_reduction <add>, %88, %cst_45 [1] : vector<8x32xf32> to vector<8xf32>
    %90 = vector.shape_cast %89 : vector<8xf32> to vector<8x1xf32>
    %cst_46 = arith.constant 3.200000e+01 : f32
    %91 = vector.broadcast %cst_46 : f32 to vector<8x1xf32>
    %92 = arith.divf %90, %91 : vector<8x1xf32>
    %93 = vector.broadcast %85 : vector<8x1xf32> to vector<8x32xf32>
    %94 = arith.subf %79, %93 : vector<8x32xf32>
    %cst_47 = arith.constant 9.99999974E-6 : f32
    %95 = vector.broadcast %cst_47 : f32 to vector<8x1xf32>
    %96 = arith.addf %92, %95 : vector<8x1xf32>
    %97 = math.rsqrt %96 : vector<8x1xf32>
    %98 = vector.broadcast %97 : vector<8x1xf32> to vector<8x32xf32>
    %99 = arith.mulf %94, %98 : vector<8x32xf32>
    %100 = vector.broadcast %80 : vector<1x32xf32> to vector<8x32xf32>
    %101 = arith.mulf %99, %100 : vector<8x32xf32>
    %102 = vector.broadcast %81 : vector<1x32xf32> to vector<8x32xf32>
    %103 = arith.addf %101, %102 : vector<8x32xf32>
    %c0_48 = arith.constant 0 : index
    %c0_49 = arith.constant 0 : index
    %104 = vector.load %arg17[%c0_48, %c0_49] : memref<32x64xf32, #tpu.memory_space<vmem>>, vector<32x64xf32>
    %cst_50 = arith.constant dense<0.000000e+00> : vector<8x64xf32>
    %105 = tpu.matmul %103, %104, %cst_50 {dimension_numbers = #tpu.dot_dimension_numbers<[1], [0], [0], [1], [0, 0, 1, 1], [], []>} : vector<8x32xf32>, vector<32x64xf32>, vector<8x64xf32> -> vector<8x64xf32>
    %c0_51 = arith.constant 0 : index
    %c0_52 = arith.constant 0 : index
    %106 = vector.load %arg18[%c0_51, %c0_52] : memref<32x64xf32, #tpu.memory_space<vmem>>, vector<32x64xf32>
    %cst_53 = arith.constant dense<0.000000e+00> : vector<8x64xf32>
    %107 = tpu.matmul %103, %106, %cst_53 {dimension_numbers = #tpu.dot_dimension_numbers<[1], [0], [0], [1], [0, 0, 1, 1], [], []>} : vector<8x32xf32>, vector<32x64xf32>, vector<8x64xf32> -> vector<8x64xf32>
    %cst_54 = arith.constant 5.000000e-01 : f32
    %108 = vector.broadcast %cst_54 : f32 to vector<8x64xf32>
    %109 = arith.mulf %108, %107 : vector<8x64xf32>
    %cst_55 = arith.constant 4.471500e-02 : f32
    %110 = vector.broadcast %cst_55 : f32 to vector<8x64xf32>
    %111 = arith.mulf %110, %107 : vector<8x64xf32>
    %112 = arith.mulf %111, %107 : vector<8x64xf32>
    %113 = arith.mulf %112, %107 : vector<8x64xf32>
    %114 = arith.addf %107, %113 : vector<8x64xf32>
    %cst_56 = arith.constant 0.797884583 : f32
    %115 = vector.broadcast %cst_56 : f32 to vector<8x64xf32>
    %116 = arith.mulf %115, %114 : vector<8x64xf32>
    %117 = math.tanh %116 : vector<8x64xf32>
    %cst_57 = arith.constant 1.000000e+00 : f32
    %118 = vector.broadcast %cst_57 : f32 to vector<8x64xf32>
    %119 = arith.addf %118, %117 : vector<8x64xf32>
    %120 = arith.mulf %109, %119 : vector<8x64xf32>
    %121 = arith.mulf %120, %105 : vector<8x64xf32>
    %c0_58 = arith.constant 0 : index
    %c0_59 = arith.constant 0 : index
    %122 = vector.load %arg19[%c0_58, %c0_59] : memref<64x32xf32, #tpu.memory_space<vmem>>, vector<64x32xf32>
    %cst_60 = arith.constant dense<0.000000e+00> : vector<8x32xf32>
    %123 = tpu.matmul %121, %122, %cst_60 {dimension_numbers = #tpu.dot_dimension_numbers<[1], [0], [0], [1], [0, 0, 1, 1], [], []>} : vector<8x64xf32>, vector<64x32xf32>, vector<8x32xf32> -> vector<8x32xf32>
    %124 = arith.addf %103, %123 : vector<8x32xf32>
    %c0_61 = arith.constant 0 : index
    %c0_62 = arith.constant 0 : index
    %125 = vector.load %arg20[%c0_61, %c0_62] : memref<1x32xf32, #tpu.memory_space<vmem>>, vector<1x32xf32>
    %c0_63 = arith.constant 0 : index
    %c0_64 = arith.constant 0 : index
    %126 = vector.load %arg21[%c0_63, %c0_64] : memref<1x32xf32, #tpu.memory_space<vmem>>, vector<1x32xf32>
    %cst_65 = arith.constant dense<0.000000e+00> : vector<8xf32>
    %127 = vector.multi_reduction <add>, %124, %cst_65 [1] : vector<8x32xf32> to vector<8xf32>
    %128 = vector.shape_cast %127 : vector<8xf32> to vector<8x1xf32>
    %cst_66 = arith.constant 3.200000e+01 : f32
    %129 = vector.broadcast %cst_66 : f32 to vector<8x1xf32>
    %130 = arith.divf %128, %129 : vector<8x1xf32>
    %131 = vector.broadcast %130 : vector<8x1xf32> to vector<8x32xf32>
    %132 = arith.subf %124, %131 : vector<8x32xf32>
    %133 = arith.mulf %132, %132 : vector<8x32xf32>
    %cst_67 = arith.constant dense<0.000000e+00> : vector<8xf32>
    %134 = vector.multi_reduction <add>, %133, %cst_67 [1] : vector<8x32xf32> to vector<8xf32>
    %135 = vector.shape_cast %134 : vector<8xf32> to vector<8x1xf32>
    %cst_68 = arith.constant 3.200000e+01 : f32
    %136 = vector.broadcast %cst_68 : f32 to vector<8x1xf32>
    %137 = arith.divf %135, %136 : vector<8x1xf32>
    %138 = vector.broadcast %130 : vector<8x1xf32> to vector<8x32xf32>
    %139 = arith.subf %124, %138 : vector<8x32xf32>
    %cst_69 = arith.constant 9.99999974E-6 : f32
    %140 = vector.broadcast %cst_69 : f32 to vector<8x1xf32>
    %141 = arith.addf %137, %140 : vector<8x1xf32>
    %142 = math.rsqrt %141 : vector<8x1xf32>
    %143 = vector.broadcast %142 : vector<8x1xf32> to vector<8x32xf32>
    %144 = arith.mulf %139, %143 : vector<8x32xf32>
    %145 = vector.broadcast %125 : vector<1x32xf32> to vector<8x32xf32>
    %146 = arith.mulf %144, %145 : vector<8x32xf32>
    %147 = vector.broadcast %126 : vector<1x32xf32> to vector<8x32xf32>
    %148 = arith.addf %146, %147 : vector<8x32xf32>
    %c0_70 = arith.constant 0 : index
    %c0_71 = arith.constant 0 : index
    %149 = vector.load %arg22[%c0_70, %c0_71] : memref<8x32xf32, #tpu.memory_space<vmem>>, vector<8x32xf32>
    tpu.vector_store %arg22[%c0_70, %c0_71], %148 {strides = array<i32>} : memref<8x32xf32, #tpu.memory_space<vmem>>, vector<8x32xf32>,
    return
  }
  func.func @transform_0(%arg0: i32) -> (i32, i32) {
    %c0_i32 = arith.constant 0 : i32
    %c0_i32_0 = arith.constant 0 : i32
    return %arg0, %c0_i32 : i32, i32
  }
  func.func @transform_1(%arg0: i32) -> (i32, i32) {
    %c0_i32 = arith.constant 0 : i32
    %c0_i32_0 = arith.constant 0 : i32
    return %arg0, %c0_i32 : i32, i32
  }
  func.func @transform_2(%arg0: i32) -> (i32, i32) {
    %c0_i32 = arith.constant 0 : i32
    %c0_i32_0 = arith.constant 0 : i32
    return %arg0, %c0_i32 : i32, i32
  }
  func.func @transform_3(%arg0: i32) -> (i32, i32) {
    %c0_i32 = arith.constant 0 : i32
    %c0_i32_0 = arith.constant 0 : i32
    return %arg0, %c0_i32 : i32, i32
  }
  func.func @transform_4(%arg0: i32) -> (i32, i32) {
    %c0_i32 = arith.constant 0 : i32
    %c0_i32_0 = arith.constant 0 : i32
    %c0_i32_1 = arith.constant 0 : i32
    return %c0_i32, %c0_i32_0 : i32, i32
  }
  func.func @transform_5(%arg0: i32) -> (i32, i32) {
    %c0_i32 = arith.constant 0 : i32
    %c0_i32_0 = arith.constant 0 : i32
    %c0_i32_1 = arith.constant 0 : i32
    return %c0_i32, %c0_i32_0 : i32, i32
  }
  func.func @transform_6(%arg0: i32) -> (i32, i32) {
    %c0_i32 = arith.constant 0 : i32
    %c0_i32_0 = arith.constant 0 : i32
    %c0_i32_1 = arith.constant 0 : i32
    return %c0_i32, %c0_i32_0 : i32, i32
  }
  func.func @transform_7(%arg0: i32) -> (i32, i32) {
    %c0_i32 = arith.constant 0 : i32
    %c0_i32_0 = arith.constant 0 : i32
    %c0_i32_1 = arith.constant 0 : i32
    return %c0_i32, %c0_i32_0 : i32, i32
  }
  func.func @transform_8(%arg0: i32) -> (i32, i32) {
    %c0_i32 = arith.constant 0 : i32
    %c0_i32_0 = arith.constant 0 : i32
    %c0_i32_1 = arith.constant 0 : i32
    return %c0_i32, %c0_i32_0 : i32, i32
  }
  func.func @transform_9(%arg0: i32) -> (i32, i32) {
    %c0_i32 = arith.constant 0 : i32
    %c0_i32_0 = arith.constant 0 : i32
    %c0_i32_1 = arith.constant 0 : i32
    return %c0_i32, %c0_i32_0 : i32, i32
  }
  func.func @transform_10(%arg0: i32) -> (i32, i32) {
    %c0_i32 = arith.constant 0 : i32
    %c0_i32_0 = arith.constant 0 : i32
    %c0_i32_1 = arith.constant 0 : i32
    return %c0_i32, %c0_i32_0 : i32, i32
  }
  func.func @transform_11(%arg0: i32) -> (i32, i32) {
    %c0_i32 = arith.constant 0 : i32
    %c0_i32_0 = arith.constant 0 : i32
    %c0_i32_1 = arith.constant 0 : i32
    return %c0_i32, %c0_i32_0 : i32, i32
  }
  func.func @transform_12(%arg0: i32) -> (i32, i32) {
    %c0_i32 = arith.constant 0 : i32
    %c0_i32_0 = arith.constant 0 : i32
    %c0_i32_1 = arith.constant 0 : i32
    return %c0_i32, %c0_i32_0 : i32, i32
  }
  func.func @transform_13(%arg0: i32) -> (i32, i32) {
    %c0_i32 = arith.constant 0 : i32
    %c0_i32_0 = arith.constant 0 : i32
    %c0_i32_1 = arith.constant 0 : i32
    return %c0_i32, %c0_i32_0 : i32, i32
  }
  func.func @transform_14(%arg0: i32) -> (i32, i32) {
    %c0_i32 = arith.constant 0 : i32
    %c0_i32_0 = arith.constant 0 : i32
    %c0_i32_1 = arith.constant 0 : i32
    return %c0_i32, %c0_i32_0 : i32, i32
  }
  func.func @transform_15(%arg0: i32) -> (i32, i32) {
    %c0_i32 = arith.constant 0 : i32
    %c0_i32_0 = arith.constant 0 : i32
    %c0_i32_1 = arith.constant 0 : i32
    return %c0_i32, %c0_i32_0 : i32, i32
  }
  func.func @transform_16(%arg0: i32) -> (i32, i32) {
    %c0_i32 = arith.constant 0 : i32
    %c0_i32_0 = arith.constant 0 : i32
    %c0_i32_1 = arith.constant 0 : i32
    return %c0_i32, %c0_i32_0 : i32, i32
  }
  func.func @transform_17(%arg0: i32) -> (i32, i32) {
    %c0_i32 = arith.constant 0 : i32
    %c0_i32_0 = arith.constant 0 : i32
    %c0_i32_1 = arith.constant 0 : i32
    return %c0_i32, %c0_i32_0 : i32, i32
  }
  func.func @transform_18(%arg0: i32) -> (i32, i32) {
    %c0_i32 = arith.constant 0 : i32
    %c0_i32_0 = arith.constant 0 : i32
    %c0_i32_1 = arith.constant 0 : i32
    return %c0_i32, %c0_i32_0 : i32, i32
  }
  func.func @transform_19(%arg0: i32) -> (i32, i32) {
    %c0_i32 = arith.constant 0 : i32
    %c0_i32_0 = arith.constant 0 : i32
    %c0_i32_1 = arith.constant 0 : i32
    return %c0_i32, %c0_i32_0 : i32, i32
  }
  func.func @transform_20(%arg0: i32) -> (i32, i32) {
    %c0_i32 = arith.constant 0 : i32
    %c0_i32_0 = arith.constant 0 : i32
    %c0_i32_1 = arith.constant 0 : i32
    return %c0_i32, %c0_i32_0 : i32, i32
  }
  func.func @transform_21(%arg0: i32) -> (i32, i32) {
    %c0_i32 = arith.constant 0 : i32
    %c0_i32_0 = arith.constant 0 : i32
    return %arg0, %c0_i32 : i32, i32
  }
}

</mosaic_0001>

<llo_original>
// kernel: edge_update.8
$region0: #{edge_update.8}
  #allocation0 [shape = 'u32[]', space=smem, size = 0x4, offset = 0x4, fixed_abs, tag = 'smem constant byte address 0x4 - core index']
  #allocation1 [shape = 'u32[144,128]{1,0:T(1,128)}', space=vmem, size = 0x12000, scoped, tag = 'internal scratch']
  %s0 = inlined_call_operand.vmem [shape: f32[8,32], index: 0, kind: input, shape index: {}]
  %s1 = inlined_call_operand.vmem [shape: f32[8,1], index: 1, kind: input, shape index: {}]
  %s2 = inlined_call_operand.vmem [shape: f32[1,32], index: 2, kind: input, shape index: {}]
  %s3 = inlined_call_operand.vmem [shape: f32[1,32], index: 3, kind: input, shape index: {}]
  %s4 = inlined_call_operand.vmem [shape: f32[8,32], index: 4, kind: output, shape index: {}]
  %s5 = sld [smem:[#allocation0]]
  $region26: #{edge_update.8} parent=0
    _
  %s7 = ssub.s32 1, %s5
  %s8 = scalar_select 0, %s7, %s5
  // Predicated region
  $region2: #{edge_update.8} parent=0 // pred_check
    _
  $region3: #{edge_update.8} parent=0 // pred_check_branch
    %10 = sbr.rel (0) target = $region5
  $region4: #{edge_update.8} parent=0 // pred_region
    _
  $region5: #{edge_update.8} parent=0 // pred_fallthru
    _
  // Predicated region
  $region6: #{edge_update.8} parent=0 // pred_check
    _
  $region7: #{edge_update.8} parent=0 // pred_check_branch
    %12 = sbr.rel (0) target = $region9
  $region8: #{edge_update.8} parent=0 // pred_region
    _
  $region9: #{edge_update.8} parent=0 // pred_fallthru
    _
  // Predicated region
  $region10: #{edge_update.8} parent=0 // pred_check
    _
  $region11: #{edge_update.8} parent=0 // pred_check_branch
    %14 = sbr.rel (0) target = $region13
  $region12: #{edge_update.8} parent=0 // pred_region
    _
  $region13: #{edge_update.8} parent=0 // pred_fallthru
    _
  // Predicated region
  $region14: #{edge_update.8} parent=0 // pred_check
    _
  $region15: #{edge_update.8} parent=0 // pred_check_branch
    %16 = sbr.rel (0) target = $region17
  $region16: #{edge_update.8} parent=0 // pred_region
    _
  $region17: #{edge_update.8} parent=0 // pred_fallthru
    _
  %v17 = vld [vmem:[%s0] sm:$0xff]
  %v18 = vld [vmem:[%s1] sm:$0xff]
  %v19 = vmax.f32 %v18, 1.0
  %21 = vset.pattern.permute.xlu0 0
  %22 = vperm.xlu0 %21, %v19
  %v23 = vpop.permute.xlu0 %22
  %v25 = vrcp.pop %v23
  %v26 = vmul.f32 %v17, %v25
  %v27 = vld [vmem:[%s2] sm:$0x1]
  %v28 = vld [vmem:[%s3] sm:$0x1]
  %vm29 = vcmask 261120
  %v30 = vsel %vm29, %v26, 0.0
  %31 = vadd.xlane.f32.xlu0 %v30
  %v32 = vpop.xlane.xlu0 %31
  %v33 = vrcp.pop 32.0
  %v34 = vmul.f32 %v32, %v33
  %v35 = vsub.f32 %v26, %v34
  %v36 = vmul.f32 %v35, %v35
  %v37 = vsel %vm29, %v36, 0.0
  %38 = vadd.xlane.f32.xlu0 %v37
  %v39 = vpop.xlane.xlu0 %38
  %v40 = vmul.f32 %v39, %v33
  %v41 = vadd.f32 %v40, 1e-05
  %v42 = vrsqrt.pop %v41
  %v43 = vmul.f32 %v35, %v42
  %v45 = vlaneseq
  %v46 = vshrl.u32 %v45, 7
  %v47 = vsub.s32 0, %v46
  %v48 = vrot.slane %v27, %v47
  %v50 = vmul.f32 %v43, %v48
  %v52 = vlaneseq
  %v53 = vshrl.u32 %v52, 7
  %v54 = vsub.s32 0, %v53
  %v55 = vrot.slane %v28, %v54
  %v57 = vadd.f32 %v50, %v55
  %58 = vst.msk [vmem:[%s4] sm:$0xff] %vm29, %v57
  // Predicated region
  $region18: #{edge_update.8} parent=0 // pred_check
    _
  $region19: #{edge_update.8} parent=0 // pred_check_branch
    %60 = sbr.rel (0) target = $region21
  $region20: #{edge_update.8} parent=0 // pred_region
    _
  $region21: #{edge_update.8} parent=0 // pred_fallthru
    _
  // Predicated region
  $region22: #{edge_update.8} parent=0 // pred_check
    _
  $region23: #{edge_update.8} parent=0 // pred_check_branch
    %62 = sbr.rel (0) target = $region25
  $region24: #{edge_update.8} parent=0 // pred_region
    _
  $region25: #{edge_update.8} parent=0 // pred_fallthru
    _

// kernel: edge_update.6
$region0: #{edge_update.6}
  #allocation0 [shape = 'u32[]', space=smem, size = 0x4, offset = 0x4, fixed_abs, tag = 'smem constant byte address 0x4 - core index']
  #allocation1 [shape = 'u32[144,128]{1,0:T(1,128)}', space=vmem, size = 0x12000, scoped, tag = 'internal scratch']
  %s0 = inlined_call_operand.vmem [shape: f32[8,32], index: 0, kind: input, shape index: {}]
  %s1 = inlined_call_operand.vmem [shape: f32[8,32], index: 1, kind: input, shape index: {}]
  %s2 = inlined_call_operand.vmem [shape: f32[32,32], index: 2, kind: input, shape index: {}]
  %s3 = inlined_call_operand.vmem [shape: f32[32,32], index: 3, kind: input, shape index: {}]
  %s4 = inlined_call_operand.vmem [shape: f32[1,32], index: 4, kind: input, shape index: {}]
  %s5 = inlined_call_operand.vmem [shape: f32[1,32], index: 5, kind: input, shape index: {}]
  %s6 = inlined_call_operand.vmem [shape: f32[1,32], index: 6, kind: input, shape index: {}]
  %s7 = inlined_call_operand.vmem [shape: f32[8,32], index: 7, kind: output, shape index: {}]
  %s8 = sld [smem:[#allocation0]]
  $region38: #{edge_update.6} parent=0
    _
  %s10 = ssub.s32 1, %s8
  %s11 = scalar_select 0, %s10, %s8
  // Predicated region
  $region2: #{edge_update.6} parent=0 // pred_check
    _
  $region3: #{edge_update.6} parent=0 // pred_check_branch
    %13 = sbr.rel (0) target = $region5
  $region4: #{edge_update.6} parent=0 // pred_region
    _
  $region5: #{edge_update.6} parent=0 // pred_fallthru
    _
  // Predicated region
  $region6: #{edge_update.6} parent=0 // pred_check
    _
  $region7: #{edge_update.6} parent=0 // pred_check_branch
    %15 = sbr.rel (0) target = $region9
  $region8: #{edge_update.6} parent=0 // pred_region
    _
  $region9: #{edge_update.6} parent=0 // pred_fallthru
    _
  // Predicated region
  $region10: #{edge_update.6} parent=0 // pred_check
    _
  $region11: #{edge_update.6} parent=0 // pred_check_branch
    %17 = sbr.rel (0) target = $region13
  $region12: #{edge_update.6} parent=0 // pred_region
    _
  $region13: #{edge_update.6} parent=0 // pred_fallthru
    _
  // Predicated region
  $region14: #{edge_update.6} parent=0 // pred_check
    _
  $region15: #{edge_update.6} parent=0 // pred_check_branch
    %19 = sbr.rel (0) target = $region17
  $region16: #{edge_update.6} parent=0 // pred_region
    _
  $region17: #{edge_update.6} parent=0 // pred_fallthru
    _
  // Predicated region
  $region18: #{edge_update.6} parent=0 // pred_check
    _
  $region19: #{edge_update.6} parent=0 // pred_check_branch
    %21 = sbr.rel (0) target = $region21
  $region20: #{edge_update.6} parent=0 // pred_region
    _
  $region21: #{edge_update.6} parent=0 // pred_fallthru
    _
  // Predicated region
  $region22: #{edge_update.6} parent=0 // pred_check
    _
  $region23: #{edge_update.6} parent=0 // pred_check_branch
    %23 = sbr.rel (0) target = $region25
  $region24: #{edge_update.6} parent=0 // pred_region
    _
  $region25: #{edge_update.6} parent=0 // pred_fallthru
    _
  // Predicated region
  $region26: #{edge_update.6} parent=0 // pred_check
    _
  $region27: #{edge_update.6} parent=0 // pred_check_branch
    %25 = sbr.rel (0) target = $region29
  $region28: #{edge_update.6} parent=0 // pred_region
    _
  $region29: #{edge_update.6} parent=0 // pred_fallthru
    _
  %v26 = vld [vmem:[%s0] sm:$0xff]
  %v27 = vld [vmem:[%s2] sm:$0xff]
  %v28 = vld [vmem:[%s2 + $0x8] sm:$0xff]
  %v29 = vld [vmem:[%s2 + $0x10] sm:$0xff]
  %v30 = vld [vmem:[%s2 + $0x18] sm:$0xff]
  %v31 = vld [vmem:[%s1] sm:$0xff]
  %v32 = vld [vmem:[%s3] sm:$0xff]
  %v33 = vld [vmem:[%s3 + $0x8] sm:$0xff]
  %v34 = vld [vmem:[%s3 + $0x10] sm:$0xff]
  %v35 = vld [vmem:[%s3 + $0x18] sm:$0xff]
  %vm36 = vcmask 261120
  %v38 = vsel %vm36, %v31, 0
  %40 = vmatprep.subr.mxu0 0.0
  %41 = vmatpush1.msra.mxu0 0.0
  %42 = vmatprep.subr.mxu0 0.0
  %43 = vmatpush1.msra.mxu0 0.0
  %44 = vmatprep.subr.mxu0 0.0
  %45 = vmatpush1.msra.mxu0 0.0
  %46 = vmatprep.subr.mxu0 0.0
  %47 = vmatpush1.msra.mxu0 0.0
  %48 = vmatprep.subr.mxu0 0.0
  %49 = vmatpush1.msra.mxu0 0.0
  %50 = vmatprep.subr.mxu0 0.0
  %51 = vmatpush1.msra.mxu0 0.0
  %52 = vmatprep.subr.mxu0 0.0
  %53 = vmatpush1.msra.mxu0 0.0
  %54 = vmatprep.subr.mxu0 0.0
  %55 = vmatpush1.msra.mxu0 0.0
  %56 = vmatprep.subr.mxu0 0.0
  %57 = vmatpush1.msra.mxu0 0.0
  %58 = vmatprep.subr.mxu0 0.0
  %59 = vmatpush1.msra.mxu0 0.0
  %60 = vmatprep.subr.mxu0 0.0
  %61 = vmatpush1.msra.mxu0 0.0
  %62 = vmatprep.subr.mxu0 0.0
  %63 = vmatpush1.msra.mxu0 0.0
  %64 = vmatprep.subr.mxu0 0.0
  %65 = vmatpush1.msra.mxu0 %v35
  %66 = vmatprep.subr.mxu0 0.0
  %67 = vmatpush1.msra.mxu0 %v34
  %68 = vmatprep.subr.mxu0 0.0
  %69 = vmatpush1.msra.mxu0 %v33
  %70 = vmatprep.subr.mxu0 0.0
  %71 = vmatpush1.msra.mxu0 %v32
  %72 = vmatprep.subr.mxu0 0.0
  %73 = vmatpush2.msra.mxu0 0.0
  %74 = vmatprep.subr.mxu0 0.0
  %75 = vmatpush2.msra.mxu0 0.0
  %76 = vmatprep.subr.mxu0 0.0
  %77 = vmatpush2.msra.mxu0 0.0
  %78 = vmatprep.subr.mxu0 0.0
  %79 = vmatpush2.msra.mxu0 0.0
  %80 = vmatprep.subr.mxu0 0.0
  %81 = vmatpush2.msra.mxu0 0.0
  %82 = vmatprep.subr.mxu0 0.0
  %83 = vmatpush2.msra.mxu0 0.0
  %84 = vmatprep.subr.mxu0 0.0
  %85 = vmatpush2.msra.mxu0 0.0
  %86 = vmatprep.subr.mxu0 0.0
  %87 = vmatpush2.msra.mxu0 0.0
  %88 = vmatprep.subr.mxu0 0.0
  %89 = vmatpush2.msra.mxu0 0.0
  %90 = vmatprep.subr.mxu0 0.0
  %91 = vmatpush2.msra.mxu0 0.0
  %92 = vmatprep.subr.mxu0 0.0
  %93 = vmatpush2.msra.mxu0 0.0
  %94 = vmatprep.subr.mxu0 0.0
  %95 = vmatpush2.msra.mxu0 0.0
  %96 = vmatprep.subr.mxu0 0.0
  %97 = vmatpush2.msra.mxu0 0.0
  %98 = vmatprep.subr.mxu0 0.0
  %99 = vmatpush2.msra.mxu0 0.0
  %100 = vmatprep.subr.mxu0 0.0
  %101 = vmatpush2.msra.mxu0 0.0
  %102 = vmatprep.subr.mxu0 0.0
  %103 = vmatpush2.msra.mxu0 0.0
  %104 = vmatprep.mubr.f32.mxu0 0.0
  %105 = vmatmul.mubr.f32.gmra.mxu0 %v38
  %v106 = vpop.f32.mrf.mxu0
  %v107 = vadd.f32 0.0, %v106
  %v108 = vpop.f32.mrf.mxu0
  %109 = vdwg.mxu0
  %v111 = vsel %vm36, %v26, 0
  %113 = vmatprep.subr.mxu0 0.0
  %114 = vmatpush1.msra.mxu0 0.0
  %115 = vmatprep.subr.mxu0 0.0
  %116 = vmatpush1.msra.mxu0 0.0
  %117 = vmatprep.subr.mxu0 0.0
  %118 = vmatpush1.msra.mxu0 0.0
  %119 = vmatprep.subr.mxu0 0.0
  %120 = vmatpush1.msra.mxu0 0.0
  %121 = vmatprep.subr.mxu0 0.0
  %122 = vmatpush1.msra.mxu0 0.0
  %123 = vmatprep.subr.mxu0 0.0
  %124 = vmatpush1.msra.mxu0 0.0
  %125 = vmatprep.subr.mxu0 0.0
  %126 = vmatpush1.msra.mxu0 0.0
  %127 = vmatprep.subr.mxu0 0.0
  %128 = vmatpush1.msra.mxu0 0.0
  %129 = vmatprep.subr.mxu0 0.0
  %130 = vmatpush1.msra.mxu0 0.0
  %131 = vmatprep.subr.mxu0 0.0
  %132 = vmatpush1.msra.mxu0 0.0
  %133 = vmatprep.subr.mxu0 0.0
  %134 = vmatpush1.msra.mxu0 0.0
  %135 = vmatprep.subr.mxu0 0.0
  %136 = vmatpush1.msra.mxu0 0.0
  %137 = vmatprep.subr.mxu0 0.0
  %138 = vmatpush1.msra.mxu0 %v30
  %139 = vmatprep.subr.mxu0 0.0
  %140 = vmatpush1.msra.mxu0 %v29
  %141 = vmatprep.subr.mxu0 0.0
  %142 = vmatpush1.msra.mxu0 %v28
  %143 = vmatprep.subr.mxu0 0.0
  %144 = vmatpush1.msra.mxu0 %v27
  %145 = vmatprep.subr.mxu0 0.0
  %146 = vmatpush2.msra.mxu0 0.0
  %147 = vmatprep.subr.mxu0 0.0
  %148 = vmatpush2.msra.mxu0 0.0
  %149 = vmatprep.subr.mxu0 0.0
  %150 = vmatpush2.msra.mxu0 0.0
  %151 = vmatprep.subr.mxu0 0.0
  %152 = vmatpush2.msra.mxu0 0.0
  %153 = vmatprep.subr.mxu0 0.0
  %154 = vmatpush2.msra.mxu0 0.0
  %155 = vmatprep.subr.mxu0 0.0
  %156 = vmatpush2.msra.mxu0 0.0
  %157 = vmatprep.subr.mxu0 0.0
  %158 = vmatpush2.msra.mxu0 0.0
  %159 = vmatprep.subr.mxu0 0.0
  %160 = vmatpush2.msra.mxu0 0.0
  %161 = vmatprep.subr.mxu0 0.0
  %162 = vmatpush2.msra.mxu0 0.0
  %163 = vmatprep.subr.mxu0 0.0
  %164 = vmatpush2.msra.mxu0 0.0
  %165 = vmatprep.subr.mxu0 0.0
  %166 = vmatpush2.msra.mxu0 0.0
  %167 = vmatprep.subr.mxu0 0.0
  %168 = vmatpush2.msra.mxu0 0.0
  %169 = vmatprep.subr.mxu0 0.0
  %170 = vmatpush2.msra.mxu0 0.0
  %171 = vmatprep.subr.mxu0 0.0
  %172 = vmatpush2.msra.mxu0 0.0
  %173 = vmatprep.subr.mxu0 0.0
  %174 = vmatpush2.msra.mxu0 0.0
  %175 = vmatprep.subr.mxu0 0.0
  %176 = vmatpush2.msra.mxu0 0.0
  %177 = vmatprep.mubr.f32.mxu0 0.0
  %178 = vmatmul.mubr.f32.gmra.mxu0 %v111
  %v179 = vpop.f32.mrf.mxu0
  %v180 = vadd.f32 %v107, %v179
  %v181 = vpop.f32.mrf.mxu0
  %182 = vdwg.mxu0
  %v183 = vld [vmem:[%s4] sm:$0x1]
  %v185 = vlaneseq
  %v186 = vshrl.u32 %v185, 7
  %v187 = vsub.s32 0, %v186
  %v188 = vrot.slane %v183, %v187
  %v190 = vadd.f32 %v180, %v188
  %v191 = vmul.f32 %v190, 0.5
  %v192 = vmul.f32 %v190, 0.044715
  %v193 = vmul.f32 %v192, %v190
  %v194 = vmul.f32 %v193, %v190
  %v195 = vadd.f32 %v190, %v194
  %v196 = vmul.f32 %v195, 0.7978846
  %v197 = vtanh.pop %v196
  %v198 = vadd.f32 %v197, 1.0
  %v199 = vmul.f32 %v191, %v198
  %v200 = vld [vmem:[%s5] sm:$0x1]
  %v201 = vld [vmem:[%s6] sm:$0x1]
  %v202 = vsel %vm36, %v199, 0.0
  %203 = vadd.xlane.f32.xlu0 %v202
  %v204 = vpop.xlane.xlu0 %203
  %v205 = vrcp.pop 32.0
  %v206 = vmul.f32 %v204, %v205
  %v207 = vsub.f32 %v199, %v206
  %v208 = vmul.f32 %v207, %v207
  %v209 = vsel %vm36, %v208, 0.0
  %210 = vadd.xlane.f32.xlu0 %v209
  %v211 = vpop.xlane.xlu0 %210
  %v212 = vmul.f32 %v211, %v205
  %v213 = vadd.f32 %v212, 1e-05
  %v214 = vrsqrt.pop %v213
  %v215 = vmul.f32 %v207, %v214
  %v217 = vlaneseq
  %v218 = vshrl.u32 %v217, 7
  %v219 = vsub.s32 0, %v218
  %v220 = vrot.slane %v200, %v219
  %v222 = vmul.f32 %v215, %v220
  %v224 = vlaneseq
  %v225 = vshrl.u32 %v224, 7
  %v226 = vsub.s32 0, %v225
  %v227 = vrot.slane %v201, %v226
  %v229 = vadd.f32 %v222, %v227
  %230 = vst.msk [vmem:[%s7] sm:$0xff] %vm36, %v229
  // Predicated region
  $region30: #{edge_update.6} parent=0 // pred_check
    _
  $region31: #{edge_update.6} parent=0 // pred_check_branch
    %232 = sbr.rel (0) target = $region33
  $region32: #{edge_update.6} parent=0 // pred_region
    _
  $region33: #{edge_update.6} parent=0 // pred_fallthru
    _
  // Predicated region
  $region34: #{edge_update.6} parent=0 // pred_check
    _
  $region35: #{edge_update.6} parent=0 // pred_check_branch
    %234 = sbr.rel (0) target = $region37
  $region36: #{edge_update.6} parent=0 // pred_region
    _
  $region37: #{edge_update.6} parent=0 // pred_fallthru
    _

// kernel: edge_update.7
$region0: #{edge_update.7}
  #allocation0 [shape = 'u32[]', space=smem, size = 0x4, offset = 0x4, fixed_abs, tag = 'smem constant byte address 0x4 - core index']
  #allocation1 [shape = 'u32[144,128]{1,0:T(1,128)}', space=vmem, size = 0x12000, scoped, tag = 'internal scratch']
  %s0 = inlined_call_operand.vmem [shape: f32[10,32], index: 0, kind: input, shape index: {}]
  %s1 = inlined_call_operand.vmem [shape: f32[10,32], index: 1, kind: input, shape index: {}]
  %s2 = inlined_call_operand.vmem [shape: f32[10,32], index: 2, kind: input, shape index: {}]
  %s3 = inlined_call_operand.vmem [shape: f32[32,32], index: 3, kind: input, shape index: {}]
  %s4 = inlined_call_operand.vmem [shape: f32[32,32], index: 4, kind: input, shape index: {}]
  %s5 = inlined_call_operand.vmem [shape: f32[32,32], index: 5, kind: input, shape index: {}]
  %s6 = inlined_call_operand.vmem [shape: f32[1,32], index: 6, kind: input, shape index: {}]
  %s7 = inlined_call_operand.vmem [shape: f32[10,32], index: 7, kind: output, shape index: {}]
  %s8 = sld [smem:[#allocation0]]
  $region38: #{edge_update.7} parent=0
    _
  %s10 = ssub.s32 1, %s8
  %s11 = scalar_select 0, %s10, %s8
  // Predicated region
  $region2: #{edge_update.7} parent=0 // pred_check
    _
  $region3: #{edge_update.7} parent=0 // pred_check_branch
    %13 = sbr.rel (0) target = $region5
  $region4: #{edge_update.7} parent=0 // pred_region
    _
  $region5: #{edge_update.7} parent=0 // pred_fallthru
    _
  // Predicated region
  $region6: #{edge_update.7} parent=0 // pred_check
    _
  $region7: #{edge_update.7} parent=0 // pred_check_branch
    %15 = sbr.rel (0) target = $region9
  $region8: #{edge_update.7} parent=0 // pred_region
    _
  $region9: #{edge_update.7} parent=0 // pred_fallthru
    _
  // Predicated region
  $region10: #{edge_update.7} parent=0 // pred_check
    _
  $region11: #{edge_update.7} parent=0 // pred_check_branch
    %17 = sbr.rel (0) target = $region13
  $region12: #{edge_update.7} parent=0 // pred_region
    _
  $region13: #{edge_update.7} parent=0 // pred_fallthru
    _
  // Predicated region
  $region14: #{edge_update.7} parent=0 // pred_check
    _
  $region15: #{edge_update.7} parent=0 // pred_check_branch
    %19 = sbr.rel (0) target = $region17
  $region16: #{edge_update.7} parent=0 // pred_region
    _
  $region17: #{edge_update.7} parent=0 // pred_fallthru
    _
  // Predicated region
  $region18: #{edge_update.7} parent=0 // pred_check
    _
  $region19: #{edge_update.7} parent=0 // pred_check_branch
    %21 = sbr.rel (0) target = $region21
  $region20: #{edge_update.7} parent=0 // pred_region
    _
  $region21: #{edge_update.7} parent=0 // pred_fallthru
    _
  // Predicated region
  $region22: #{edge_update.7} parent=0 // pred_check
    _
  $region23: #{edge_update.7} parent=0 // pred_check_branch
    %23 = sbr.rel (0) target = $region25
  $region24: #{edge_update.7} parent=0 // pred_region
    _
  $region25: #{edge_update.7} parent=0 // pred_fallthru
    _
  // Predicated region
  $region26: #{edge_update.7} parent=0 // pred_check
    _
  $region27: #{edge_update.7} parent=0 // pred_check_branch
    %25 = sbr.rel (0) target = $region29
  $region28: #{edge_update.7} parent=0 // pred_region
    _
  $region29: #{edge_update.7} parent=0 // pred_fallthru
    _
  %v26 = vld [vmem:[%s0] sm:$0xff]
  %v27 = vld [vmem:[%s0 + $0x8] sm:$0x3]
  %v28 = vld [vmem:[%s3] sm:$0xff]
  %v29 = vld [vmem:[%s3 + $0x8] sm:$0xff]
  %v30 = vld [vmem:[%s3 + $0x10] sm:$0xff]
  %v31 = vld [vmem:[%s3 + $0x18] sm:$0xff]
  %v32 = vld [vmem:[%s1] sm:$0xff]
  %v33 = vld [vmem:[%s1 + $0x8] sm:$0x3]
  %v34 = vld [vmem:[%s4] sm:$0xff]
  %v35 = vld [vmem:[%s4 + $0x8] sm:$0xff]
  %v36 = vld [vmem:[%s4 + $0x10] sm:$0xff]
  %v37 = vld [vmem:[%s4 + $0x18] sm:$0xff]
  %vm38 = vcmask 261120
  %v40 = vsel %vm38, %v32, 0
  %v43 = vsel %vm38, %v33, 0
  %45 = vmatprep.subr.mxu0 0.0
  %46 = vmatpush1.msra.mxu0 0.0
  %47 = vmatprep.subr.mxu0 0.0
  %48 = vmatpush1.msra.mxu0 0.0
  %49 = vmatprep.subr.mxu0 0.0
  %50 = vmatpush1.msra.mxu0 0.0
  %51 = vmatprep.subr.mxu0 0.0
  %52 = vmatpush1.msra.mxu0 0.0
  %53 = vmatprep.subr.mxu0 0.0
  %54 = vmatpush1.msra.mxu0 0.0
  %55 = vmatprep.subr.mxu0 0.0
  %56 = vmatpush1.msra.mxu0 0.0
  %57 = vmatprep.subr.mxu0 0.0
  %58 = vmatpush1.msra.mxu0 0.0
  %59 = vmatprep.subr.mxu0 0.0
  %60 = vmatpush1.msra.mxu0 0.0
  %61 = vmatprep.subr.mxu0 0.0
  %62 = vmatpush1.msra.mxu0 0.0
  %63 = vmatprep.subr.mxu0 0.0
  %64 = vmatpush1.msra.mxu0 0.0
  %65 = vmatprep.subr.mxu0 0.0
  %66 = vmatpush1.msra.mxu0 0.0
  %67 = vmatprep.subr.mxu0 0.0
  %68 = vmatpush1.msra.mxu0 0.0
  %69 = vmatprep.subr.mxu0 0.0
  %70 = vmatpush1.msra.mxu0 %v37
  %71 = vmatprep.subr.mxu0 0.0
  %72 = vmatpush1.msra.mxu0 %v36
  %73 = vmatprep.subr.mxu0 0.0
  %74 = vmatpush1.msra.mxu0 %v35
  %75 = vmatprep.subr.mxu0 0.0
  %76 = vmatpush1.msra.mxu0 %v34
  %77 = vmatprep.subr.mxu0 0.0
  %78 = vmatpush2.msra.mxu0 0.0
  %79 = vmatprep.subr.mxu0 0.0
  %80 = vmatpush2.msra.mxu0 0.0
  %81 = vmatprep.subr.mxu0 0.0
  %82 = vmatpush2.msra.mxu0 0.0
  %83 = vmatprep.subr.mxu0 0.0
  %84 = vmatpush2.msra.mxu0 0.0
  %85 = vmatprep.subr.mxu0 0.0
  %86 = vmatpush2.msra.mxu0 0.0
  %87 = vmatprep.subr.mxu0 0.0
  %88 = vmatpush2.msra.mxu0 0.0
  %89 = vmatprep.subr.mxu0 0.0
  %90 = vmatpush2.msra.mxu0 0.0
  %91 = vmatprep.subr.mxu0 0.0
  %92 = vmatpush2.msra.mxu0 0.0
  %93 = vmatprep.subr.mxu0 0.0
  %94 = vmatpush2.msra.mxu0 0.0
  %95 = vmatprep.subr.mxu0 0.0
  %96 = vmatpush2.msra.mxu0 0.0
  %97 = vmatprep.subr.mxu0 0.0
  %98 = vmatpush2.msra.mxu0 0.0
  %99 = vmatprep.subr.mxu0 0.0
  %100 = vmatpush2.msra.mxu0 0.0
  %101 = vmatprep.subr.mxu0 0.0
  %102 = vmatpush2.msra.mxu0 0.0
  %103 = vmatprep.subr.mxu0 0.0
  %104 = vmatpush2.msra.mxu0 0.0
  %105 = vmatprep.subr.mxu0 0.0
  %106 = vmatpush2.msra.mxu0 0.0
  %107 = vmatprep.subr.mxu0 0.0
  %108 = vmatpush2.msra.mxu0 0.0
  %109 = vmatprep.mubr.f32.mxu0 0.0
  %110 = vmatmul.mubr.f32.gmra.mxu0 %v40
  %v111 = vpop.f32.mrf.mxu0
  %v112 = vadd.f32 0.0, %v111
  %v113 = vpop.f32.mrf.mxu0
  %114 = vmatprep.mubr.f32.mxu0 0.0
  %115 = vmatmul.mubr.f32.gmra.mxu0 %v43
  %v116 = vpop.f32.mrf.mxu0
  %v117 = vadd.f32 0.0, %v116
  %v118 = vpop.f32.mrf.mxu0
  %119 = vdwg.mxu0
  %v121 = vsel %vm38, %v26, 0
  %v124 = vsel %vm38, %v27, 0
  %126 = vmatprep.subr.mxu0 0.0
  %127 = vmatpush1.msra.mxu0 0.0
  %128 = vmatprep.subr.mxu0 0.0
  %129 = vmatpush1.msra.mxu0 0.0
  %130 = vmatprep.subr.mxu0 0.0
  %131 = vmatpush1.msra.mxu0 0.0
  %132 = vmatprep.subr.mxu0 0.0
  %133 = vmatpush1.msra.mxu0 0.0
  %134 = vmatprep.subr.mxu0 0.0
  %135 = vmatpush1.msra.mxu0 0.0
  %136 = vmatprep.subr.mxu0 0.0
  %137 = vmatpush1.msra.mxu0 0.0
  %138 = vmatprep.subr.mxu0 0.0
  %139 = vmatpush1.msra.mxu0 0.0
  %140 = vmatprep.subr.mxu0 0.0
  %141 = vmatpush1.msra.mxu0 0.0
  %142 = vmatprep.subr.mxu0 0.0
  %143 = vmatpush1.msra.mxu0 0.0
  %144 = vmatprep.subr.mxu0 0.0
  %145 = vmatpush1.msra.mxu0 0.0
  %146 = vmatprep.subr.mxu0 0.0
  %147 = vmatpush1.msra.mxu0 0.0
  %148 = vmatprep.subr.mxu0 0.0
  %149 = vmatpush1.msra.mxu0 0.0
  %150 = vmatprep.subr.mxu0 0.0
  %151 = vmatpush1.msra.mxu0 %v31
  %152 = vmatprep.subr.mxu0 0.0
  %153 = vmatpush1.msra.mxu0 %v30
  %154 = vmatprep.subr.mxu0 0.0
  %155 = vmatpush1.msra.mxu0 %v29
  %156 = vmatprep.subr.mxu0 0.0
  %157 = vmatpush1.msra.mxu0 %v28
  %158 = vmatprep.subr.mxu0 0.0
  %159 = vmatpush2.msra.mxu0 0.0
  %160 = vmatprep.subr.mxu0 0.0
  %161 = vmatpush2.msra.mxu0 0.0
  %162 = vmatprep.subr.mxu0 0.0
  %163 = vmatpush2.msra.mxu0 0.0
  %164 = vmatprep.subr.mxu0 0.0
  %165 = vmatpush2.msra.mxu0 0.0
  %166 = vmatprep.subr.mxu0 0.0
  %167 = vmatpush2.msra.mxu0 0.0
  %168 = vmatprep.subr.mxu0 0.0
  %169 = vmatpush2.msra.mxu0 0.0
  %170 = vmatprep.subr.mxu0 0.0
  %171 = vmatpush2.msra.mxu0 0.0
  %172 = vmatprep.subr.mxu0 0.0
  %173 = vmatpush2.msra.mxu0 0.0
  %174 = vmatprep.subr.mxu0 0.0
  %175 = vmatpush2.msra.mxu0 0.0
  %176 = vmatprep.subr.mxu0 0.0
  %177 = vmatpush2.msra.mxu0 0.0
  %178 = vmatprep.subr.mxu0 0.0
  %179 = vmatpush2.msra.mxu0 0.0
  %180 = vmatprep.subr.mxu0 0.0
  %181 = vmatpush2.msra.mxu0 0.0
  %182 = vmatprep.subr.mxu0 0.0
  %183 = vmatpush2.msra.mxu0 0.0
  %184 = vmatprep.subr.mxu0 0.0
  %185 = vmatpush2.msra.mxu0 0.0
  %186 = vmatprep.subr.mxu0 0.0
  %187 = vmatpush2.msra.mxu0 0.0
  %188 = vmatprep.subr.mxu0 0.0
  %189 = vmatpush2.msra.mxu0 0.0
  %190 = vmatprep.mubr.f32.mxu0 0.0
  %191 = vmatmul.mubr.f32.gmra.mxu0 %v121
  %v192 = vpop.f32.mrf.mxu0
  %v193 = vadd.f32 %v112, %v192
  %v194 = vpop.f32.mrf.mxu0
  %195 = vmatprep.mubr.f32.mxu0 0.0
  %196 = vmatmul.mubr.f32.gmra.mxu0 %v124
  %v197 = vpop.f32.mrf.mxu0
  %v198 = vadd.f32 %v117, %v197
  %v199 = vpop.f32.mrf.mxu0
  %200 = vdwg.mxu0
  %v201 = vld [vmem:[%s2] sm:$0xff]
  %v202 = vld [vmem:[%s2 + $0x8] sm:$0x3]
  %v203 = vld [vmem:[%s5] sm:$0xff]
  %v204 = vld [vmem:[%s5 + $0x8] sm:$0xff]
  %v205 = vld [vmem:[%s5 + $0x10] sm:$0xff]
  %v206 = vld [vmem:[%s5 + $0x18] sm:$0xff]
  %v208 = vsel %vm38, %v201, 0
  %v211 = vsel %vm38, %v202, 0
  %213 = vmatprep.subr.mxu0 0.0
  %214 = vmatpush1.msra.mxu0 0.0
  %215 = vmatprep.subr.mxu0 0.0
  %216 = vmatpush1.msra.mxu0 0.0
  %217 = vmatprep.subr.mxu0 0.0
  %218 = vmatpush1.msra.mxu0 0.0
  %219 = vmatprep.subr.mxu0 0.0
  %220 = vmatpush1.msra.mxu0 0.0
  %221 = vmatprep.subr.mxu0 0.0
  %222 = vmatpush1.msra.mxu0 0.0
  %223 = vmatprep.subr.mxu0 0.0
  %224 = vmatpush1.msra.mxu0 0.0
  %225 = vmatprep.subr.mxu0 0.0
  %226 = vmatpush1.msra.mxu0 0.0
  %227 = vmatprep.subr.mxu0 0.0
  %228 = vmatpush1.msra.mxu0 0.0
  %229 = vmatprep.subr.mxu0 0.0
  %230 = vmatpush1.msra.mxu0 0.0
  %231 = vmatprep.subr.mxu0 0.0
  %232 = vmatpush1.msra.mxu0 0.0
  %233 = vmatprep.subr.mxu0 0.0
  %234 = vmatpush1.msra.mxu0 0.0
  %235 = vmatprep.subr.mxu0 0.0
  %236 = vmatpush1.msra.mxu0 0.0
  %237 = vmatprep.subr.mxu0 0.0
  %238 = vmatpush1.msra.mxu0 %v206
  %239 = vmatprep.subr.mxu0 0.0
  %240 = vmatpush1.msra.mxu0 %v205
  %241 = vmatprep.subr.mxu0 0.0
  %242 = vmatpush1.msra.mxu0 %v204
  %243 = vmatprep.subr.mxu0 0.0
  %244 = vmatpush1.msra.mxu0 %v203
  %245 = vmatprep.subr.mxu0 0.0
  %246 = vmatpush2.msra.mxu0 0.0
  %247 = vmatprep.subr.mxu0 0.0
  %248 = vmatpush2.msra.mxu0 0.0
  %249 = vmatprep.subr.mxu0 0.0
  %250 = vmatpush2.msra.mxu0 0.0
  %251 = vmatprep.subr.mxu0 0.0
  %252 = vmatpush2.msra.mxu0 0.0
  %253 = vmatprep.subr.mxu0 0.0
  %254 = vmatpush2.msra.mxu0 0.0
  %255 = vmatprep.subr.mxu0 0.0
  %256 = vmatpush2.msra.mxu0 0.0
  %257 = vmatprep.subr.mxu0 0.0
  %258 = vmatpush2.msra.mxu0 0.0
  %259 = vmatprep.subr.mxu0 0.0
  %260 = vmatpush2.msra.mxu0 0.0
  %261 = vmatprep.subr.mxu0 0.0
  %262 = vmatpush2.msra.mxu0 0.0
  %263 = vmatprep.subr.mxu0 0.0
  %264 = vmatpush2.msra.mxu0 0.0
  %265 = vmatprep.subr.mxu0 0.0
  %266 = vmatpush2.msra.mxu0 0.0
  %267 = vmatprep.subr.mxu0 0.0
  %268 = vmatpush2.msra.mxu0 0.0
  %269 = vmatprep.subr.mxu0 0.0
  %270 = vmatpush2.msra.mxu0 0.0
  %271 = vmatprep.subr.mxu0 0.0
  %272 = vmatpush2.msra.mxu0 0.0
  %273 = vmatprep.subr.mxu0 0.0
  %274 = vmatpush2.msra.mxu0 0.0
  %275 = vmatprep.subr.mxu0 0.0
  %276 = vmatpush2.msra.mxu0 0.0
  %277 = vmatprep.mubr.f32.mxu0 0.0
  %278 = vmatmul.mubr.f32.gmra.mxu0 %v208
  %v279 = vpop.f32.mrf.mxu0
  %v280 = vadd.f32 0.0, %v279
  %v281 = vpop.f32.mrf.mxu0
  %282 = vmatprep.mubr.f32.mxu0 0.0
  %283 = vmatmul.mubr.f32.gmra.mxu0 %v211
  %v284 = vpop.f32.mrf.mxu0
  %v285 = vadd.f32 0.0, %v284
  %v286 = vpop.f32.mrf.mxu0
  %287 = vdwg.mxu0
  %v288 = vadd.f32 %v193, %v280
  %v289 = vadd.f32 %v198, %v285
  %v290 = vld [vmem:[%s6] sm:$0x1]
  %v292 = vlaneseq
  %v293 = vshrl.u32 %v292, 7
  %v294 = vsub.s32 0, %v293
  %v295 = vrot.slane %v290, %v294
  %v297 = vadd.f32 %v288, %v295
  %v298 = vadd.f32 %v289, %v295
  %v299 = vmul.f32 %v297, 0.5
  %v300 = vmul.f32 %v298, 0.5
  %v301 = vmul.f32 %v297, 0.044715
  %v302 = vmul.f32 %v298, 0.044715
  %v303 = vmul.f32 %v301, %v297
  %v304 = vmul.f32 %v302, %v298
  %v305 = vmul.f32 %v303, %v297
  %v306 = vmul.f32 %v304, %v298
  %v307 = vadd.f32 %v297, %v305
  %v308 = vadd.f32 %v298, %v306
  %v309 = vmul.f32 %v307, 0.7978846
  %v310 = vmul.f32 %v308, 0.7978846
  %v311 = vtanh.pop %v309
  %v312 = vtanh.pop %v310
  %v313 = vadd.f32 %v311, 1.0
  %v314 = vadd.f32 %v312, 1.0
  %v315 = vmul.f32 %v299, %v313
  %v316 = vmul.f32 %v300, %v314
  %317 = vst.msk [vmem:[%s7] sm:$0xff] %vm38, %v315
  %vm318 = vcmask 254976
  %319 = vst.msk [vmem:[%s7 + $0x8] sm:$0x3] %vm318, %v316
  // Predicated region
  $region30: #{edge_update.7} parent=0 // pred_check
    _
  $region31: #{edge_update.7} parent=0 // pred_check_branch
    %321 = sbr.rel (0) target = $region33
  $region32: #{edge_update.7} parent=0 // pred_region
    _
  $region33: #{edge_update.7} parent=0 // pred_fallthru
    _
  // Predicated region
  $region34: #{edge_update.7} parent=0 // pred_check
    _
  $region35: #{edge_update.7} parent=0 // pred_check_branch
    %323 = sbr.rel (0) target = $region37
  $region36: #{edge_update.7} parent=0 // pred_region
    _
  $region37: #{edge_update.7} parent=0 // pred_fallthru
    _

// kernel: edge_update.5
$region0: #{edge_update.5}
  #allocation0 [shape = 'u32[]', space=smem, size = 0x4, offset = 0x4, fixed_abs, tag = 'smem constant byte address 0x4 - core index']
  #allocation1 [shape = 'u32[144,128]{1,0:T(1,128)}', space=vmem, size = 0x12000, scoped, tag = 'internal scratch']
  %s0 = inlined_call_operand.vmem [shape: f32[8,32], index: 0, kind: input, shape index: {}]
  %s1 = inlined_call_operand.vmem [shape: f32[8,32], index: 1, kind: input, shape index: {}]
  %s2 = inlined_call_operand.vmem [shape: f32[8,32], index: 2, kind: input, shape index: {}]
  %s3 = inlined_call_operand.vmem [shape: f32[32,32], index: 3, kind: input, shape index: {}]
  %s4 = inlined_call_operand.vmem [shape: f32[32,32], index: 4, kind: input, shape index: {}]
  %s5 = inlined_call_operand.vmem [shape: f32[32,32], index: 5, kind: input, shape index: {}]
  %s6 = inlined_call_operand.vmem [shape: f32[1,32], index: 6, kind: input, shape index: {}]
  %s7 = inlined_call_operand.vmem [shape: f32[1,32], index: 7, kind: input, shape index: {}]
  %s8 = inlined_call_operand.vmem [shape: f32[1,32], index: 8, kind: input, shape index: {}]
  %s9 = inlined_call_operand.vmem [shape: f32[32,32], index: 9, kind: input, shape index: {}]
  %s10 = inlined_call_operand.vmem [shape: f32[1,32], index: 10, kind: input, shape index: {}]
  %s11 = inlined_call_operand.vmem [shape: f32[1,32], index: 11, kind: input, shape index: {}]
  %s12 = inlined_call_operand.vmem [shape: f32[1,32], index: 12, kind: input, shape index: {}]
  %s13 = inlined_call_operand.vmem [shape: f32[8,32], index: 13, kind: output, shape index: {0}]
  %s14 = inlined_call_operand.vmem [shape: f32[8,32], index: 14, kind: output, shape index: {1}]
  %15 = xla_tuple %s13, %s14
  %s16 = sld [smem:[#allocation0]]
  $region70: #{edge_update.5} parent=0
    _
  %s18 = ssub.s32 1, %s16
  %s19 = scalar_select 0, %s18, %s16
  // Predicated region
  $region2: #{edge_update.5} parent=0 // pred_check
    _
  $region3: #{edge_update.5} parent=0 // pred_check_branch
    %21 = sbr.rel (0) target = $region5
  $region4: #{edge_update.5} parent=0 // pred_region
    _
  $region5: #{edge_update.5} parent=0 // pred_fallthru
    _
  // Predicated region
  $region6: #{edge_update.5} parent=0 // pred_check
    _
  $region7: #{edge_update.5} parent=0 // pred_check_branch
    %23 = sbr.rel (0) target = $region9
  $region8: #{edge_update.5} parent=0 // pred_region
    _
  $region9: #{edge_update.5} parent=0 // pred_fallthru
    _
  // Predicated region
  $region10: #{edge_update.5} parent=0 // pred_check
    _
  $region11: #{edge_update.5} parent=0 // pred_check_branch
    %25 = sbr.rel (0) target = $region13
  $region12: #{edge_update.5} parent=0 // pred_region
    _
  $region13: #{edge_update.5} parent=0 // pred_fallthru
    _
  // Predicated region
  $region14: #{edge_update.5} parent=0 // pred_check
    _
  $region15: #{edge_update.5} parent=0 // pred_check_branch
    %27 = sbr.rel (0) target = $region17
  $region16: #{edge_update.5} parent=0 // pred_region
    _
  $region17: #{edge_update.5} parent=0 // pred_fallthru
    _
  // Predicated region
  $region18: #{edge_update.5} parent=0 // pred_check
    _
  $region19: #{edge_update.5} parent=0 // pred_check_branch
    %29 = sbr.rel (0) target = $region21
  $region20: #{edge_update.5} parent=0 // pred_region
    _
  $region21: #{edge_update.5} parent=0 // pred_fallthru
    _
  // Predicated region
  $region22: #{edge_update.5} parent=0 // pred_check
    _
  $region23: #{edge_update.5} parent=0 // pred_check_branch
    %31 = sbr.rel (0) target = $region25
  $region24: #{edge_update.5} parent=0 // pred_region
    _
  $region25: #{edge_update.5} parent=0 // pred_fallthru
    _
  // Predicated region
  $region26: #{edge_update.5} parent=0 // pred_check
    _
  $region27: #{edge_update.5} parent=0 // pred_check_branch
    %33 = sbr.rel (0) target = $region29
  $region28: #{edge_update.5} parent=0 // pred_region
    _
  $region29: #{edge_update.5} parent=0 // pred_fallthru
    _
  // Predicated region
  $region30: #{edge_update.5} parent=0 // pred_check
    _
  $region31: #{edge_update.5} parent=0 // pred_check_branch
    %35 = sbr.rel (0) target = $region33
  $region32: #{edge_update.5} parent=0 // pred_region
    _
  $region33: #{edge_update.5} parent=0 // pred_fallthru
    _
  // Predicated region
  $region34: #{edge_update.5} parent=0 // pred_check
    _
  $region35: #{edge_update.5} parent=0 // pred_check_branch
    %37 = sbr.rel (0) target = $region37
  $region36: #{edge_update.5} parent=0 // pred_region
    _
  $region37: #{edge_update.5} parent=0 // pred_fallthru
    _
  // Predicated region
  $region38: #{edge_update.5} parent=0 // pred_check
    _
  $region39: #{edge_update.5} parent=0 // pred_check_branch
    %39 = sbr.rel (0) target = $region41
  $region40: #{edge_update.5} parent=0 // pred_region
    _
  $region41: #{edge_update.5} parent=0 // pred_fallthru
    _
  // Predicated region
  $region42: #{edge_update.5} parent=0 // pred_check
    _
  $region43: #{edge_update.5} parent=0 // pred_check_branch
    %41 = sbr.rel (0) target = $region45
  $region44: #{edge_update.5} parent=0 // pred_region
    _
  $region45: #{edge_update.5} parent=0 // pred_fallthru
    _
  // Predicated region
  $region46: #{edge_update.5} parent=0 // pred_check
    _
  $region47: #{edge_update.5} parent=0 // pred_check_branch
    %43 = sbr.rel (0) target = $region49
  $region48: #{edge_update.5} parent=0 // pred_region
    _
  $region49: #{edge_update.5} parent=0 // pred_fallthru
    _
  // Predicated region
  $region50: #{edge_update.5} parent=0 // pred_check
    _
  $region51: #{edge_update.5} parent=0 // pred_check_branch
    %45 = sbr.rel (0) target = $region53
  $region52: #{edge_update.5} parent=0 // pred_region
    _
  $region53: #{edge_update.5} parent=0 // pred_fallthru
    _
  %v46 = vld [vmem:[%s0] sm:$0xff]
  %v47 = vld [vmem:[%s3] sm:$0xff]
  %v48 = vld [vmem:[%s3 + $0x8] sm:$0xff]
  %v49 = vld [vmem:[%s3 + $0x10] sm:$0xff]
  %v50 = vld [vmem:[%s3 + $0x18] sm:$0xff]
  %v51 = vld [vmem:[%s1] sm:$0xff]
  %v52 = vld [vmem:[%s4] sm:$0xff]
  %v53 = vld [vmem:[%s4 + $0x8] sm:$0xff]
  %v54 = vld [vmem:[%s4 + $0x10] sm:$0xff]
  %v55 = vld [vmem:[%s4 + $0x18] sm:$0xff]
  %vm56 = vcmask 261120
  %v58 = vsel %vm56, %v51, 0
  %60 = vmatprep.subr.mxu0 0.0
  %61 = vmatpush1.msra.mxu0 0.0
  %62 = vmatprep.subr.mxu0 0.0
  %63 = vmatpush1.msra.mxu0 0.0
  %64 = vmatprep.subr.mxu0 0.0
  %65 = vmatpush1.msra.mxu0 0.0
  %66 = vmatprep.subr.mxu0 0.0
  %67 = vmatpush1.msra.mxu0 0.0
  %68 = vmatprep.subr.mxu0 0.0
  %69 = vmatpush1.msra.mxu0 0.0
  %70 = vmatprep.subr.mxu0 0.0
  %71 = vmatpush1.msra.mxu0 0.0
  %72 = vmatprep.subr.mxu0 0.0
  %73 = vmatpush1.msra.mxu0 0.0
  %74 = vmatprep.subr.mxu0 0.0
  %75 = vmatpush1.msra.mxu0 0.0
  %76 = vmatprep.subr.mxu0 0.0
  %77 = vmatpush1.msra.mxu0 0.0
  %78 = vmatprep.subr.mxu0 0.0
  %79 = vmatpush1.msra.mxu0 0.0
  %80 = vmatprep.subr.mxu0 0.0
  %81 = vmatpush1.msra.mxu0 0.0
  %82 = vmatprep.subr.mxu0 0.0
  %83 = vmatpush1.msra.mxu0 0.0
  %84 = vmatprep.subr.mxu0 0.0
  %85 = vmatpush1.msra.mxu0 %v55
  %86 = vmatprep.subr.mxu0 0.0
  %87 = vmatpush1.msra.mxu0 %v54
  %88 = vmatprep.subr.mxu0 0.0
  %89 = vmatpush1.msra.mxu0 %v53
  %90 = vmatprep.subr.mxu0 0.0
  %91 = vmatpush1.msra.mxu0 %v52
  %92 = vmatprep.subr.mxu0 0.0
  %93 = vmatpush2.msra.mxu0 0.0
  %94 = vmatprep.subr.mxu0 0.0
  %95 = vmatpush2.msra.mxu0 0.0
  %96 = vmatprep.subr.mxu0 0.0
  %97 = vmatpush2.msra.mxu0 0.0
  %98 = vmatprep.subr.mxu0 0.0
  %99 = vmatpush2.msra.mxu0 0.0
  %100 = vmatprep.subr.mxu0 0.0
  %101 = vmatpush2.msra.mxu0 0.0
  %102 = vmatprep.subr.mxu0 0.0
  %103 = vmatpush2.msra.mxu0 0.0
  %104 = vmatprep.subr.mxu0 0.0
  %105 = vmatpush2.msra.mxu0 0.0
  %106 = vmatprep.subr.mxu0 0.0
  %107 = vmatpush2.msra.mxu0 0.0
  %108 = vmatprep.subr.mxu0 0.0
  %109 = vmatpush2.msra.mxu0 0.0
  %110 = vmatprep.subr.mxu0 0.0
  %111 = vmatpush2.msra.mxu0 0.0
  %112 = vmatprep.subr.mxu0 0.0
  %113 = vmatpush2.msra.mxu0 0.0
  %114 = vmatprep.subr.mxu0 0.0
  %115 = vmatpush2.msra.mxu0 0.0
  %116 = vmatprep.subr.mxu0 0.0
  %117 = vmatpush2.msra.mxu0 0.0
  %118 = vmatprep.subr.mxu0 0.0
  %119 = vmatpush2.msra.mxu0 0.0
  %120 = vmatprep.subr.mxu0 0.0
  %121 = vmatpush2.msra.mxu0 0.0
  %122 = vmatprep.subr.mxu0 0.0
  %123 = vmatpush2.msra.mxu0 0.0
  %124 = vmatprep.mubr.f32.mxu0 0.0
  %125 = vmatmul.mubr.f32.gmra.mxu0 %v58
  %v126 = vpop.f32.mrf.mxu0
  %v127 = vadd.f32 0.0, %v126
  %v128 = vpop.f32.mrf.mxu0
  %129 = vdwg.mxu0
  %v131 = vsel %vm56, %v46, 0
  %133 = vmatprep.subr.mxu0 0.0
  %134 = vmatpush1.msra.mxu0 0.0
  %135 = vmatprep.subr.mxu0 0.0
  %136 = vmatpush1.msra.mxu0 0.0
  %137 = vmatprep.subr.mxu0 0.0
  %138 = vmatpush1.msra.mxu0 0.0
  %139 = vmatprep.subr.mxu0 0.0
  %140 = vmatpush1.msra.mxu0 0.0
  %141 = vmatprep.subr.mxu0 0.0
  %142 = vmatpush1.msra.mxu0 0.0
  %143 = vmatprep.subr.mxu0 0.0
  %144 = vmatpush1.msra.mxu0 0.0
  %145 = vmatprep.subr.mxu0 0.0
  %146 = vmatpush1.msra.mxu0 0.0
  %147 = vmatprep.subr.mxu0 0.0
  %148 = vmatpush1.msra.mxu0 0.0
  %149 = vmatprep.subr.mxu0 0.0
  %150 = vmatpush1.msra.mxu0 0.0
  %151 = vmatprep.subr.mxu0 0.0
  %152 = vmatpush1.msra.mxu0 0.0
  %153 = vmatprep.subr.mxu0 0.0
  %154 = vmatpush1.msra.mxu0 0.0
  %155 = vmatprep.subr.mxu0 0.0
  %156 = vmatpush1.msra.mxu0 0.0
  %157 = vmatprep.subr.mxu0 0.0
  %158 = vmatpush1.msra.mxu0 %v50
  %159 = vmatprep.subr.mxu0 0.0
  %160 = vmatpush1.msra.mxu0 %v49
  %161 = vmatprep.subr.mxu0 0.0
  %162 = vmatpush1.msra.mxu0 %v48
  %163 = vmatprep.subr.mxu0 0.0
  %164 = vmatpush1.msra.mxu0 %v47
  %165 = vmatprep.subr.mxu0 0.0
  %166 = vmatpush2.msra.mxu0 0.0
  %167 = vmatprep.subr.mxu0 0.0
  %168 = vmatpush2.msra.mxu0 0.0
  %169 = vmatprep.subr.mxu0 0.0
  %170 = vmatpush2.msra.mxu0 0.0
  %171 = vmatprep.subr.mxu0 0.0
  %172 = vmatpush2.msra.mxu0 0.0
  %173 = vmatprep.subr.mxu0 0.0
  %174 = vmatpush2.msra.mxu0 0.0
  %175 = vmatprep.subr.mxu0 0.0
  %176 = vmatpush2.msra.mxu0 0.0
  %177 = vmatprep.subr.mxu0 0.0
  %178 = vmatpush2.msra.mxu0 0.0
  %179 = vmatprep.subr.mxu0 0.0
  %180 = vmatpush2.msra.mxu0 0.0
  %181 = vmatprep.subr.mxu0 0.0
  %182 = vmatpush2.msra.mxu0 0.0
  %183 = vmatprep.subr.mxu0 0.0
  %184 = vmatpush2.msra.mxu0 0.0
  %185 = vmatprep.subr.mxu0 0.0
  %186 = vmatpush2.msra.mxu0 0.0
  %187 = vmatprep.subr.mxu0 0.0
  %188 = vmatpush2.msra.mxu0 0.0
  %189 = vmatprep.subr.mxu0 0.0
  %190 = vmatpush2.msra.mxu0 0.0
  %191 = vmatprep.subr.mxu0 0.0
  %192 = vmatpush2.msra.mxu0 0.0
  %193 = vmatprep.subr.mxu0 0.0
  %194 = vmatpush2.msra.mxu0 0.0
  %195 = vmatprep.subr.mxu0 0.0
  %196 = vmatpush2.msra.mxu0 0.0
  %197 = vmatprep.mubr.f32.mxu0 0.0
  %198 = vmatmul.mubr.f32.gmra.mxu0 %v131
  %v199 = vpop.f32.mrf.mxu0
  %v200 = vadd.f32 %v127, %v199
  %v201 = vpop.f32.mrf.mxu0
  %202 = vdwg.mxu0
  %v203 = vld [vmem:[%s2] sm:$0xff]
  %v204 = vld [vmem:[%s5] sm:$0xff]
  %v205 = vld [vmem:[%s5 + $0x8] sm:$0xff]
  %v206 = vld [vmem:[%s5 + $0x10] sm:$0xff]
  %v207 = vld [vmem:[%s5 + $0x18] sm:$0xff]
  %v209 = vsel %vm56, %v203, 0
  %211 = vmatprep.subr.mxu0 0.0
  %212 = vmatpush1.msra.mxu0 0.0
  %213 = vmatprep.subr.mxu0 0.0
  %214 = vmatpush1.msra.mxu0 0.0
  %215 = vmatprep.subr.mxu0 0.0
  %216 = vmatpush1.msra.mxu0 0.0
  %217 = vmatprep.subr.mxu0 0.0
  %218 = vmatpush1.msra.mxu0 0.0
  %219 = vmatprep.subr.mxu0 0.0
  %220 = vmatpush1.msra.mxu0 0.0
  %221 = vmatprep.subr.mxu0 0.0
  %222 = vmatpush1.msra.mxu0 0.0
  %223 = vmatprep.subr.mxu0 0.0
  %224 = vmatpush1.msra.mxu0 0.0
  %225 = vmatprep.subr.mxu0 0.0
  %226 = vmatpush1.msra.mxu0 0.0
  %227 = vmatprep.subr.mxu0 0.0
  %228 = vmatpush1.msra.mxu0 0.0
  %229 = vmatprep.subr.mxu0 0.0
  %230 = vmatpush1.msra.mxu0 0.0
  %231 = vmatprep.subr.mxu0 0.0
  %232 = vmatpush1.msra.mxu0 0.0
  %233 = vmatprep.subr.mxu0 0.0
  %234 = vmatpush1.msra.mxu0 0.0
  %235 = vmatprep.subr.mxu0 0.0
  %236 = vmatpush1.msra.mxu0 %v207
  %237 = vmatprep.subr.mxu0 0.0
  %238 = vmatpush1.msra.mxu0 %v206
  %239 = vmatprep.subr.mxu0 0.0
  %240 = vmatpush1.msra.mxu0 %v205
  %241 = vmatprep.subr.mxu0 0.0
  %242 = vmatpush1.msra.mxu0 %v204
  %243 = vmatprep.subr.mxu0 0.0
  %244 = vmatpush2.msra.mxu0 0.0
  %245 = vmatprep.subr.mxu0 0.0
  %246 = vmatpush2.msra.mxu0 0.0
  %247 = vmatprep.subr.mxu0 0.0
  %248 = vmatpush2.msra.mxu0 0.0
  %249 = vmatprep.subr.mxu0 0.0
  %250 = vmatpush2.msra.mxu0 0.0
  %251 = vmatprep.subr.mxu0 0.0
  %252 = vmatpush2.msra.mxu0 0.0
  %253 = vmatprep.subr.mxu0 0.0
  %254 = vmatpush2.msra.mxu0 0.0
  %255 = vmatprep.subr.mxu0 0.0
  %256 = vmatpush2.msra.mxu0 0.0
  %257 = vmatprep.subr.mxu0 0.0
  %258 = vmatpush2.msra.mxu0 0.0
  %259 = vmatprep.subr.mxu0 0.0
  %260 = vmatpush2.msra.mxu0 0.0
  %261 = vmatprep.subr.mxu0 0.0
  %262 = vmatpush2.msra.mxu0 0.0
  %263 = vmatprep.subr.mxu0 0.0
  %264 = vmatpush2.msra.mxu0 0.0
  %265 = vmatprep.subr.mxu0 0.0
  %266 = vmatpush2.msra.mxu0 0.0
  %267 = vmatprep.subr.mxu0 0.0
  %268 = vmatpush2.msra.mxu0 0.0
  %269 = vmatprep.subr.mxu0 0.0
  %270 = vmatpush2.msra.mxu0 0.0
  %271 = vmatprep.subr.mxu0 0.0
  %272 = vmatpush2.msra.mxu0 0.0
  %273 = vmatprep.subr.mxu0 0.0
  %274 = vmatpush2.msra.mxu0 0.0
  %275 = vmatprep.mubr.f32.mxu0 0.0
  %276 = vmatmul.mubr.f32.gmra.mxu0 %v209
  %v277 = vpop.f32.mrf.mxu0
  %v278 = vadd.f32 0.0, %v277
  %v279 = vpop.f32.mrf.mxu0
  %280 = vdwg.mxu0
  %v281 = vadd.f32 %v200, %v278
  %v282 = vld [vmem:[%s6] sm:$0x1]
  %v284 = vlaneseq
  %v285 = vshrl.u32 %v284, 7
  %v286 = vsub.s32 0, %v285
  %v287 = vrot.slane %v282, %v286
  %v289 = vadd.f32 %v281, %v287
  %v290 = vld [vmem:[%s7] sm:$0x1]
  %v291 = vld [vmem:[%s8] sm:$0x1]
  %v292 = vsel %vm56, %v289, 0.0
  %293 = vadd.xlane.f32.xlu0 %v292
  %v294 = vpop.xlane.xlu0 %293
  %v295 = vrcp.pop 32.0
  %v296 = vmul.f32 %v294, %v295
  %v297 = vsub.f32 %v289, %v296
  %v298 = vmul.f32 %v297, %v297
  %v299 = vsel %vm56, %v298, 0.0
  %300 = vadd.xlane.f32.xlu0 %v299
  %v301 = vpop.xlane.xlu0 %300
  %v302 = vmul.f32 %v301, %v295
  %v303 = vadd.f32 %v302, 1e-05
  %v304 = vrsqrt.pop %v303
  %v305 = vmul.f32 %v297, %v304
  %v307 = vlaneseq
  %v308 = vshrl.u32 %v307, 7
  %v309 = vsub.s32 0, %v308
  %v310 = vrot.slane %v290, %v309
  %v312 = vmul.f32 %v305, %v310
  %v314 = vlaneseq
  %v315 = vshrl.u32 %v314, 7
  %v316 = vsub.s32 0, %v315
  %v317 = vrot.slane %v291, %v316
  %v319 = vadd.f32 %v312, %v317
  %320 = vst.msk [vmem:[%s13] sm:$0xff] %vm56, %v319
  %v321 = vld [vmem:[%s9] sm:$0xff]
  %v322 = vld [vmem:[%s9 + $0x8] sm:$0xff]
  %v323 = vld [vmem:[%s9 + $0x10] sm:$0xff]
  %v324 = vld [vmem:[%s9 + $0x18] sm:$0xff]
  %v325 = vld [vmem:[%s10] sm:$0x1]
  %v327 = vlaneseq
  %v328 = vshrl.u32 %v327, 7
  %v329 = vsub.s32 0, %v328
  %v330 = vrot.slane %v325, %v329
  %v333 = vsel %vm56, %v319, 0
  %335 = vmatprep.subr.mxu0 0.0
  %336 = vmatpush1.msra.mxu0 0.0
  %337 = vmatprep.subr.mxu0 0.0
  %338 = vmatpush1.msra.mxu0 0.0
  %339 = vmatprep.subr.mxu0 0.0
  %340 = vmatpush1.msra.mxu0 0.0
  %341 = vmatprep.subr.mxu0 0.0
  %342 = vmatpush1.msra.mxu0 0.0
  %343 = vmatprep.subr.mxu0 0.0
  %344 = vmatpush1.msra.mxu0 0.0
  %345 = vmatprep.subr.mxu0 0.0
  %346 = vmatpush1.msra.mxu0 0.0
  %347 = vmatprep.subr.mxu0 0.0
  %348 = vmatpush1.msra.mxu0 0.0
  %349 = vmatprep.subr.mxu0 0.0
  %350 = vmatpush1.msra.mxu0 0.0
  %351 = vmatprep.subr.mxu0 0.0
  %352 = vmatpush1.msra.mxu0 0.0
  %353 = vmatprep.subr.mxu0 0.0
  %354 = vmatpush1.msra.mxu0 0.0
  %355 = vmatprep.subr.mxu0 0.0
  %356 = vmatpush1.msra.mxu0 0.0
  %357 = vmatprep.subr.mxu0 0.0
  %358 = vmatpush1.msra.mxu0 0.0
  %359 = vmatprep.subr.mxu0 0.0
  %360 = vmatpush1.msra.mxu0 %v324
  %361 = vmatprep.subr.mxu0 0.0
  %362 = vmatpush1.msra.mxu0 %v323
  %363 = vmatprep.subr.mxu0 0.0
  %364 = vmatpush1.msra.mxu0 %v322
  %365 = vmatprep.subr.mxu0 0.0
  %366 = vmatpush1.msra.mxu0 %v321
  %367 = vmatprep.subr.mxu0 0.0
  %368 = vmatpush2.msra.mxu0 0.0
  %369 = vmatprep.subr.mxu0 0.0
  %370 = vmatpush2.msra.mxu0 0.0
  %371 = vmatprep.subr.mxu0 0.0
  %372 = vmatpush2.msra.mxu0 0.0
  %373 = vmatprep.subr.mxu0 0.0
  %374 = vmatpush2.msra.mxu0 0.0
  %375 = vmatprep.subr.mxu0 0.0
  %376 = vmatpush2.msra.mxu0 0.0
  %377 = vmatprep.subr.mxu0 0.0
  %378 = vmatpush2.msra.mxu0 0.0
  %379 = vmatprep.subr.mxu0 0.0
  %380 = vmatpush2.msra.mxu0 0.0
  %381 = vmatprep.subr.mxu0 0.0
  %382 = vmatpush2.msra.mxu0 0.0
  %383 = vmatprep.subr.mxu0 0.0
  %384 = vmatpush2.msra.mxu0 0.0
  %385 = vmatprep.subr.mxu0 0.0
  %386 = vmatpush2.msra.mxu0 0.0
  %387 = vmatprep.subr.mxu0 0.0
  %388 = vmatpush2.msra.mxu0 0.0
  %389 = vmatprep.subr.mxu0 0.0
  %390 = vmatpush2.msra.mxu0 0.0
  %391 = vmatprep.subr.mxu0 0.0
  %392 = vmatpush2.msra.mxu0 0.0
  %393 = vmatprep.subr.mxu0 0.0
  %394 = vmatpush2.msra.mxu0 0.0
  %395 = vmatprep.subr.mxu0 0.0
  %396 = vmatpush2.msra.mxu0 0.0
  %397 = vmatprep.subr.mxu0 0.0
  %398 = vmatpush2.msra.mxu0 0.0
  %399 = vmatprep.mubr.f32.mxu0 0.0
  %400 = vmatmul.mubr.f32.gmra.mxu0 %v333
  %v401 = vpop.f32.mrf.mxu0
  %v402 = vadd.f32 %v330, %v401
  %v403 = vpop.f32.mrf.mxu0
  %404 = vdwg.mxu0
  %v405 = vmul.f32 %v402, 0.5
  %v406 = vmul.f32 %v402, 0.044715
  %v407 = vmul.f32 %v406, %v402
  %v408 = vmul.f32 %v407, %v402
  %v409 = vadd.f32 %v402, %v408
  %v410 = vmul.f32 %v409, 0.7978846
  %v411 = vtanh.pop %v410
  %v412 = vadd.f32 %v411, 1.0
  %v413 = vmul.f32 %v405, %v412
  %v414 = vld [vmem:[%s11] sm:$0x1]
  %v415 = vld [vmem:[%s12] sm:$0x1]
  %v416 = vsel %vm56, %v413, 0.0
  %417 = vadd.xlane.f32.xlu0 %v416
  %v418 = vpop.xlane.xlu0 %417
  %v419 = vmul.f32 %v418, %v295
  %v420 = vsub.f32 %v413, %v419
  %v421 = vmul.f32 %v420, %v420
  %v422 = vsel %vm56, %v421, 0.0
  %423 = vadd.xlane.f32.xlu0 %v422
  %v424 = vpop.xlane.xlu0 %423
  %v425 = vmul.f32 %v424, %v295
  %v426 = vadd.f32 %v425, 1e-05
  %v427 = vrsqrt.pop %v426
  %v428 = vmul.f32 %v420, %v427
  %v430 = vlaneseq
  %v431 = vshrl.u32 %v430, 7
  %v432 = vsub.s32 0, %v431
  %v433 = vrot.slane %v414, %v432
  %v435 = vmul.f32 %v428, %v433
  %v437 = vlaneseq
  %v438 = vshrl.u32 %v437, 7
  %v439 = vsub.s32 0, %v438
  %v440 = vrot.slane %v415, %v439
  %v442 = vadd.f32 %v435, %v440
  %443 = vst.msk [vmem:[%s14] sm:$0xff] %vm56, %v442
  // Predicated region
  $region54: #{edge_update.5} parent=0 // pred_check
    _
  $region55: #{edge_update.5} parent=0 // pred_check_branch
    %445 = sbr.rel (0) target = $region57
  $region56: #{edge_update.5} parent=0 // pred_region
    _
  $region57: #{edge_update.5} parent=0 // pred_fallthru
    _
  // Predicated region
  $region58: #{edge_update.5} parent=0 // pred_check
    _
  $region59: #{edge_update.5} parent=0 // pred_check_branch
    %447 = sbr.rel (0) target = $region61
  $region60: #{edge_update.5} parent=0 // pred_region
    _
  $region61: #{edge_update.5} parent=0 // pred_fallthru
    _
  // Predicated region
  $region62: #{edge_update.5} parent=0 // pred_check
    _
  $region63: #{edge_update.5} parent=0 // pred_check_branch
    %449 = sbr.rel (0) target = $region65
  $region64: #{edge_update.5} parent=0 // pred_region
    _
  $region65: #{edge_update.5} parent=0 // pred_fallthru
    _
  // Predicated region
  $region66: #{edge_update.5} parent=0 // pred_check
    _
  $region67: #{edge_update.5} parent=0 // pred_check_branch
    %451 = sbr.rel (0) target = $region69
  $region68: #{edge_update.5} parent=0 // pred_region
    _
  $region69: #{edge_update.5} parent=0 // pred_fallthru
    _

// kernel: edge_update.9
$region0: #{edge_update.9}
  #allocation0 [shape = 'u32[]', space=smem, size = 0x4, offset = 0x4, fixed_abs, tag = 'smem constant byte address 0x4 - core index']
  #allocation1 [shape = 'u32[144,128]{1,0:T(1,128)}', space=vmem, size = 0x12000, scoped, tag = 'internal scratch']
  %s0 = inlined_call_operand.vmem [shape: f32[8,32], index: 0, kind: input, shape index: {}]
  %s1 = inlined_call_operand.vmem [shape: f32[8,32], index: 1, kind: input, shape index: {}]
  %s2 = inlined_call_operand.vmem [shape: f32[8,32], index: 2, kind: input, shape index: {}]
  %s3 = inlined_call_operand.vmem [shape: f32[8,32], index: 3, kind: input, shape index: {}]
  %s4 = inlined_call_operand.vmem [shape: f32[1,32], index: 4, kind: input, shape index: {}]
  %s5 = inlined_call_operand.vmem [shape: f32[1,32], index: 5, kind: input, shape index: {}]
  %s6 = inlined_call_operand.vmem [shape: f32[32,128], index: 6, kind: input, shape index: {}]
  %s7 = inlined_call_operand.vmem [shape: f32[1,128], index: 7, kind: input, shape index: {}]
  %s8 = inlined_call_operand.vmem [shape: f32[128,32], index: 8, kind: input, shape index: {}]
  %s9 = inlined_call_operand.vmem [shape: f32[128,32], index: 9, kind: input, shape index: {}]
  %s10 = inlined_call_operand.vmem [shape: f32[128,32], index: 10, kind: input, shape index: {}]
  %s11 = inlined_call_operand.vmem [shape: f32[1,32], index: 11, kind: input, shape index: {}]
  %s12 = inlined_call_operand.vmem [shape: f32[1,32], index: 12, kind: input, shape index: {}]
  %s13 = inlined_call_operand.vmem [shape: f32[1,32], index: 13, kind: input, shape index: {}]
  %s14 = inlined_call_operand.vmem [shape: f32[1,32], index: 14, kind: input, shape index: {}]
  %s15 = inlined_call_operand.vmem [shape: f32[1,32], index: 15, kind: input, shape index: {}]
  %s16 = inlined_call_operand.vmem [shape: f32[32,64], index: 16, kind: input, shape index: {}]
  %s17 = inlined_call_operand.vmem [shape: f32[32,64], index: 17, kind: input, shape index: {}]
  %s18 = inlined_call_operand.vmem [shape: f32[64,32], index: 18, kind: input, shape index: {}]
  %s19 = inlined_call_operand.vmem [shape: f32[1,32], index: 19, kind: input, shape index: {}]
  %s20 = inlined_call_operand.vmem [shape: f32[1,32], index: 20, kind: input, shape index: {}]
  %s21 = inlined_call_operand.hbm [shape: f32[8,32], index: 21, kind: output, shape index: {}]
  %s22 = sld [smem:[#allocation0]]
  $region94: #{edge_update.9} parent=0
    _
  %s24 = ssub.s32 1, %s22
  %s25 = scalar_select 0, %s24, %s22
  $region1: #{edge_update.9} parent=0
    #allocation2 [shape = 'u8[4096]{0}', space=vmem, size = 0x1000, scoped, tag = 'output window, operand 0, single buffered']
    #allocation3 [shape = 's32[1]{0}', space=sflag, size = 0x4, scoped, tag = 'scoped memory for edge_update.9']
    %26 = vsyncpa [#allocation3], 0
    // Predicated region
    $region2: #{edge_update.9} parent=1 // pred_check
      _
    $region3: #{edge_update.9} parent=1 // pred_check_branch
      %28 = sbr.rel (0) target = $region5
    $region4: #{edge_update.9} parent=1 // pred_region
      _
    $region5: #{edge_update.9} parent=1 // pred_fallthru
      _
    // Predicated region
    $region6: #{edge_update.9} parent=1 // pred_check
      _
    $region7: #{edge_update.9} parent=1 // pred_check_branch
      %30 = sbr.rel (0) target = $region9
    $region8: #{edge_update.9} parent=1 // pred_region
      _
    $region9: #{edge_update.9} parent=1 // pred_fallthru
      _
    // Predicated region
    $region10: #{edge_update.9} parent=1 // pred_check
      _
    $region11: #{edge_update.9} parent=1 // pred_check_branch
      %32 = sbr.rel (0) target = $region13
    $region12: #{edge_update.9} parent=1 // pred_region
      _
    $region13: #{edge_update.9} parent=1 // pred_fallthru
      _
    // Predicated region
    $region14: #{edge_update.9} parent=1 // pred_check
      _
    $region15: #{edge_update.9} parent=1 // pred_check_branch
      %34 = sbr.rel (0) target = $region17
    $region16: #{edge_update.9} parent=1 // pred_region
      _
    $region17: #{edge_update.9} parent=1 // pred_fallthru
      _
    // Predicated region
    $region18: #{edge_update.9} parent=1 // pred_check
      _
    $region19: #{edge_update.9} parent=1 // pred_check_branch
      %36 = sbr.rel (0) target = $region21
    $region20: #{edge_update.9} parent=1 // pred_region
      _
    $region21: #{edge_update.9} parent=1 // pred_fallthru
      _
    // Predicated region
    $region22: #{edge_update.9} parent=1 // pred_check
      _
    $region23: #{edge_update.9} parent=1 // pred_check_branch
      %38 = sbr.rel (0) target = $region25
    $region24: #{edge_update.9} parent=1 // pred_region
      _
    $region25: #{edge_update.9} parent=1 // pred_fallthru
      _
    // Predicated region
    $region26: #{edge_update.9} parent=1 // pred_check
      _
    $region27: #{edge_update.9} parent=1 // pred_check_branch
      %40 = sbr.rel (0) target = $region29
    $region28: #{edge_update.9} parent=1 // pred_region
      _
    $region29: #{edge_update.9} parent=1 // pred_fallthru
      _
    // Predicated region
    $region30: #{edge_update.9} parent=1 // pred_check
      _
    $region31: #{edge_update.9} parent=1 // pred_check_branch
      %42 = sbr.rel (0) target = $region33
    $region32: #{edge_update.9} parent=1 // pred_region
      _
    $region33: #{edge_update.9} parent=1 // pred_fallthru
      _
    // Predicated region
    $region34: #{edge_update.9} parent=1 // pred_check
      _
    $region35: #{edge_update.9} parent=1 // pred_check_branch
      %44 = sbr.rel (0) target = $region37
    $region36: #{edge_update.9} parent=1 // pred_region
      _
    $region37: #{edge_update.9} parent=1 // pred_fallthru
      _
    // Predicated region
    $region38: #{edge_update.9} parent=1 // pred_check
      _
    $region39: #{edge_update.9} parent=1 // pred_check_branch
      %46 = sbr.rel (0) target = $region41
    $region40: #{edge_update.9} parent=1 // pred_region
      _
    $region41: #{edge_update.9} parent=1 // pred_fallthru
      _
    // Predicated region
    $region42: #{edge_update.9} parent=1 // pred_check
      _
    $region43: #{edge_update.9} parent=1 // pred_check_branch
      %48 = sbr.rel (0) target = $region45
    $region44: #{edge_update.9} parent=1 // pred_region
      _
    $region45: #{edge_update.9} parent=1 // pred_fallthru
      _
    // Predicated region
    $region46: #{edge_update.9} parent=1 // pred_check
      _
    $region47: #{edge_update.9} parent=1 // pred_check_branch
      %50 = sbr.rel (0) target = $region49
    $region48: #{edge_update.9} parent=1 // pred_region
      _
    $region49: #{edge_update.9} parent=1 // pred_fallthru
      _
    // Predicated region
    $region50: #{edge_update.9} parent=1 // pred_check
      _
    $region51: #{edge_update.9} parent=1 // pred_check_branch
      %52 = sbr.rel (0) target = $region53
    $region52: #{edge_update.9} parent=1 // pred_region
      _
    $region53: #{edge_update.9} parent=1 // pred_fallthru
      _
    // Predicated region
    $region54: #{edge_update.9} parent=1 // pred_check
      _
    $region55: #{edge_update.9} parent=1 // pred_check_branch
      %54 = sbr.rel (0) target = $region57
    $region56: #{edge_update.9} parent=1 // pred_region
      _
    $region57: #{edge_update.9} parent=1 // pred_fallthru
      _
    // Predicated region
    $region58: #{edge_update.9} parent=1 // pred_check
      _
    $region59: #{edge_update.9} parent=1 // pred_check_branch
      %56 = sbr.rel (0) target = $region61
    $region60: #{edge_update.9} parent=1 // pred_region
      _
    $region61: #{edge_update.9} parent=1 // pred_fallthru
      _
    // Predicated region
    $region62: #{edge_update.9} parent=1 // pred_check
      _
    $region63: #{edge_update.9} parent=1 // pred_check_branch
      %58 = sbr.rel (0) target = $region65
    $region64: #{edge_update.9} parent=1 // pred_region
      _
    $region65: #{edge_update.9} parent=1 // pred_fallthru
      _
    // Predicated region
    $region66: #{edge_update.9} parent=1 // pred_check
      _
    $region67: #{edge_update.9} parent=1 // pred_check_branch
      %60 = sbr.rel (0) target = $region69
    $region68: #{edge_update.9} parent=1 // pred_region
      _
    $region69: #{edge_update.9} parent=1 // pred_fallthru
      _
    // Predicated region
    $region70: #{edge_update.9} parent=1 // pred_check
      _
    $region71: #{edge_update.9} parent=1 // pred_check_branch
      %62 = sbr.rel (0) target = $region73
    $region72: #{edge_update.9} parent=1 // pred_region
      _
    $region73: #{edge_update.9} parent=1 // pred_fallthru
      _
    // Predicated region
    $region74: #{edge_update.9} parent=1 // pred_check
      _
    $region75: #{edge_update.9} parent=1 // pred_check_branch
      %64 = sbr.rel (0) target = $region77
    $region76: #{edge_update.9} parent=1 // pred_region
      _
    $region77: #{edge_update.9} parent=1 // pred_fallthru
      _
    // Predicated region
    $region78: #{edge_update.9} parent=1 // pred_check
      _
    $region79: #{edge_update.9} parent=1 // pred_check_branch
      %66 = sbr.rel (0) target = $region81
    $region80: #{edge_update.9} parent=1 // pred_region
      _
    $region81: #{edge_update.9} parent=1 // pred_fallthru
      _
    // Predicated region
    $region82: #{edge_update.9} parent=1 // pred_check
      _
    $region83: #{edge_update.9} parent=1 // pred_check_branch
      %68 = sbr.rel (0) target = $region85
    $region84: #{edge_update.9} parent=1 // pred_region
      _
    $region85: #{edge_update.9} parent=1 // pred_fallthru
      _
    %v69 = vld [vmem:[%s1] sm:$0xff]
    %v70 = vld [vmem:[%s2] sm:$0xff]
    %v71 = vld [vmem:[%s3] sm:$0xff]
    %v72 = vadd.f32 %v69, %v70
    %v73 = vadd.f32 %v72, %v71
    %v74 = vld [vmem:[%s4] sm:$0x1]
    %v75 = vld [vmem:[%s5] sm:$0x1]
    %vm76 = vcmask 261120
    %v77 = vsel %vm76, %v73, 0.0
    %78 = vadd.xlane.f32.xlu0 %v77
    %v79 = vpop.xlane.xlu0 %78
    %v80 = vrcp.pop 32.0
    %v81 = vmul.f32 %v79, %v80
    %v82 = vsub.f32 %v73, %v81
    %v83 = vmul.f32 %v82, %v82
    %v84 = vsel %vm76, %v83, 0.0
    %85 = vadd.xlane.f32.xlu0 %v84
    %v86 = vpop.xlane.xlu0 %85
    %v87 = vmul.f32 %v86, %v80
    %v88 = vadd.f32 %v87, 1e-05
    %v89 = vrsqrt.pop %v88
    %v90 = vmul.f32 %v82, %v89
    %v92 = vlaneseq
    %v93 = vshrl.u32 %v92, 7
    %v94 = vsub.s32 0, %v93
    %v95 = vrot.slane %v74, %v94
    %v97 = vmul.f32 %v90, %v95
    %v99 = vlaneseq
    %v100 = vshrl.u32 %v99, 7
    %v101 = vsub.s32 0, %v100
    %v102 = vrot.slane %v75, %v101
    %v104 = vadd.f32 %v97, %v102
    %v105 = vld [vmem:[%s6] sm:$0xff]
    %v106 = vld [vmem:[%s6 + $0x8] sm:$0xff]
    %v107 = vld [vmem:[%s6 + $0x10] sm:$0xff]
    %v108 = vld [vmem:[%s6 + $0x18] sm:$0xff]
    %v109 = vld [vmem:[%s7] sm:$0x1]
    %v111 = vlaneseq
    %v112 = vshrl.u32 %v111, 7
    %v113 = vsub.s32 0, %v112
    %v114 = vrot.slane %v109, %v113
    %v117 = vsel %vm76, %v104, 0
    %119 = vmatprep.subr.mxu0 0.0
    %120 = vmatpush1.msra.mxu0 0.0
    %121 = vmatprep.subr.mxu0 0.0
    %122 = vmatpush1.msra.mxu0 0.0
    %123 = vmatprep.subr.mxu0 0.0
    %124 = vmatpush1.msra.mxu0 0.0
    %125 = vmatprep.subr.mxu0 0.0
    %126 = vmatpush1.msra.mxu0 0.0
    %127 = vmatprep.subr.mxu0 0.0
    %128 = vmatpush1.msra.mxu0 0.0
    %129 = vmatprep.subr.mxu0 0.0
    %130 = vmatpush1.msra.mxu0 0.0
    %131 = vmatprep.subr.mxu0 0.0
    %132 = vmatpush1.msra.mxu0 0.0
    %133 = vmatprep.subr.mxu0 0.0
    %134 = vmatpush1.msra.mxu0 0.0
    %135 = vmatprep.subr.mxu0 0.0
    %136 = vmatpush1.msra.mxu0 0.0
    %137 = vmatprep.subr.mxu0 0.0
    %138 = vmatpush1.msra.mxu0 0.0
    %139 = vmatprep.subr.mxu0 0.0
    %140 = vmatpush1.msra.mxu0 0.0
    %141 = vmatprep.subr.mxu0 0.0
    %142 = vmatpush1.msra.mxu0 0.0
    %143 = vmatprep.subr.mxu0 0.0
    %144 = vmatpush1.msra.mxu0 %v108
    %145 = vmatprep.subr.mxu0 0.0
    %146 = vmatpush1.msra.mxu0 %v107
    %147 = vmatprep.subr.mxu0 0.0
    %148 = vmatpush1.msra.mxu0 %v106
    %149 = vmatprep.subr.mxu0 0.0
    %150 = vmatpush1.msra.mxu0 %v105
    %151 = vmatprep.subr.mxu0 0.0
    %152 = vmatpush2.msra.mxu0 0.0
    %153 = vmatprep.subr.mxu0 0.0
    %154 = vmatpush2.msra.mxu0 0.0
    %155 = vmatprep.subr.mxu0 0.0
    %156 = vmatpush2.msra.mxu0 0.0
    %157 = vmatprep.subr.mxu0 0.0
    %158 = vmatpush2.msra.mxu0 0.0
    %159 = vmatprep.subr.mxu0 0.0
    %160 = vmatpush2.msra.mxu0 0.0
    %161 = vmatprep.subr.mxu0 0.0
    %162 = vmatpush2.msra.mxu0 0.0
    %163 = vmatprep.subr.mxu0 0.0
    %164 = vmatpush2.msra.mxu0 0.0
    %165 = vmatprep.subr.mxu0 0.0
    %166 = vmatpush2.msra.mxu0 0.0
    %167 = vmatprep.subr.mxu0 0.0
    %168 = vmatpush2.msra.mxu0 0.0
    %169 = vmatprep.subr.mxu0 0.0
    %170 = vmatpush2.msra.mxu0 0.0
    %171 = vmatprep.subr.mxu0 0.0
    %172 = vmatpush2.msra.mxu0 0.0
    %173 = vmatprep.subr.mxu0 0.0
    %174 = vmatpush2.msra.mxu0 0.0
    %175 = vmatprep.subr.mxu0 0.0
    %176 = vmatpush2.msra.mxu0 0.0
    %177 = vmatprep.subr.mxu0 0.0
    %178 = vmatpush2.msra.mxu0 0.0
    %179 = vmatprep.subr.mxu0 0.0
    %180 = vmatpush2.msra.mxu0 0.0
    %181 = vmatprep.subr.mxu0 0.0
    %182 = vmatpush2.msra.mxu0 0.0
    %183 = vmatprep.mubr.f32.mxu0 0.0
    %184 = vmatmul.mubr.f32.gmra.mxu0 %v117
    %v185 = vpop.f32.mrf.mxu0
    %v186 = vadd.f32 %v114, %v185
    %v187 = vpop.f32.mrf.mxu0
    %188 = vdwg.mxu0
    %v189 = vmul.f32 %v186, 0.5
    %v190 = vmul.f32 %v186, 0.044715
    %v191 = vmul.f32 %v190, %v186
    %v192 = vmul.f32 %v191, %v186
    %v193 = vadd.f32 %v186, %v192
    %v194 = vmul.f32 %v193, 0.7978846
    %v195 = vtanh.pop %v194
    %v196 = vadd.f32 %v195, 1.0
    %v197 = vmul.f32 %v189, %v196
    %v198 = vld [vmem:[%s8] sm:$0xff]
    %v199 = vld [vmem:[%s8 + $0x8] sm:$0xff]
    %v200 = vld [vmem:[%s8 + $0x10] sm:$0xff]
    %v201 = vld [vmem:[%s8 + $0x18] sm:$0xff]
    %v202 = vld [vmem:[%s8 + $0x20] sm:$0xff]
    %v203 = vld [vmem:[%s8 + $0x28] sm:$0xff]
    %v204 = vld [vmem:[%s8 + $0x30] sm:$0xff]
    %v205 = vld [vmem:[%s8 + $0x38] sm:$0xff]
    %v206 = vld [vmem:[%s8 + $0x40] sm:$0xff]
    %v207 = vld [vmem:[%s8 + $0x48] sm:$0xff]
    %v208 = vld [vmem:[%s8 + $0x50] sm:$0xff]
    %v209 = vld [vmem:[%s8 + $0x58] sm:$0xff]
    %v210 = vld [vmem:[%s8 + $0x60] sm:$0xff]
    %v211 = vld [vmem:[%s8 + $0x68] sm:$0xff]
    %v212 = vld [vmem:[%s8 + $0x70] sm:$0xff]
    %v213 = vld [vmem:[%s8 + $0x78] sm:$0xff]
    %v214 = vld [vmem:[%s11] sm:$0x1]
    %v216 = vlaneseq
    %v217 = vshrl.u32 %v216, 7
    %v218 = vsub.s32 0, %v217
    %v219 = vrot.slane %v214, %v218
    %221 = vmatprep.subr.mxu0 0.0
    %222 = vmatpush1.msra.mxu0 %v213
    %223 = vmatprep.subr.mxu0 0.0
    %224 = vmatpush1.msra.mxu0 %v212
    %225 = vmatprep.subr.mxu0 0.0
    %226 = vmatpush1.msra.mxu0 %v211
    %227 = vmatprep.subr.mxu0 0.0
    %228 = vmatpush1.msra.mxu0 %v210
    %229 = vmatprep.subr.mxu0 0.0
    %230 = vmatpush1.msra.mxu0 %v209
    %231 = vmatprep.subr.mxu0 0.0
    %232 = vmatpush1.msra.mxu0 %v208
    %233 = vmatprep.subr.mxu0 0.0
    %234 = vmatpush1.msra.mxu0 %v207
    %235 = vmatprep.subr.mxu0 0.0
    %236 = vmatpush1.msra.mxu0 %v206
    %237 = vmatprep.subr.mxu0 0.0
    %238 = vmatpush1.msra.mxu0 %v205
    %239 = vmatprep.subr.mxu0 0.0
    %240 = vmatpush1.msra.mxu0 %v204
    %241 = vmatprep.subr.mxu0 0.0
    %242 = vmatpush1.msra.mxu0 %v203
    %243 = vmatprep.subr.mxu0 0.0
    %244 = vmatpush1.msra.mxu0 %v202
    %245 = vmatprep.subr.mxu0 0.0
    %246 = vmatpush1.msra.mxu0 %v201
    %247 = vmatprep.subr.mxu0 0.0
    %248 = vmatpush1.msra.mxu0 %v200
    %249 = vmatprep.subr.mxu0 0.0
    %250 = vmatpush1.msra.mxu0 %v199
    %251 = vmatprep.subr.mxu0 0.0
    %252 = vmatpush1.msra.mxu0 %v198
    %253 = vmatprep.subr.mxu0 0.0
    %254 = vmatpush2.msra.mxu0 0.0
    %255 = vmatprep.subr.mxu0 0.0
    %256 = vmatpush2.msra.mxu0 0.0
    %257 = vmatprep.subr.mxu0 0.0
    %258 = vmatpush2.msra.mxu0 0.0
    %259 = vmatprep.subr.mxu0 0.0
    %260 = vmatpush2.msra.mxu0 0.0
    %261 = vmatprep.subr.mxu0 0.0
    %262 = vmatpush2.msra.mxu0 0.0
    %263 = vmatprep.subr.mxu0 0.0
    %264 = vmatpush2.msra.mxu0 0.0
    %265 = vmatprep.subr.mxu0 0.0
    %266 = vmatpush2.msra.mxu0 0.0
    %267 = vmatprep.subr.mxu0 0.0
    %268 = vmatpush2.msra.mxu0 0.0
    %269 = vmatprep.subr.mxu0 0.0
    %270 = vmatpush2.msra.mxu0 0.0
    %271 = vmatprep.subr.mxu0 0.0
    %272 = vmatpush2.msra.mxu0 0.0
    %273 = vmatprep.subr.mxu0 0.0
    %274 = vmatpush2.msra.mxu0 0.0
    %275 = vmatprep.subr.mxu0 0.0
    %276 = vmatpush2.msra.mxu0 0.0
    %277 = vmatprep.subr.mxu0 0.0
    %278 = vmatpush2.msra.mxu0 0.0
    %279 = vmatprep.subr.mxu0 0.0
    %280 = vmatpush2.msra.mxu0 0.0
    %281 = vmatprep.subr.mxu0 0.0
    %282 = vmatpush2.msra.mxu0 0.0
    %283 = vmatprep.subr.mxu0 0.0
    %284 = vmatpush2.msra.mxu0 0.0
    %285 = vmatprep.mubr.f32.mxu0 0.0
    %286 = vmatmul.mubr.f32.gmra.mxu0 %v197
    %v287 = vpop.f32.mrf.mxu0
    %v288 = vadd.f32 %v219, %v287
    %v289 = vpop.f32.mrf.mxu0
    %290 = vdwg.mxu0
    %v291 = vld [vmem:[%s9] sm:$0xff]
    %v292 = vld [vmem:[%s9 + $0x8] sm:$0xff]
    %v293 = vld [vmem:[%s9 + $0x10] sm:$0xff]
    %v294 = vld [vmem:[%s9 + $0x18] sm:$0xff]
    %v295 = vld [vmem:[%s9 + $0x20] sm:$0xff]
    %v296 = vld [vmem:[%s9 + $0x28] sm:$0xff]
    %v297 = vld [vmem:[%s9 + $0x30] sm:$0xff]
    %v298 = vld [vmem:[%s9 + $0x38] sm:$0xff]
    %v299 = vld [vmem:[%s9 + $0x40] sm:$0xff]
    %v300 = vld [vmem:[%s9 + $0x48] sm:$0xff]
    %v301 = vld [vmem:[%s9 + $0x50] sm:$0xff]
    %v302 = vld [vmem:[%s9 + $0x58] sm:$0xff]
    %v303 = vld [vmem:[%s9 + $0x60] sm:$0xff]
    %v304 = vld [vmem:[%s9 + $0x68] sm:$0xff]
    %v305 = vld [vmem:[%s9 + $0x70] sm:$0xff]
    %v306 = vld [vmem:[%s9 + $0x78] sm:$0xff]
    %v307 = vld [vmem:[%s12] sm:$0x1]
    %v309 = vlaneseq
    %v310 = vshrl.u32 %v309, 7
    %v311 = vsub.s32 0, %v310
    %v312 = vrot.slane %v307, %v311
    %314 = vmatprep.subr.mxu0 0.0
    %315 = vmatpush1.msra.mxu0 %v306
    %316 = vmatprep.subr.mxu0 0.0
    %317 = vmatpush1.msra.mxu0 %v305
    %318 = vmatprep.subr.mxu0 0.0
    %319 = vmatpush1.msra.mxu0 %v304
    %320 = vmatprep.subr.mxu0 0.0
    %321 = vmatpush1.msra.mxu0 %v303
    %322 = vmatprep.subr.mxu0 0.0
    %323 = vmatpush1.msra.mxu0 %v302
    %324 = vmatprep.subr.mxu0 0.0
    %325 = vmatpush1.msra.mxu0 %v301
    %326 = vmatprep.subr.mxu0 0.0
    %327 = vmatpush1.msra.mxu0 %v300
    %328 = vmatprep.subr.mxu0 0.0
    %329 = vmatpush1.msra.mxu0 %v299
    %330 = vmatprep.subr.mxu0 0.0
    %331 = vmatpush1.msra.mxu0 %v298
    %332 = vmatprep.subr.mxu0 0.0
    %333 = vmatpush1.msra.mxu0 %v297
    %334 = vmatprep.subr.mxu0 0.0
    %335 = vmatpush1.msra.mxu0 %v296
    %336 = vmatprep.subr.mxu0 0.0
    %337 = vmatpush1.msra.mxu0 %v295
    %338 = vmatprep.subr.mxu0 0.0
    %339 = vmatpush1.msra.mxu0 %v294
    %340 = vmatprep.subr.mxu0 0.0
    %341 = vmatpush1.msra.mxu0 %v293
    %342 = vmatprep.subr.mxu0 0.0
    %343 = vmatpush1.msra.mxu0 %v292
    %344 = vmatprep.subr.mxu0 0.0
    %345 = vmatpush1.msra.mxu0 %v291
    %346 = vmatprep.subr.mxu0 0.0
    %347 = vmatpush2.msra.mxu0 0.0
    %348 = vmatprep.subr.mxu0 0.0
    %349 = vmatpush2.msra.mxu0 0.0
    %350 = vmatprep.subr.mxu0 0.0
    %351 = vmatpush2.msra.mxu0 0.0
    %352 = vmatprep.subr.mxu0 0.0
    %353 = vmatpush2.msra.mxu0 0.0
    %354 = vmatprep.subr.mxu0 0.0
    %355 = vmatpush2.msra.mxu0 0.0
    %356 = vmatprep.subr.mxu0 0.0
    %357 = vmatpush2.msra.mxu0 0.0
    %358 = vmatprep.subr.mxu0 0.0
    %359 = vmatpush2.msra.mxu0 0.0
    %360 = vmatprep.subr.mxu0 0.0
    %361 = vmatpush2.msra.mxu0 0.0
    %362 = vmatprep.subr.mxu0 0.0
    %363 = vmatpush2.msra.mxu0 0.0
    %364 = vmatprep.subr.mxu0 0.0
    %365 = vmatpush2.msra.mxu0 0.0
    %366 = vmatprep.subr.mxu0 0.0
    %367 = vmatpush2.msra.mxu0 0.0
    %368 = vmatprep.subr.mxu0 0.0
    %369 = vmatpush2.msra.mxu0 0.0
    %370 = vmatprep.subr.mxu0 0.0
    %371 = vmatpush2.msra.mxu0 0.0
    %372 = vmatprep.subr.mxu0 0.0
    %373 = vmatpush2.msra.mxu0 0.0
    %374 = vmatprep.subr.mxu0 0.0
    %375 = vmatpush2.msra.mxu0 0.0
    %376 = vmatprep.subr.mxu0 0.0
    %377 = vmatpush2.msra.mxu0 0.0
    %378 = vmatprep.mubr.f32.mxu0 0.0
    %379 = vmatmul.mubr.f32.gmra.mxu0 %v197
    %v380 = vpop.f32.mrf.mxu0
    %v381 = vadd.f32 %v312, %v380
    %v382 = vpop.f32.mrf.mxu0
    %383 = vdwg.mxu0
    %v384 = vld [vmem:[%s10] sm:$0xff]
    %v385 = vld [vmem:[%s10 + $0x8] sm:$0xff]
    %v386 = vld [vmem:[%s10 + $0x10] sm:$0xff]
    %v387 = vld [vmem:[%s10 + $0x18] sm:$0xff]
    %v388 = vld [vmem:[%s10 + $0x20] sm:$0xff]
    %v389 = vld [vmem:[%s10 + $0x28] sm:$0xff]
    %v390 = vld [vmem:[%s10 + $0x30] sm:$0xff]
    %v391 = vld [vmem:[%s10 + $0x38] sm:$0xff]
    %v392 = vld [vmem:[%s10 + $0x40] sm:$0xff]
    %v393 = vld [vmem:[%s10 + $0x48] sm:$0xff]
    %v394 = vld [vmem:[%s10 + $0x50] sm:$0xff]
    %v395 = vld [vmem:[%s10 + $0x58] sm:$0xff]
    %v396 = vld [vmem:[%s10 + $0x60] sm:$0xff]
    %v397 = vld [vmem:[%s10 + $0x68] sm:$0xff]
    %v398 = vld [vmem:[%s10 + $0x70] sm:$0xff]
    %v399 = vld [vmem:[%s10 + $0x78] sm:$0xff]
    %v400 = vld [vmem:[%s13] sm:$0x1]
    %v402 = vlaneseq
    %v403 = vshrl.u32 %v402, 7
    %v404 = vsub.s32 0, %v403
    %v405 = vrot.slane %v400, %v404
    %407 = vmatprep.subr.mxu0 0.0
    %408 = vmatpush1.msra.mxu0 %v399
    %409 = vmatprep.subr.mxu0 0.0
    %410 = vmatpush1.msra.mxu0 %v398
    %411 = vmatprep.subr.mxu0 0.0
    %412 = vmatpush1.msra.mxu0 %v397
    %413 = vmatprep.subr.mxu0 0.0
    %414 = vmatpush1.msra.mxu0 %v396
    %415 = vmatprep.subr.mxu0 0.0
    %416 = vmatpush1.msra.mxu0 %v395
    %417 = vmatprep.subr.mxu0 0.0
    %418 = vmatpush1.msra.mxu0 %v394
    %419 = vmatprep.subr.mxu0 0.0
    %420 = vmatpush1.msra.mxu0 %v393
    %421 = vmatprep.subr.mxu0 0.0
    %422 = vmatpush1.msra.mxu0 %v392
    %423 = vmatprep.subr.mxu0 0.0
    %424 = vmatpush1.msra.mxu0 %v391
    %425 = vmatprep.subr.mxu0 0.0
    %426 = vmatpush1.msra.mxu0 %v390
    %427 = vmatprep.subr.mxu0 0.0
    %428 = vmatpush1.msra.mxu0 %v389
    %429 = vmatprep.subr.mxu0 0.0
    %430 = vmatpush1.msra.mxu0 %v388
    %431 = vmatprep.subr.mxu0 0.0
    %432 = vmatpush1.msra.mxu0 %v387
    %433 = vmatprep.subr.mxu0 0.0
    %434 = vmatpush1.msra.mxu0 %v386
    %435 = vmatprep.subr.mxu0 0.0
    %436 = vmatpush1.msra.mxu0 %v385
    %437 = vmatprep.subr.mxu0 0.0
    %438 = vmatpush1.msra.mxu0 %v384
    %439 = vmatprep.subr.mxu0 0.0
    %440 = vmatpush2.msra.mxu0 0.0
    %441 = vmatprep.subr.mxu0 0.0
    %442 = vmatpush2.msra.mxu0 0.0
    %443 = vmatprep.subr.mxu0 0.0
    %444 = vmatpush2.msra.mxu0 0.0
    %445 = vmatprep.subr.mxu0 0.0
    %446 = vmatpush2.msra.mxu0 0.0
    %447 = vmatprep.subr.mxu0 0.0
    %448 = vmatpush2.msra.mxu0 0.0
    %449 = vmatprep.subr.mxu0 0.0
    %450 = vmatpush2.msra.mxu0 0.0
    %451 = vmatprep.subr.mxu0 0.0
    %452 = vmatpush2.msra.mxu0 0.0
    %453 = vmatprep.subr.mxu0 0.0
    %454 = vmatpush2.msra.mxu0 0.0
    %455 = vmatprep.subr.mxu0 0.0
    %456 = vmatpush2.msra.mxu0 0.0
    %457 = vmatprep.subr.mxu0 0.0
    %458 = vmatpush2.msra.mxu0 0.0
    %459 = vmatprep.subr.mxu0 0.0
    %460 = vmatpush2.msra.mxu0 0.0
    %461 = vmatprep.subr.mxu0 0.0
    %462 = vmatpush2.msra.mxu0 0.0
    %463 = vmatprep.subr.mxu0 0.0
    %464 = vmatpush2.msra.mxu0 0.0
    %465 = vmatprep.subr.mxu0 0.0
    %466 = vmatpush2.msra.mxu0 0.0
    %467 = vmatprep.subr.mxu0 0.0
    %468 = vmatpush2.msra.mxu0 0.0
    %469 = vmatprep.subr.mxu0 0.0
    %470 = vmatpush2.msra.mxu0 0.0
    %471 = vmatprep.mubr.f32.mxu0 0.0
    %472 = vmatmul.mubr.f32.gmra.mxu0 %v197
    %v473 = vpop.f32.mrf.mxu0
    %v474 = vadd.f32 %v405, %v473
    %v475 = vpop.f32.mrf.mxu0
    %476 = vdwg.mxu0
    %v477 = vmax.f32 %v288, %v381
    %v478 = vmax.f32 %v477, %v474
    %v479 = vsub.f32 %v288, %v478
    %v480 = vmul.f32 %v479, 1.442695
    %v481 = vpow.pop %v480
    %v482 = vsub.f32 %v381, %v478
    %v483 = vmul.f32 %v482, 1.442695
    %v484 = vpow.pop %v483
    %v485 = vsub.f32 %v474, %v478
    %v486 = vmul.f32 %v485, 1.442695
    %v487 = vpow.pop %v486
    %v488 = vmul.f32 %v69, %v481
    %v489 = vmul.f32 %v70, %v484
    %v490 = vadd.f32 %v488, %v489
    %v491 = vmul.f32 %v71, %v487
    %v492 = vadd.f32 %v490, %v491
    %v493 = vadd.f32 %v481, %v484
    %v494 = vadd.f32 %v493, %v487
    %v495 = vrcp.pop %v494
    %v496 = vmul.f32 %v492, %v495
    %v497 = vld [vmem:[%s0] sm:$0xff]
    %v498 = vadd.f32 %v497, %v496
    %v499 = vld [vmem:[%s14] sm:$0x1]
    %v500 = vld [vmem:[%s15] sm:$0x1]
    %v501 = vsel %vm76, %v498, 0.0
    %502 = vadd.xlane.f32.xlu0 %v501
    %v503 = vpop.xlane.xlu0 %502
    %v504 = vmul.f32 %v503, %v80
    %v505 = vsub.f32 %v498, %v504
    %v506 = vmul.f32 %v505, %v505
    %v507 = vsel %vm76, %v506, 0.0
    %508 = vadd.xlane.f32.xlu0 %v507
    %v509 = vpop.xlane.xlu0 %508
    %v510 = vmul.f32 %v509, %v80
    %v511 = vadd.f32 %v510, 1e-05
    %v512 = vrsqrt.pop %v511
    %v513 = vmul.f32 %v505, %v512
    %v515 = vlaneseq
    %v516 = vshrl.u32 %v515, 7
    %v517 = vsub.s32 0, %v516
    %v518 = vrot.slane %v499, %v517
    %v520 = vmul.f32 %v513, %v518
    %v522 = vlaneseq
    %v523 = vshrl.u32 %v522, 7
    %v524 = vsub.s32 0, %v523
    %v525 = vrot.slane %v500, %v524
    %v527 = vadd.f32 %v520, %v525
    %v528 = vld [vmem:[%s16] sm:$0xff]
    %v529 = vld [vmem:[%s16 + $0x8] sm:$0xff]
    %v530 = vld [vmem:[%s16 + $0x10] sm:$0xff]
    %v531 = vld [vmem:[%s16 + $0x18] sm:$0xff]
    %v533 = vsel %vm76, %v527, 0
    %535 = vmatprep.subr.mxu0 0.0
    %536 = vmatpush1.msra.mxu0 0.0
    %537 = vmatprep.subr.mxu0 0.0
    %538 = vmatpush1.msra.mxu0 0.0
    %539 = vmatprep.subr.mxu0 0.0
    %540 = vmatpush1.msra.mxu0 0.0
    %541 = vmatprep.subr.mxu0 0.0
    %542 = vmatpush1.msra.mxu0 0.0
    %543 = vmatprep.subr.mxu0 0.0
    %544 = vmatpush1.msra.mxu0 0.0
    %545 = vmatprep.subr.mxu0 0.0
    %546 = vmatpush1.msra.mxu0 0.0
    %547 = vmatprep.subr.mxu0 0.0
    %548 = vmatpush1.msra.mxu0 0.0
    %549 = vmatprep.subr.mxu0 0.0
    %550 = vmatpush1.msra.mxu0 0.0
    %551 = vmatprep.subr.mxu0 0.0
    %552 = vmatpush1.msra.mxu0 0.0
    %553 = vmatprep.subr.mxu0 0.0
    %554 = vmatpush1.msra.mxu0 0.0
    %555 = vmatprep.subr.mxu0 0.0
    %556 = vmatpush1.msra.mxu0 0.0
    %557 = vmatprep.subr.mxu0 0.0
    %558 = vmatpush1.msra.mxu0 0.0
    %559 = vmatprep.subr.mxu0 0.0
    %560 = vmatpush1.msra.mxu0 %v531
    %561 = vmatprep.subr.mxu0 0.0
    %562 = vmatpush1.msra.mxu0 %v530
    %563 = vmatprep.subr.mxu0 0.0
    %564 = vmatpush1.msra.mxu0 %v529
    %565 = vmatprep.subr.mxu0 0.0
    %566 = vmatpush1.msra.mxu0 %v528
    %567 = vmatprep.subr.mxu0 0.0
    %568 = vmatpush2.msra.mxu0 0.0
    %569 = vmatprep.subr.mxu0 0.0
    %570 = vmatpush2.msra.mxu0 0.0
    %571 = vmatprep.subr.mxu0 0.0
    %572 = vmatpush2.msra.mxu0 0.0
    %573 = vmatprep.subr.mxu0 0.0
    %574 = vmatpush2.msra.mxu0 0.0
    %575 = vmatprep.subr.mxu0 0.0
    %576 = vmatpush2.msra.mxu0 0.0
    %577 = vmatprep.subr.mxu0 0.0
    %578 = vmatpush2.msra.mxu0 0.0
    %579 = vmatprep.subr.mxu0 0.0
    %580 = vmatpush2.msra.mxu0 0.0
    %581 = vmatprep.subr.mxu0 0.0
    %582 = vmatpush2.msra.mxu0 0.0
    %583 = vmatprep.subr.mxu0 0.0
    %584 = vmatpush2.msra.mxu0 0.0
    %585 = vmatprep.subr.mxu0 0.0
    %586 = vmatpush2.msra.mxu0 0.0
    %587 = vmatprep.subr.mxu0 0.0
    %588 = vmatpush2.msra.mxu0 0.0
    %589 = vmatprep.subr.mxu0 0.0
    %590 = vmatpush2.msra.mxu0 0.0
    %591 = vmatprep.subr.mxu0 0.0
    %592 = vmatpush2.msra.mxu0 0.0
    %593 = vmatprep.subr.mxu0 0.0
    %594 = vmatpush2.msra.mxu0 0.0
    %595 = vmatprep.subr.mxu0 0.0
    %596 = vmatpush2.msra.mxu0 0.0
    %597 = vmatprep.subr.mxu0 0.0
    %598 = vmatpush2.msra.mxu0 0.0
    %599 = vmatprep.mubr.f32.mxu0 0.0
    %600 = vmatmul.mubr.f32.gmra.mxu0 %v533
    %v601 = vpop.f32.mrf.mxu0
    %v602 = vadd.f32 0.0, %v601
    %v603 = vpop.f32.mrf.mxu0
    %604 = vdwg.mxu0
    %v605 = vld [vmem:[%s17] sm:$0xff]
    %v606 = vld [vmem:[%s17 + $0x8] sm:$0xff]
    %v607 = vld [vmem:[%s17 + $0x10] sm:$0xff]
    %v608 = vld [vmem:[%s17 + $0x18] sm:$0xff]
    %609 = vmatprep.subr.mxu0 0.0
    %610 = vmatpush1.msra.mxu0 0.0
    %611 = vmatprep.subr.mxu0 0.0
    %612 = vmatpush1.msra.mxu0 0.0
    %613 = vmatprep.subr.mxu0 0.0
    %614 = vmatpush1.msra.mxu0 0.0
    %615 = vmatprep.subr.mxu0 0.0
    %616 = vmatpush1.msra.mxu0 0.0
    %617 = vmatprep.subr.mxu0 0.0
    %618 = vmatpush1.msra.mxu0 0.0
    %619 = vmatprep.subr.mxu0 0.0
    %620 = vmatpush1.msra.mxu0 0.0
    %621 = vmatprep.subr.mxu0 0.0
    %622 = vmatpush1.msra.mxu0 0.0
    %623 = vmatprep.subr.mxu0 0.0
    %624 = vmatpush1.msra.mxu0 0.0
    %625 = vmatprep.subr.mxu0 0.0
    %626 = vmatpush1.msra.mxu0 0.0
    %627 = vmatprep.subr.mxu0 0.0
    %628 = vmatpush1.msra.mxu0 0.0
    %629 = vmatprep.subr.mxu0 0.0
    %630 = vmatpush1.msra.mxu0 0.0
    %631 = vmatprep.subr.mxu0 0.0
    %632 = vmatpush1.msra.mxu0 0.0
    %633 = vmatprep.subr.mxu0 0.0
    %634 = vmatpush1.msra.mxu0 %v608
    %635 = vmatprep.subr.mxu0 0.0
    %636 = vmatpush1.msra.mxu0 %v607
    %637 = vmatprep.subr.mxu0 0.0
    %638 = vmatpush1.msra.mxu0 %v606
    %639 = vmatprep.subr.mxu0 0.0
    %640 = vmatpush1.msra.mxu0 %v605
    %641 = vmatprep.subr.mxu0 0.0
    %642 = vmatpush2.msra.mxu0 0.0
    %643 = vmatprep.subr.mxu0 0.0
    %644 = vmatpush2.msra.mxu0 0.0
    %645 = vmatprep.subr.mxu0 0.0
    %646 = vmatpush2.msra.mxu0 0.0
    %647 = vmatprep.subr.mxu0 0.0
    %648 = vmatpush2.msra.mxu0 0.0
    %649 = vmatprep.subr.mxu0 0.0
    %650 = vmatpush2.msra.mxu0 0.0
    %651 = vmatprep.subr.mxu0 0.0
    %652 = vmatpush2.msra.mxu0 0.0
    %653 = vmatprep.subr.mxu0 0.0
    %654 = vmatpush2.msra.mxu0 0.0
    %655 = vmatprep.subr.mxu0 0.0
    %656 = vmatpush2.msra.mxu0 0.0
    %657 = vmatprep.subr.mxu0 0.0
    %658 = vmatpush2.msra.mxu0 0.0
    %659 = vmatprep.subr.mxu0 0.0
    %660 = vmatpush2.msra.mxu0 0.0
    %661 = vmatprep.subr.mxu0 0.0
    %662 = vmatpush2.msra.mxu0 0.0
    %663 = vmatprep.subr.mxu0 0.0
    %664 = vmatpush2.msra.mxu0 0.0
    %665 = vmatprep.subr.mxu0 0.0
    %666 = vmatpush2.msra.mxu0 0.0
    %667 = vmatprep.subr.mxu0 0.0
    %668 = vmatpush2.msra.mxu0 0.0
    %669 = vmatprep.subr.mxu0 0.0
    %670 = vmatpush2.msra.mxu0 0.0
    %671 = vmatprep.subr.mxu0 0.0
    %672 = vmatpush2.msra.mxu0 0.0
    %673 = vmatprep.mubr.f32.mxu0 0.0
    %674 = vmatmul.mubr.f32.gmra.mxu0 %v533
    %v675 = vpop.f32.mrf.mxu0
    %v676 = vadd.f32 0.0, %v675
    %v677 = vpop.f32.mrf.mxu0
    %678 = vdwg.mxu0
    %v679 = vmul.f32 %v676, 0.5
    %v680 = vmul.f32 %v676, 0.044715
    %v681 = vmul.f32 %v680, %v676
    %v682 = vmul.f32 %v681, %v676
    %v683 = vadd.f32 %v676, %v682
    %v684 = vmul.f32 %v683, 0.7978846
    %v685 = vtanh.pop %v684
    %v686 = vadd.f32 %v685, 1.0
    %v687 = vmul.f32 %v679, %v686
    %v688 = vmul.f32 %v687, %v602
    %v689 = vld [vmem:[%s18] sm:$0xff]
    %v690 = vld [vmem:[%s18 + $0x8] sm:$0xff]
    %v691 = vld [vmem:[%s18 + $0x10] sm:$0xff]
    %v692 = vld [vmem:[%s18 + $0x18] sm:$0xff]
    %v693 = vld [vmem:[%s18 + $0x20] sm:$0xff]
    %v694 = vld [vmem:[%s18 + $0x28] sm:$0xff]
    %v695 = vld [vmem:[%s18 + $0x30] sm:$0xff]
    %v696 = vld [vmem:[%s18 + $0x38] sm:$0xff]
    %vm697 = vcmask 523264
    %v699 = vsel %vm697, %v688, 0
    %701 = vmatprep.subr.mxu0 0.0
    %702 = vmatpush1.msra.mxu0 0.0
    %703 = vmatprep.subr.mxu0 0.0
    %704 = vmatpush1.msra.mxu0 0.0
    %705 = vmatprep.subr.mxu0 0.0
    %706 = vmatpush1.msra.mxu0 0.0
    %707 = vmatprep.subr.mxu0 0.0
    %708 = vmatpush1.msra.mxu0 0.0
    %709 = vmatprep.subr.mxu0 0.0
    %710 = vmatpush1.msra.mxu0 0.0
    %711 = vmatprep.subr.mxu0 0.0
    %712 = vmatpush1.msra.mxu0 0.0
    %713 = vmatprep.subr.mxu0 0.0
    %714 = vmatpush1.msra.mxu0 0.0
    %715 = vmatprep.subr.mxu0 0.0
    %716 = vmatpush1.msra.mxu0 0.0
    %717 = vmatprep.subr.mxu0 0.0
    %718 = vmatpush1.msra.mxu0 %v696
    %719 = vmatprep.subr.mxu0 0.0
    %720 = vmatpush1.msra.mxu0 %v695
    %721 = vmatprep.subr.mxu0 0.0
    %722 = vmatpush1.msra.mxu0 %v694
    %723 = vmatprep.subr.mxu0 0.0
    %724 = vmatpush1.msra.mxu0 %v693
    %725 = vmatprep.subr.mxu0 0.0
    %726 = vmatpush1.msra.mxu0 %v692
    %727 = vmatprep.subr.mxu0 0.0
    %728 = vmatpush1.msra.mxu0 %v691
    %729 = vmatprep.subr.mxu0 0.0
    %730 = vmatpush1.msra.mxu0 %v690
    %731 = vmatprep.subr.mxu0 0.0
    %732 = vmatpush1.msra.mxu0 %v689
    %733 = vmatprep.subr.mxu0 0.0
    %734 = vmatpush2.msra.mxu0 0.0
    %735 = vmatprep.subr.mxu0 0.0
    %736 = vmatpush2.msra.mxu0 0.0
    %737 = vmatprep.subr.mxu0 0.0
    %738 = vmatpush2.msra.mxu0 0.0
    %739 = vmatprep.subr.mxu0 0.0
    %740 = vmatpush2.msra.mxu0 0.0
    %741 = vmatprep.subr.mxu0 0.0
    %742 = vmatpush2.msra.mxu0 0.0
    %743 = vmatprep.subr.mxu0 0.0
    %744 = vmatpush2.msra.mxu0 0.0
    %745 = vmatprep.subr.mxu0 0.0
    %746 = vmatpush2.msra.mxu0 0.0
    %747 = vmatprep.subr.mxu0 0.0
    %748 = vmatpush2.msra.mxu0 0.0
    %749 = vmatprep.subr.mxu0 0.0
    %750 = vmatpush2.msra.mxu0 0.0
    %751 = vmatprep.subr.mxu0 0.0
    %752 = vmatpush2.msra.mxu0 0.0
    %753 = vmatprep.subr.mxu0 0.0
    %754 = vmatpush2.msra.mxu0 0.0
    %755 = vmatprep.subr.mxu0 0.0
    %756 = vmatpush2.msra.mxu0 0.0
    %757 = vmatprep.subr.mxu0 0.0
    %758 = vmatpush2.msra.mxu0 0.0
    %759 = vmatprep.subr.mxu0 0.0
    %760 = vmatpush2.msra.mxu0 0.0
    %761 = vmatprep.subr.mxu0 0.0
    %762 = vmatpush2.msra.mxu0 0.0
    %763 = vmatprep.subr.mxu0 0.0
    %764 = vmatpush2.msra.mxu0 0.0
    %765 = vmatprep.mubr.f32.mxu0 0.0
    %766 = vmatmul.mubr.f32.gmra.mxu0 %v699
    %v767 = vpop.f32.mrf.mxu0
    %v768 = vadd.f32 0.0, %v767
    %v769 = vpop.f32.mrf.mxu0
    %770 = vdwg.mxu0
    %v771 = vadd.f32 %v527, %v768
    %v772 = vld [vmem:[%s19] sm:$0x1]
    %v773 = vld [vmem:[%s20] sm:$0x1]
    %v774 = vsel %vm76, %v771, 0.0
    %775 = vadd.xlane.f32.xlu0 %v774
    %v776 = vpop.xlane.xlu0 %775
    %v777 = vmul.f32 %v776, %v80
    %v778 = vsub.f32 %v771, %v777
    %v779 = vmul.f32 %v778, %v778
    %v780 = vsel %vm76, %v779, 0.0
    %781 = vadd.xlane.f32.xlu0 %v780
    %v782 = vpop.xlane.xlu0 %781
    %v783 = vmul.f32 %v782, %v80
    %v784 = vadd.f32 %v783, 1e-05
    %v785 = vrsqrt.pop %v784
    %v786 = vmul.f32 %v778, %v785
    %v788 = vlaneseq
    %v789 = vshrl.u32 %v788, 7
    %v790 = vsub.s32 0, %v789
    %v791 = vrot.slane %v772, %v790
    %v793 = vmul.f32 %v786, %v791
    %v795 = vlaneseq
    %v796 = vshrl.u32 %v795, 7
    %v797 = vsub.s32 0, %v796
    %v798 = vrot.slane %v773, %v797
    %v800 = vadd.f32 %v793, %v798
    %801 = vst.msk [vmem:[#allocation2] sm:$0xff] %vm76, %v800
    // Predicated region
    $region86: #{edge_update.9} parent=1 // pred_check
      _
    $region87: #{edge_update.9} parent=1 // pred_check_branch
      %803 = sbr.rel (0) target = $region89
    $region88: #{edge_update.9} parent=1 // pred_region
      %s805 = ssub.s32 128, 128
      %806 = vsyncadd [#allocation3], %s805
      %s808 = sshll.u32 [#allocation2], 4
      %s809 = int_to_ptr.vmem [resolvable:$true] %s808
      %811 = dma.vmem_to_hbm [thread:$0]  %s809, 128, %s21, [#allocation3]
    $region89: #{edge_update.9} parent=1 // pred_fallthru
      _
    // Predicated region
    $region90: #{edge_update.9} parent=1 // pred_check
      _
    $region91: #{edge_update.9} parent=1 // pred_check_branch
      %813 = sbr.rel (0) target = $region93
    $region92: #{edge_update.9} parent=1 // pred_region
      %814 = dma.done [#allocation3], 128
    $region93: #{edge_update.9} parent=1 // pred_fallthru
      _
    %815 = vsyncpa [#allocation3], 1

</llo_original>
